<compile_context>
chip_gen: v7x
topology: tpu7x:2x2x1
jax: 0.10.0
libtpu: 0.0.40
codegen_flags: <defaults>
</compile_context>

<pallas_src>
import functools

import jax
import jax.numpy as jnp
from jax.experimental import pallas as pl
from jax.experimental.pallas import tpu as pltpu


def _round_up(a, b):
    return (a + b - 1) // b * b


# --------------------------------------------------------------------------
# Pass 1: ReLU -> depthwise conv (k, stride) -> 1x1 conv, + per-image stats.
# Input block is the spatially padded, true-channel NHWC image.
# --------------------------------------------------------------------------
def _relu_dw_pw_stats_kernel(x_ref, dwt_ref, pw_ref, y_ref, sum_ref, ssq_ref,
                             *, k, stride, ho, wo, c_in):
    taps = dwt_ref[...]                              # (k*k, c_in), loaded once
    acc = jnp.zeros((ho, wo, c_in), jnp.float32)
    if stride == 1:
        # ReLU hoisted out of the tap loop (relu(0-padding) == 0).
        xr = jnp.maximum(x_ref[...], 0.0)
        for dh in range(k):
            for dw in range(k):
                win = xr[dh:dh + ho, dw:dw + wo, :]
                tap = taps[dh * k + dw:dh * k + dw + 1, :].reshape(1, 1, c_in)
                acc = acc + win * tap
    else:
        # Strided windows read from the ref; ReLU per window (still correct
        # since ReLU commutes with zero padding).
        for dh in range(k):
            for dw in range(k):
                win = x_ref[pl.ds(dh, ho, stride=stride),
                            pl.ds(dw, wo, stride=stride), :]
                tap = taps[dh * k + dw:dh * k + dw + 1, :].reshape(1, 1, c_in)
                acc = acc + jnp.maximum(win, 0.0) * tap
    y = jnp.dot(acc.reshape(ho * wo, c_in), pw_ref[...],
                preferred_element_type=jnp.float32)
    y_ref[...] = y.reshape(ho, wo, y.shape[-1])
    sum_ref[...] = jnp.sum(y, axis=0, keepdims=True)
    ssq_ref[...] = jnp.sum(y * y, axis=0, keepdims=True)


# --------------------------------------------------------------------------
# Pass 2: BN1 apply -> ReLU -> depthwise conv (k, 1) -> 1x1 conv, + stats.
# The conv zero-border of the post-BN/ReLU tensor lives in a VMEM halo
# scratch.  Only the border is zeroed each step (the interior is fully
# overwritten), and the interior store is placed at a sublane-aligned column
# offset so no sublane shift is needed before the store.
# --------------------------------------------------------------------------
def _bn_relu_dw_pw_stats_kernel(y1_ref, sc_ref, sh_ref, dwt_ref, pw_ref,
                                y_ref, sum_ref, ssq_ref, halo_ref,
                                *, k, pad, h_in, w_in, w_off, ho, wo, c_mid):
    f32 = jnp.float32
    halo_h, halo_w = halo_ref.shape[0], halo_ref.shape[1]
    if pad > 0:
        # Border-only zeroing: safe regardless of which core runs which step.
        halo_ref[0:pad, :, :] = jnp.zeros((pad, halo_w, c_mid), f32)
        halo_ref[pad + h_in:halo_h, :, :] = jnp.zeros((pad, halo_w, c_mid), f32)
        halo_ref[pad:pad + h_in, 0:w_off, :] = jnp.zeros((h_in, w_off, c_mid), f32)
        halo_ref[pad:pad + h_in, w_off + w_in:halo_w, :] = (
            jnp.zeros((h_in, pad, c_mid), f32))
    # BN1 affine + ReLU computed once; interior store is sublane-aligned.
    a = jnp.maximum(y1_ref[...] * sc_ref[...] + sh_ref[...], 0.0)
    halo_ref[pad:pad + h_in, w_off:w_off + w_in, :] = a

    taps = dwt_ref[...]                              # (k*k, c_mid)
    acc = jnp.zeros((ho, wo, c_mid), f32)
    for dh in range(k):
        for dw in range(k):
            w0 = w_off - pad + dw
            win = halo_ref[dh:dh + ho, w0:w0 + wo, :]
            tap = taps[dh * k + dw:dh * k + dw + 1, :].reshape(1, 1, c_mid)
            acc = acc + win * tap
    y = jnp.dot(acc.reshape(ho * wo, c_mid), pw_ref[...],
                preferred_element_type=f32)
    y_ref[...] = y.reshape(ho, wo, y.shape[-1])
    sum_ref[...] = jnp.sum(y, axis=0, keepdims=True)
    ssq_ref[...] = jnp.sum(y * y, axis=0, keepdims=True)


def sep_conv(x, dw1, pw1, gamma1, beta1, dw2, pw2, gamma2, beta2,
             *, stride=1, padding=1, eps=1e-5):
    """Forward of SepConv.  x: (N, C_in, H, W) NCHW float32."""
    N, C_in, H, W = x.shape
    k = dw1.shape[-1]
    C_mid = pw1.shape[0]          # == C_in per the module definition
    C_out = pw2.shape[0]
    f32 = jnp.float32

    # ---- weight repacking (tiny constants, true channel counts) ------------
    def pack_dw(w):               # (c, 1, k, k) -> (k*k, c)
        c = w.shape[0]
        return jnp.transpose(w[:, 0].astype(f32), (1, 2, 0)).reshape(k * k, c)

    def pack_pw(w):               # (co, ci, 1, 1) -> (ci, co)
        return w[:, :, 0, 0].astype(f32).T

    dw1m, pw1m = pack_dw(dw1), pack_pw(pw1)
    dw2m, pw2m = pack_dw(dw2), pack_pw(pw2)

    # ---- input: NCHW -> true-channel NHWC + spatial zero pad (tiny) --------
    xh = jnp.transpose(x.astype(f32), (0, 2, 3, 1))
    xh = jnp.pad(xh, ((0, 0), (padding, padding), (padding, padding), (0, 0)))
    Hp, Wp = H + 2 * padding, W + 2 * padding
    Ho1 = (H + 2 * padding - k) // stride + 1
    Wo1 = (W + 2 * padding - k) // stride + 1
    Ho2 = Ho1 + 2 * padding - k + 1
    Wo2 = Wo1 + 2 * padding - k + 1

    cparams = pltpu.CompilerParams(dimension_semantics=("parallel",))

    # ---- pass 1 ------------------------------------------------------------
    kern1 = functools.partial(_relu_dw_pw_stats_kernel, k=k, stride=stride,
                              ho=Ho1, wo=Wo1, c_in=C_in)
    y1, s1, q1 = pl.pallas_call(
        kern1,
        out_shape=(jax.ShapeDtypeStruct((N, Ho1, Wo1, C_mid), f32),
                   jax.ShapeDtypeStruct((N, 1, C_mid), f32),
                   jax.ShapeDtypeStruct((N, 1, C_mid), f32)),
        grid_spec=pltpu.PrefetchScalarGridSpec(
            num_scalar_prefetch=0, grid=(N,),
            in_specs=[
                pl.BlockSpec((None, Hp, Wp, C_in), lambda n: (n, 0, 0, 0)),
                pl.BlockSpec((k * k, C_in), lambda n: (0, 0)),
                pl.BlockSpec((C_in, C_mid), lambda n: (0, 0)),
            ],
            out_specs=[
                pl.BlockSpec((None, Ho1, Wo1, C_mid), lambda n: (n, 0, 0, 0)),
                pl.BlockSpec((None, 1, C_mid), lambda n: (n, 0, 0)),
                pl.BlockSpec((None, 1, C_mid), lambda n: (n, 0, 0)),
            ]),
        compiler_params=cparams,
    )(xh, dw1m, pw1m)

    def bn_coeffs(csum, cssq, count, gamma, beta):
        mean = jnp.sum(csum, axis=0) / count                     # (1, C)
        var = jnp.maximum(jnp.sum(cssq, axis=0) / count - mean * mean, 0.0)
        scale = gamma.astype(f32).reshape(1, -1) * jax.lax.rsqrt(var + eps)
        shift = beta.astype(f32).reshape(1, -1) - mean * scale
        return scale, shift

    sc1, sh1 = bn_coeffs(s1, q1, N * Ho1 * Wo1, gamma1, beta1)

    # ---- pass 2 ------------------------------------------------------------
    w_off = _round_up(padding, 8) if padding > 0 else 0
    halo_h, halo_w = Ho1 + 2 * padding, w_off + Wo1 + padding
    kern2 = functools.partial(_bn_relu_dw_pw_stats_kernel, k=k, pad=padding,
                              h_in=Ho1, w_in=Wo1, w_off=w_off,
                              ho=Ho2, wo=Wo2, c_mid=C_mid)
    y2, s2, q2 = pl.pallas_call(
        kern2,
        out_shape=(jax.ShapeDtypeStruct((N, Ho2, Wo2, C_out), f32),
                   jax.ShapeDtypeStruct((N, 1, C_out), f32),
                   jax.ShapeDtypeStruct((N, 1, C_out), f32)),
        grid_spec=pltpu.PrefetchScalarGridSpec(
            num_scalar_prefetch=0, grid=(N,),
            in_specs=[
                pl.BlockSpec((None, Ho1, Wo1, C_mid), lambda n: (n, 0, 0, 0)),
                pl.BlockSpec((1, C_mid), lambda n: (0, 0)),
                pl.BlockSpec((1, C_mid), lambda n: (0, 0)),
                pl.BlockSpec((k * k, C_mid), lambda n: (0, 0)),
                pl.BlockSpec((C_mid, C_out), lambda n: (0, 0)),
            ],
            out_specs=[
                pl.BlockSpec((None, Ho2, Wo2, C_out), lambda n: (n, 0, 0, 0)),
                pl.BlockSpec((None, 1, C_out), lambda n: (n, 0, 0)),
                pl.BlockSpec((None, 1, C_out), lambda n: (n, 0, 0)),
            ],
            scratch_shapes=[pltpu.VMEM((halo_h, halo_w, C_mid), f32)]),
        compiler_params=cparams,
    )(y1, sc1, sh1, dw2m, pw2m)

    sc2, sh2 = bn_coeffs(s2, q2, N * Ho2 * Wo2, gamma2, beta2)

    # BN2 affine fused with the NCHW transpose in ONE XLA elementwise pass over
    # the true-channel y2 (no extra Pallas round trip, no slice needed).
    return (jnp.transpose(y2, (0, 3, 1, 2)) * sc2.reshape(1, C_out, 1, 1)
            + sh2.reshape(1, C_out, 1, 1))


# --------------------------------------------------------------------------
# Pure-JAX reference of the PyTorch forward (train-mode BatchNorm).
# --------------------------------------------------------------------------
def _reference(x, dw1, pw1, g1, b1, dw2, pw2, g2, b2, stride, padding,
               eps=1e-5):
    def dwconv(h, w, s):
        c = h.shape[1]
        return jax.lax.conv_general_dilated(
            h, w, (s, s), [(padding, padding), (padding, padding)],
            dimension_numbers=("NCHW", "OIHW", "NCHW"), feature_group_count=c)

    def pwconv(h, w):
        return jax.lax.conv_general_dilated(
            h, w, (1, 1), [(0, 0), (0, 0)],
            dimension_numbers=("NCHW", "OIHW", "NCHW"))

    def bn(h, g, b):
        mean = h.mean(axis=(0, 2, 3), keepdims=True)
        var = ((h - mean) ** 2).mean(axis=(0, 2, 3), keepdims=True)
        return (h - mean) * jax.lax.rsqrt(var + eps) * g.reshape(1, -1, 1, 1) \
            + b.reshape(1, -1, 1, 1)

    h = jnp.maximum(x, 0.0)
    h = bn(pwconv(dwconv(h, dw1, stride), pw1), g1, b1)
    h = jnp.maximum(h, 0.0)
    h = bn(pwconv(dwconv(h, dw2, 1), pw2), g2, b2)
    return h


if __name__ == "__main__":
    # SepConv(C_in=4, C_out=8, kernel_size=3, stride=1, padding=1)
    C_in, C_out, ksize = 4, 8, 3
    stride, padding = 1, 1
    N, H, W = 2, 16, 16

    key = jax.random.PRNGKey(0)
    ks = jax.random.split(key, 9)
    x = jax.random.normal(ks[0], (N, C_in, H, W), dtype=jnp.float32)
    dw1 = 0.3 * jax.random.normal(ks[1], (C_in, 1, ksize, ksize), jnp.float32)
    pw1 = 0.3 * jax.random.normal(ks[2], (C_in, C_in, 1, 1), jnp.float32)
    g1 = 1.0 + 0.1 * jax.random.normal(ks[3], (C_in,), jnp.float32)
    b1 = 0.1 * jax.random.normal(ks[4], (C_in,), jnp.float32)
    dw2 = 0.3 * jax.random.normal(ks[5], (C_in, 1, ksize, ksize), jnp.float32)
    pw2 = 0.3 * jax.random.normal(ks[6], (C_out, C_in, 1, 1), jnp.float32)
    g2 = 1.0 + 0.1 * jax.random.normal(ks[7], (C_out,), jnp.float32)
    b2 = 0.1 * jax.random.normal(ks[8], (C_out,), jnp.float32)

    fwd = jax.jit(functools.partial(sep_conv, stride=stride, padding=padding))
    out = jax.block_until_ready(fwd(x, dw1, pw1, g1, b1, dw2, pw2, g2, b2))

    ref = _reference(x, dw1, pw1, g1, b1, dw2, pw2, g2, b2, stride, padding)
    assert out.shape == ref.shape, (out.shape, ref.shape)
    err = float(jnp.max(jnp.abs(out - ref)))
    assert jnp.allclose(out, ref, atol=2e-3, rtol=2e-3), err
    # TODO(synk): BatchNorm2d running-mean/var buffer updates (training-mode
    # side effect) are not reproduced; only the returned tensor is computed.
    print("KERNEL_OK")
</pallas_src>

<mosaic_0001>
module attributes {stable_mosaic.version = 11 : i64} {
  func.func @_relu_dw_pw_stats_kernel(%arg0: i32, %arg1: memref<1x18x18x4xf32, #tpu.memory_space<vmem>>, %arg2: memref<9x4xf32, #tpu.memory_space<vmem>>, %arg3: memref<4x4xf32, #tpu.memory_space<vmem>>, %arg4: memref<1x16x16x4xf32, #tpu.memory_space<vmem>>, %arg5: memref<1x1x4xf32, #tpu.memory_space<vmem>>, %arg6: memref<1x1x4xf32, #tpu.memory_space<vmem>>) attributes {dimension_semantics = [#tpu.dimension_semantics<parallel>], iteration_bounds = array<i64: 2>, scalar_prefetch = 0 : i64, scratch_operands = 0 : i64, tpu.core_type = #tpu.core_type<tc>, window_params = [{transform_indices = @transform_0, window_bounds = array<i64: 1, 18, 18, 4>}, {pipeline_mode = #tpu.pipeline_mode<synchronous>, transform_indices = @transform_1, window_bounds = array<i64: 9, 4>}, {pipeline_mode = #tpu.pipeline_mode<synchronous>, transform_indices = @transform_2, window_bounds = array<i64: 4, 4>}, {transform_indices = @transform_3, window_bounds = array<i64: 1, 16, 16, 4>}, {transform_indices = @transform_4, window_bounds = array<i64: 1, 1, 4>}, {transform_indices = @transform_5, window_bounds = array<i64: 1, 1, 4>}]} {
    %c0 = arith.constant 0 : index
    %c0_0 = arith.constant 0 : index
    %0 = vector.load %arg2[%c0, %c0_0] : memref<9x4xf32, #tpu.memory_space<vmem>>, vector<9x4xf32>
    %cst = arith.constant 0.000000e+00 : f32
    %1 = vector.broadcast %cst : f32 to vector<16x16x4xf32>
    %c0_1 = arith.constant 0 : index
    %c0_2 = arith.constant 0 : index
    %c0_3 = arith.constant 0 : index
    %c0_4 = arith.constant 0 : index
    %2 = vector.load %arg1[%c0_1, %c0_2, %c0_3, %c0_4] : memref<1x18x18x4xf32, #tpu.memory_space<vmem>>, vector<1x18x18x4xf32>
    %3 = vector.shape_cast %2 : vector<1x18x18x4xf32> to vector<18x18x4xf32>
    %cst_5 = arith.constant 0.000000e+00 : f32
    %4 = vector.broadcast %cst_5 : f32 to vector<18x18x4xf32>
    %5 = arith.maximumf %3, %4 : vector<18x18x4xf32>
    %6 = vector.extract_strided_slice %5 {offsets = [0, 0, 0], sizes = [16, 16, 4], strides = [1, 1, 1]} : vector<18x18x4xf32> to vector<16x16x4xf32>
    %7 = vector.extract_strided_slice %0 {offsets = [0, 0], sizes = [1, 4], strides = [1, 1]} : vector<9x4xf32> to vector<1x4xf32>
    %8 = vector.shape_cast %7 : vector<1x4xf32> to vector<1x1x4xf32>
    %9 = vector.broadcast %8 : vector<1x1x4xf32> to vector<16x16x4xf32>
    %10 = arith.mulf %6, %9 : vector<16x16x4xf32>
    %11 = arith.addf %1, %10 : vector<16x16x4xf32>
    %12 = vector.extract_strided_slice %5 {offsets = [0, 1, 0], sizes = [16, 16, 4], strides = [1, 1, 1]} : vector<18x18x4xf32> to vector<16x16x4xf32>
    %13 = vector.extract_strided_slice %0 {offsets = [1, 0], sizes = [1, 4], strides = [1, 1]} : vector<9x4xf32> to vector<1x4xf32>
    %14 = vector.shape_cast %13 : vector<1x4xf32> to vector<1x1x4xf32>
    %15 = vector.broadcast %14 : vector<1x1x4xf32> to vector<16x16x4xf32>
    %16 = arith.mulf %12, %15 : vector<16x16x4xf32>
    %17 = arith.addf %11, %16 : vector<16x16x4xf32>
    %18 = vector.extract_strided_slice %5 {offsets = [0, 2, 0], sizes = [16, 16, 4], strides = [1, 1, 1]} : vector<18x18x4xf32> to vector<16x16x4xf32>
    %19 = vector.extract_strided_slice %0 {offsets = [2, 0], sizes = [1, 4], strides = [1, 1]} : vector<9x4xf32> to vector<1x4xf32>
    %20 = vector.shape_cast %19 : vector<1x4xf32> to vector<1x1x4xf32>
    %21 = vector.broadcast %20 : vector<1x1x4xf32> to vector<16x16x4xf32>
    %22 = arith.mulf %18, %21 : vector<16x16x4xf32>
    %23 = arith.addf %17, %22 : vector<16x16x4xf32>
    %24 = vector.extract_strided_slice %5 {offsets = [1, 0, 0], sizes = [16, 16, 4], strides = [1, 1, 1]} : vector<18x18x4xf32> to vector<16x16x4xf32>
    %25 = vector.extract_strided_slice %0 {offsets = [3, 0], sizes = [1, 4], strides = [1, 1]} : vector<9x4xf32> to vector<1x4xf32>
    %26 = vector.shape_cast %25 : vector<1x4xf32> to vector<1x1x4xf32>
    %27 = vector.broadcast %26 : vector<1x1x4xf32> to vector<16x16x4xf32>
    %28 = arith.mulf %24, %27 : vector<16x16x4xf32>
    %29 = arith.addf %23, %28 : vector<16x16x4xf32>
    %30 = vector.extract_strided_slice %5 {offsets = [1, 1, 0], sizes = [16, 16, 4], strides = [1, 1, 1]} : vector<18x18x4xf32> to vector<16x16x4xf32>
    %31 = vector.extract_strided_slice %0 {offsets = [4, 0], sizes = [1, 4], strides = [1, 1]} : vector<9x4xf32> to vector<1x4xf32>
    %32 = vector.shape_cast %31 : vector<1x4xf32> to vector<1x1x4xf32>
    %33 = vector.broadcast %32 : vector<1x1x4xf32> to vector<16x16x4xf32>
    %34 = arith.mulf %30, %33 : vector<16x16x4xf32>
    %35 = arith.addf %29, %34 : vector<16x16x4xf32>
    %36 = vector.extract_strided_slice %5 {offsets = [1, 2, 0], sizes = [16, 16, 4], strides = [1, 1, 1]} : vector<18x18x4xf32> to vector<16x16x4xf32>
    %37 = vector.extract_strided_slice %0 {offsets = [5, 0], sizes = [1, 4], strides = [1, 1]} : vector<9x4xf32> to vector<1x4xf32>
    %38 = vector.shape_cast %37 : vector<1x4xf32> to vector<1x1x4xf32>
    %39 = vector.broadcast %38 : vector<1x1x4xf32> to vector<16x16x4xf32>
    %40 = arith.mulf %36, %39 : vector<16x16x4xf32>
    %41 = arith.addf %35, %40 : vector<16x16x4xf32>
    %42 = vector.extract_strided_slice %5 {offsets = [2, 0, 0], sizes = [16, 16, 4], strides = [1, 1, 1]} : vector<18x18x4xf32> to vector<16x16x4xf32>
    %43 = vector.extract_strided_slice %0 {offsets = [6, 0], sizes = [1, 4], strides = [1, 1]} : vector<9x4xf32> to vector<1x4xf32>
    %44 = vector.shape_cast %43 : vector<1x4xf32> to vector<1x1x4xf32>
    %45 = vector.broadcast %44 : vector<1x1x4xf32> to vector<16x16x4xf32>
    %46 = arith.mulf %42, %45 : vector<16x16x4xf32>
    %47 = arith.addf %41, %46 : vector<16x16x4xf32>
    %48 = vector.extract_strided_slice %5 {offsets = [2, 1, 0], sizes = [16, 16, 4], strides = [1, 1, 1]} : vector<18x18x4xf32> to vector<16x16x4xf32>
    %49 = vector.extract_strided_slice %0 {offsets = [7, 0], sizes = [1, 4], strides = [1, 1]} : vector<9x4xf32> to vector<1x4xf32>
    %50 = vector.shape_cast %49 : vector<1x4xf32> to vector<1x1x4xf32>
    %51 = vector.broadcast %50 : vector<1x1x4xf32> to vector<16x16x4xf32>
    %52 = arith.mulf %48, %51 : vector<16x16x4xf32>
    %53 = arith.addf %47, %52 : vector<16x16x4xf32>
    %54 = vector.extract_strided_slice %5 {offsets = [2, 2, 0], sizes = [16, 16, 4], strides = [1, 1, 1]} : vector<18x18x4xf32> to vector<16x16x4xf32>
    %55 = vector.extract_strided_slice %0 {offsets = [8, 0], sizes = [1, 4], strides = [1, 1]} : vector<9x4xf32> to vector<1x4xf32>
    %56 = vector.shape_cast %55 : vector<1x4xf32> to vector<1x1x4xf32>
    %57 = vector.broadcast %56 : vector<1x1x4xf32> to vector<16x16x4xf32>
    %58 = arith.mulf %54, %57 : vector<16x16x4xf32>
    %59 = arith.addf %53, %58 : vector<16x16x4xf32>
    %60 = vector.shape_cast %59 : vector<16x16x4xf32> to vector<256x4xf32>
    %c0_6 = arith.constant 0 : index
    %c0_7 = arith.constant 0 : index
    %61 = vector.load %arg3[%c0_6, %c0_7] : memref<4x4xf32, #tpu.memory_space<vmem>>, vector<4x4xf32>
    %cst_8 = arith.constant dense<0.000000e+00> : vector<256x4xf32>
    %62 = tpu.matmul %60, %61, %cst_8 {dimension_numbers = #tpu.dot_dimension_numbers<[1], [0], [0], [1], [0, 0, 1, 1], [], []>} : vector<256x4xf32>, vector<4x4xf32>, vector<256x4xf32> -> vector<256x4xf32>
    %63 = vector.shape_cast %62 : vector<256x4xf32> to vector<16x16x4xf32>
    %c0_9 = arith.constant 0 : index
    %c0_10 = arith.constant 0 : index
    %c0_11 = arith.constant 0 : index
    %c0_12 = arith.constant 0 : index
    %64 = vector.load %arg4[%c0_9, %c0_10, %c0_11, %c0_12] : memref<1x16x16x4xf32, #tpu.memory_space<vmem>>, vector<1x16x16x4xf32>
    %65 = vector.shape_cast %64 : vector<1x16x16x4xf32> to vector<16x16x4xf32>
    %66 = vector.shape_cast %63 : vector<16x16x4xf32> to vector<1x16x16x4xf32>
    tpu.vector_store %arg4[%c0_9, %c0_10, %c0_11, %c0_12], %66 {strides = array<i32>} : memref<1x16x16x4xf32, #tpu.memory_space<vmem>>, vector<1x16x16x4xf32>,
    %cst_13 = arith.constant dense<0.000000e+00> : vector<4xf32>
    %67 = vector.multi_reduction <add>, %62, %cst_13 [0] : vector<256x4xf32> to vector<4xf32>
    %68 = vector.shape_cast %67 : vector<4xf32> to vector<1x4xf32>
    %c0_14 = arith.constant 0 : index
    %c0_15 = arith.constant 0 : index
    %c0_16 = arith.constant 0 : index
    %69 = vector.load %arg5[%c0_14, %c0_15, %c0_16] : memref<1x1x4xf32, #tpu.memory_space<vmem>>, vector<1x1x4xf32>
    %70 = vector.shape_cast %69 : vector<1x1x4xf32> to vector<1x4xf32>
    %71 = vector.shape_cast %68 : vector<1x4xf32> to vector<1x1x4xf32>
    tpu.vector_store %arg5[%c0_14, %c0_15, %c0_16], %71 {strides = array<i32>} : memref<1x1x4xf32, #tpu.memory_space<vmem>>, vector<1x1x4xf32>,
    %72 = arith.mulf %62, %62 : vector<256x4xf32>
    %cst_17 = arith.constant dense<0.000000e+00> : vector<4xf32>
    %73 = vector.multi_reduction <add>, %72, %cst_17 [0] : vector<256x4xf32> to vector<4xf32>
    %74 = vector.shape_cast %73 : vector<4xf32> to vector<1x4xf32>
    %c0_18 = arith.constant 0 : index
    %c0_19 = arith.constant 0 : index
    %c0_20 = arith.constant 0 : index
    %75 = vector.load %arg6[%c0_18, %c0_19, %c0_20] : memref<1x1x4xf32, #tpu.memory_space<vmem>>, vector<1x1x4xf32>
    %76 = vector.shape_cast %75 : vector<1x1x4xf32> to vector<1x4xf32>
    %77 = vector.shape_cast %74 : vector<1x4xf32> to vector<1x1x4xf32>
    tpu.vector_store %arg6[%c0_18, %c0_19, %c0_20], %77 {strides = array<i32>} : memref<1x1x4xf32, #tpu.memory_space<vmem>>, vector<1x1x4xf32>,
    return
  }
  func.func @transform_0(%arg0: i32) -> (i32, i32, i32, i32) {
    %c0_i32 = arith.constant 0 : i32
    %c0_i32_0 = arith.constant 0 : i32
    %c0_i32_1 = arith.constant 0 : i32
    %c0_i32_2 = arith.constant 0 : i32
    return %arg0, %c0_i32, %c0_i32_0, %c0_i32_1 : i32, i32, i32, i32
  }
  func.func @transform_1(%arg0: i32) -> (i32, i32) {
    %c0_i32 = arith.constant 0 : i32
    %c0_i32_0 = arith.constant 0 : i32
    %c0_i32_1 = arith.constant 0 : i32
    return %c0_i32, %c0_i32_0 : i32, i32
  }
  func.func @transform_2(%arg0: i32) -> (i32, i32) {
    %c0_i32 = arith.constant 0 : i32
    %c0_i32_0 = arith.constant 0 : i32
    %c0_i32_1 = arith.constant 0 : i32
    return %c0_i32, %c0_i32_0 : i32, i32
  }
  func.func @transform_3(%arg0: i32) -> (i32, i32, i32, i32) {
    %c0_i32 = arith.constant 0 : i32
    %c0_i32_0 = arith.constant 0 : i32
    %c0_i32_1 = arith.constant 0 : i32
    %c0_i32_2 = arith.constant 0 : i32
    return %arg0, %c0_i32, %c0_i32_0, %c0_i32_1 : i32, i32, i32, i32
  }
  func.func @transform_4(%arg0: i32) -> (i32, i32, i32) {
    %c0_i32 = arith.constant 0 : i32
    %c0_i32_0 = arith.constant 0 : i32
    %c0_i32_1 = arith.constant 0 : i32
    return %arg0, %c0_i32, %c0_i32_0 : i32, i32, i32
  }
  func.func @transform_5(%arg0: i32) -> (i32, i32, i32) {
    %c0_i32 = arith.constant 0 : i32
    %c0_i32_0 = arith.constant 0 : i32
    %c0_i32_1 = arith.constant 0 : i32
    return %arg0, %c0_i32, %c0_i32_0 : i32, i32, i32
  }
}

module attributes {stable_mosaic.version = 11 : i64} {
  func.func @_bn_relu_dw_pw_stats_kernel(%arg0: i32, %arg1: memref<1x16x16x4xf32, #tpu.memory_space<vmem>>, %arg2: memref<1x4xf32, #tpu.memory_space<vmem>>, %arg3: memref<1x4xf32, #tpu.memory_space<vmem>>, %arg4: memref<9x4xf32, #tpu.memory_space<vmem>>, %arg5: memref<4x8xf32, #tpu.memory_space<vmem>>, %arg6: memref<1x16x16x8xf32, #tpu.memory_space<vmem>>, %arg7: memref<1x1x8xf32, #tpu.memory_space<vmem>>, %arg8: memref<1x1x8xf32, #tpu.memory_space<vmem>>, %arg9: memref<18x25x4xf32, #tpu.memory_space<vmem>>) attributes {dimension_semantics = [#tpu.dimension_semantics<parallel>], iteration_bounds = array<i64: 2>, scalar_prefetch = 0 : i64, scratch_operands = 1 : i64, tpu.core_type = #tpu.core_type<tc>, window_params = [{transform_indices = @transform_0, window_bounds = array<i64: 1, 16, 16, 4>}, {pipeline_mode = #tpu.pipeline_mode<synchronous>, transform_indices = @transform_1, window_bounds = array<i64: 1, 4>}, {pipeline_mode = #tpu.pipeline_mode<synchronous>, transform_indices = @transform_2, window_bounds = array<i64: 1, 4>}, {pipeline_mode = #tpu.pipeline_mode<synchronous>, transform_indices = @transform_3, window_bounds = array<i64: 9, 4>}, {pipeline_mode = #tpu.pipeline_mode<synchronous>, transform_indices = @transform_4, window_bounds = array<i64: 4, 8>}, {transform_indices = @transform_5, window_bounds = array<i64: 1, 16, 16, 8>}, {transform_indices = @transform_6, window_bounds = array<i64: 1, 1, 8>}, {transform_indices = @transform_7, window_bounds = array<i64: 1, 1, 8>}]} {
    %cst = arith.constant 0.000000e+00 : f32
    %0 = vector.broadcast %cst : f32 to vector<1x25x4xf32>
    %c0 = arith.constant 0 : index
    %c0_0 = arith.constant 0 : index
    %c0_1 = arith.constant 0 : index
    %1 = vector.load %arg9[%c0, %c0_0, %c0_1] : memref<18x25x4xf32, #tpu.memory_space<vmem>>, vector<1x25x4xf32>
    tpu.vector_store %arg9[%c0, %c0_0, %c0_1], %0 {strides = array<i32>} : memref<18x25x4xf32, #tpu.memory_space<vmem>>, vector<1x25x4xf32>,
    %cst_2 = arith.constant 0.000000e+00 : f32
    %2 = vector.broadcast %cst_2 : f32 to vector<1x25x4xf32>
    %c17 = arith.constant 17 : index
    %c0_3 = arith.constant 0 : index
    %c0_4 = arith.constant 0 : index
    %3 = vector.load %arg9[%c17, %c0_3, %c0_4] : memref<18x25x4xf32, #tpu.memory_space<vmem>>, vector<1x25x4xf32>
    tpu.vector_store %arg9[%c17, %c0_3, %c0_4], %2 {strides = array<i32>} : memref<18x25x4xf32, #tpu.memory_space<vmem>>, vector<1x25x4xf32>,
    %cst_5 = arith.constant 0.000000e+00 : f32
    %4 = vector.broadcast %cst_5 : f32 to vector<16x8x4xf32>
    %c1 = arith.constant 1 : index
    %c0_6 = arith.constant 0 : index
    %c0_7 = arith.constant 0 : index
    %5 = vector.load %arg9[%c1, %c0_6, %c0_7] : memref<18x25x4xf32, #tpu.memory_space<vmem>>, vector<16x8x4xf32>
    tpu.vector_store %arg9[%c1, %c0_6, %c0_7], %4 {strides = array<i32>} : memref<18x25x4xf32, #tpu.memory_space<vmem>>, vector<16x8x4xf32>,
    %cst_8 = arith.constant 0.000000e+00 : f32
    %6 = vector.broadcast %cst_8 : f32 to vector<16x1x4xf32>
    %c1_9 = arith.constant 1 : index
    %c24 = arith.constant 24 : index
    %c0_10 = arith.constant 0 : index
    %7 = vector.load %arg9[%c1_9, %c24, %c0_10] : memref<18x25x4xf32, #tpu.memory_space<vmem>>, vector<16x1x4xf32>
    tpu.vector_store %arg9[%c1_9, %c24, %c0_10], %6 {strides = array<i32>} : memref<18x25x4xf32, #tpu.memory_space<vmem>>, vector<16x1x4xf32>,
    %c0_11 = arith.constant 0 : index
    %c0_12 = arith.constant 0 : index
    %c0_13 = arith.constant 0 : index
    %c0_14 = arith.constant 0 : index
    %8 = vector.load %arg1[%c0_11, %c0_12, %c0_13, %c0_14] : memref<1x16x16x4xf32, #tpu.memory_space<vmem>>, vector<1x16x16x4xf32>
    %9 = vector.shape_cast %8 : vector<1x16x16x4xf32> to vector<16x16x4xf32>
    %c0_15 = arith.constant 0 : index
    %c0_16 = arith.constant 0 : index
    %10 = vector.load %arg2[%c0_15, %c0_16] : memref<1x4xf32, #tpu.memory_space<vmem>>, vector<1x4xf32>
    %11 = vector.shape_cast %10 : vector<1x4xf32> to vector<1x1x4xf32>
    %12 = vector.broadcast %11 : vector<1x1x4xf32> to vector<16x16x4xf32>
    %13 = arith.mulf %9, %12 : vector<16x16x4xf32>
    %c0_17 = arith.constant 0 : index
    %c0_18 = arith.constant 0 : index
    %14 = vector.load %arg3[%c0_17, %c0_18] : memref<1x4xf32, #tpu.memory_space<vmem>>, vector<1x4xf32>
    %15 = vector.shape_cast %14 : vector<1x4xf32> to vector<1x1x4xf32>
    %16 = vector.broadcast %15 : vector<1x1x4xf32> to vector<16x16x4xf32>
    %17 = arith.addf %13, %16 : vector<16x16x4xf32>
    %cst_19 = arith.constant 0.000000e+00 : f32
    %18 = vector.broadcast %cst_19 : f32 to vector<16x16x4xf32>
    %19 = arith.maximumf %17, %18 : vector<16x16x4xf32>
    %c1_20 = arith.constant 1 : index
    %c8 = arith.constant 8 : index
    %c0_21 = arith.constant 0 : index
    %20 = vector.load %arg9[%c1_20, %c8, %c0_21] : memref<18x25x4xf32, #tpu.memory_space<vmem>>, vector<16x16x4xf32>
    tpu.vector_store %arg9[%c1_20, %c8, %c0_21], %19 {strides = array<i32>} : memref<18x25x4xf32, #tpu.memory_space<vmem>>, vector<16x16x4xf32>,
    %c0_22 = arith.constant 0 : index
    %c0_23 = arith.constant 0 : index
    %21 = vector.load %arg4[%c0_22, %c0_23] : memref<9x4xf32, #tpu.memory_space<vmem>>, vector<9x4xf32>
    %cst_24 = arith.constant 0.000000e+00 : f32
    %22 = vector.broadcast %cst_24 : f32 to vector<16x16x4xf32>
    %c0_25 = arith.constant 0 : index
    %c7 = arith.constant 7 : index
    %c0_26 = arith.constant 0 : index
    %23 = vector.load %arg9[%c0_25, %c7, %c0_26] : memref<18x25x4xf32, #tpu.memory_space<vmem>>, vector<16x16x4xf32>
    %24 = vector.extract_strided_slice %21 {offsets = [0, 0], sizes = [1, 4], strides = [1, 1]} : vector<9x4xf32> to vector<1x4xf32>
    %25 = vector.shape_cast %24 : vector<1x4xf32> to vector<1x1x4xf32>
    %26 = vector.broadcast %25 : vector<1x1x4xf32> to vector<16x16x4xf32>
    %27 = arith.mulf %23, %26 : vector<16x16x4xf32>
    %28 = arith.addf %22, %27 : vector<16x16x4xf32>
    %c0_27 = arith.constant 0 : index
    %c8_28 = arith.constant 8 : index
    %c0_29 = arith.constant 0 : index
    %29 = vector.load %arg9[%c0_27, %c8_28, %c0_29] : memref<18x25x4xf32, #tpu.memory_space<vmem>>, vector<16x16x4xf32>
    %30 = vector.extract_strided_slice %21 {offsets = [1, 0], sizes = [1, 4], strides = [1, 1]} : vector<9x4xf32> to vector<1x4xf32>
    %31 = vector.shape_cast %30 : vector<1x4xf32> to vector<1x1x4xf32>
    %32 = vector.broadcast %31 : vector<1x1x4xf32> to vector<16x16x4xf32>
    %33 = arith.mulf %29, %32 : vector<16x16x4xf32>
    %34 = arith.addf %28, %33 : vector<16x16x4xf32>
    %c0_30 = arith.constant 0 : index
    %c9 = arith.constant 9 : index
    %c0_31 = arith.constant 0 : index
    %35 = vector.load %arg9[%c0_30, %c9, %c0_31] : memref<18x25x4xf32, #tpu.memory_space<vmem>>, vector<16x16x4xf32>
    %36 = vector.extract_strided_slice %21 {offsets = [2, 0], sizes = [1, 4], strides = [1, 1]} : vector<9x4xf32> to vector<1x4xf32>
    %37 = vector.shape_cast %36 : vector<1x4xf32> to vector<1x1x4xf32>
    %38 = vector.broadcast %37 : vector<1x1x4xf32> to vector<16x16x4xf32>
    %39 = arith.mulf %35, %38 : vector<16x16x4xf32>
    %40 = arith.addf %34, %39 : vector<16x16x4xf32>
    %c1_32 = arith.constant 1 : index
    %c7_33 = arith.constant 7 : index
    %c0_34 = arith.constant 0 : index
    %41 = vector.load %arg9[%c1_32, %c7_33, %c0_34] : memref<18x25x4xf32, #tpu.memory_space<vmem>>, vector<16x16x4xf32>
    %42 = vector.extract_strided_slice %21 {offsets = [3, 0], sizes = [1, 4], strides = [1, 1]} : vector<9x4xf32> to vector<1x4xf32>
    %43 = vector.shape_cast %42 : vector<1x4xf32> to vector<1x1x4xf32>
    %44 = vector.broadcast %43 : vector<1x1x4xf32> to vector<16x16x4xf32>
    %45 = arith.mulf %41, %44 : vector<16x16x4xf32>
    %46 = arith.addf %40, %45 : vector<16x16x4xf32>
    %c1_35 = arith.constant 1 : index
    %c8_36 = arith.constant 8 : index
    %c0_37 = arith.constant 0 : index
    %47 = vector.load %arg9[%c1_35, %c8_36, %c0_37] : memref<18x25x4xf32, #tpu.memory_space<vmem>>, vector<16x16x4xf32>
    %48 = vector.extract_strided_slice %21 {offsets = [4, 0], sizes = [1, 4], strides = [1, 1]} : vector<9x4xf32> to vector<1x4xf32>
    %49 = vector.shape_cast %48 : vector<1x4xf32> to vector<1x1x4xf32>
    %50 = vector.broadcast %49 : vector<1x1x4xf32> to vector<16x16x4xf32>
    %51 = arith.mulf %47, %50 : vector<16x16x4xf32>
    %52 = arith.addf %46, %51 : vector<16x16x4xf32>
    %c1_38 = arith.constant 1 : index
    %c9_39 = arith.constant 9 : index
    %c0_40 = arith.constant 0 : index
    %53 = vector.load %arg9[%c1_38, %c9_39, %c0_40] : memref<18x25x4xf32, #tpu.memory_space<vmem>>, vector<16x16x4xf32>
    %54 = vector.extract_strided_slice %21 {offsets = [5, 0], sizes = [1, 4], strides = [1, 1]} : vector<9x4xf32> to vector<1x4xf32>
    %55 = vector.shape_cast %54 : vector<1x4xf32> to vector<1x1x4xf32>
    %56 = vector.broadcast %55 : vector<1x1x4xf32> to vector<16x16x4xf32>
    %57 = arith.mulf %53, %56 : vector<16x16x4xf32>
    %58 = arith.addf %52, %57 : vector<16x16x4xf32>
    %c2 = arith.constant 2 : index
    %c7_41 = arith.constant 7 : index
    %c0_42 = arith.constant 0 : index
    %59 = vector.load %arg9[%c2, %c7_41, %c0_42] : memref<18x25x4xf32, #tpu.memory_space<vmem>>, vector<16x16x4xf32>
    %60 = vector.extract_strided_slice %21 {offsets = [6, 0], sizes = [1, 4], strides = [1, 1]} : vector<9x4xf32> to vector<1x4xf32>
    %61 = vector.shape_cast %60 : vector<1x4xf32> to vector<1x1x4xf32>
    %62 = vector.broadcast %61 : vector<1x1x4xf32> to vector<16x16x4xf32>
    %63 = arith.mulf %59, %62 : vector<16x16x4xf32>
    %64 = arith.addf %58, %63 : vector<16x16x4xf32>
    %c2_43 = arith.constant 2 : index
    %c8_44 = arith.constant 8 : index
    %c0_45 = arith.constant 0 : index
    %65 = vector.load %arg9[%c2_43, %c8_44, %c0_45] : memref<18x25x4xf32, #tpu.memory_space<vmem>>, vector<16x16x4xf32>
    %66 = vector.extract_strided_slice %21 {offsets = [7, 0], sizes = [1, 4], strides = [1, 1]} : vector<9x4xf32> to vector<1x4xf32>
    %67 = vector.shape_cast %66 : vector<1x4xf32> to vector<1x1x4xf32>
    %68 = vector.broadcast %67 : vector<1x1x4xf32> to vector<16x16x4xf32>
    %69 = arith.mulf %65, %68 : vector<16x16x4xf32>
    %70 = arith.addf %64, %69 : vector<16x16x4xf32>
    %c2_46 = arith.constant 2 : index
    %c9_47 = arith.constant 9 : index
    %c0_48 = arith.constant 0 : index
    %71 = vector.load %arg9[%c2_46, %c9_47, %c0_48] : memref<18x25x4xf32, #tpu.memory_space<vmem>>, vector<16x16x4xf32>
    %72 = vector.extract_strided_slice %21 {offsets = [8, 0], sizes = [1, 4], strides = [1, 1]} : vector<9x4xf32> to vector<1x4xf32>
    %73 = vector.shape_cast %72 : vector<1x4xf32> to vector<1x1x4xf32>
    %74 = vector.broadcast %73 : vector<1x1x4xf32> to vector<16x16x4xf32>
    %75 = arith.mulf %71, %74 : vector<16x16x4xf32>
    %76 = arith.addf %70, %75 : vector<16x16x4xf32>
    %77 = vector.shape_cast %76 : vector<16x16x4xf32> to vector<256x4xf32>
    %c0_49 = arith.constant 0 : index
    %c0_50 = arith.constant 0 : index
    %78 = vector.load %arg5[%c0_49, %c0_50] : memref<4x8xf32, #tpu.memory_space<vmem>>, vector<4x8xf32>
    %cst_51 = arith.constant dense<0.000000e+00> : vector<256x8xf32>
    %79 = tpu.matmul %77, %78, %cst_51 {dimension_numbers = #tpu.dot_dimension_numbers<[1], [0], [0], [1], [0, 0, 1, 1], [], []>} : vector<256x4xf32>, vector<4x8xf32>, vector<256x8xf32> -> vector<256x8xf32>
    %80 = vector.shape_cast %79 : vector<256x8xf32> to vector<16x16x8xf32>
    %c0_52 = arith.constant 0 : index
    %c0_53 = arith.constant 0 : index
    %c0_54 = arith.constant 0 : index
    %c0_55 = arith.constant 0 : index
    %81 = vector.load %arg6[%c0_52, %c0_53, %c0_54, %c0_55] : memref<1x16x16x8xf32, #tpu.memory_space<vmem>>, vector<1x16x16x8xf32>
    %82 = vector.shape_cast %81 : vector<1x16x16x8xf32> to vector<16x16x8xf32>
    %83 = vector.shape_cast %80 : vector<16x16x8xf32> to vector<1x16x16x8xf32>
    tpu.vector_store %arg6[%c0_52, %c0_53, %c0_54, %c0_55], %83 {strides = array<i32>} : memref<1x16x16x8xf32, #tpu.memory_space<vmem>>, vector<1x16x16x8xf32>,
    %cst_56 = arith.constant dense<0.000000e+00> : vector<8xf32>
    %84 = vector.multi_reduction <add>, %79, %cst_56 [0] : vector<256x8xf32> to vector<8xf32>
    %85 = vector.shape_cast %84 : vector<8xf32> to vector<1x8xf32>
    %c0_57 = arith.constant 0 : index
    %c0_58 = arith.constant 0 : index
    %c0_59 = arith.constant 0 : index
    %86 = vector.load %arg7[%c0_57, %c0_58, %c0_59] : memref<1x1x8xf32, #tpu.memory_space<vmem>>, vector<1x1x8xf32>
    %87 = vector.shape_cast %86 : vector<1x1x8xf32> to vector<1x8xf32>
    %88 = vector.shape_cast %85 : vector<1x8xf32> to vector<1x1x8xf32>
    tpu.vector_store %arg7[%c0_57, %c0_58, %c0_59], %88 {strides = array<i32>} : memref<1x1x8xf32, #tpu.memory_space<vmem>>, vector<1x1x8xf32>,
    %89 = arith.mulf %79, %79 : vector<256x8xf32>
    %cst_60 = arith.constant dense<0.000000e+00> : vector<8xf32>
    %90 = vector.multi_reduction <add>, %89, %cst_60 [0] : vector<256x8xf32> to vector<8xf32>
    %91 = vector.shape_cast %90 : vector<8xf32> to vector<1x8xf32>
    %c0_61 = arith.constant 0 : index
    %c0_62 = arith.constant 0 : index
    %c0_63 = arith.constant 0 : index
    %92 = vector.load %arg8[%c0_61, %c0_62, %c0_63] : memref<1x1x8xf32, #tpu.memory_space<vmem>>, vector<1x1x8xf32>
    %93 = vector.shape_cast %92 : vector<1x1x8xf32> to vector<1x8xf32>
    %94 = vector.shape_cast %91 : vector<1x8xf32> to vector<1x1x8xf32>
    tpu.vector_store %arg8[%c0_61, %c0_62, %c0_63], %94 {strides = array<i32>} : memref<1x1x8xf32, #tpu.memory_space<vmem>>, vector<1x1x8xf32>,
    return
  }
  func.func @transform_0(%arg0: i32) -> (i32, i32, i32, i32) {
    %c0_i32 = arith.constant 0 : i32
    %c0_i32_0 = arith.constant 0 : i32
    %c0_i32_1 = arith.constant 0 : i32
    %c0_i32_2 = arith.constant 0 : i32
    return %arg0, %c0_i32, %c0_i32_0, %c0_i32_1 : i32, i32, i32, i32
  }
  func.func @transform_1(%arg0: i32) -> (i32, i32) {
    %c0_i32 = arith.constant 0 : i32
    %c0_i32_0 = arith.constant 0 : i32
    %c0_i32_1 = arith.constant 0 : i32
    return %c0_i32, %c0_i32_0 : i32, i32
  }
  func.func @transform_2(%arg0: i32) -> (i32, i32) {
    %c0_i32 = arith.constant 0 : i32
    %c0_i32_0 = arith.constant 0 : i32
    %c0_i32_1 = arith.constant 0 : i32
    return %c0_i32, %c0_i32_0 : i32, i32
  }
  func.func @transform_3(%arg0: i32) -> (i32, i32) {
    %c0_i32 = arith.constant 0 : i32
    %c0_i32_0 = arith.constant 0 : i32
    %c0_i32_1 = arith.constant 0 : i32
    return %c0_i32, %c0_i32_0 : i32, i32
  }
  func.func @transform_4(%arg0: i32) -> (i32, i32) {
    %c0_i32 = arith.constant 0 : i32
    %c0_i32_0 = arith.constant 0 : i32
    %c0_i32_1 = arith.constant 0 : i32
    return %c0_i32, %c0_i32_0 : i32, i32
  }
  func.func @transform_5(%arg0: i32) -> (i32, i32, i32, i32) {
    %c0_i32 = arith.constant 0 : i32
    %c0_i32_0 = arith.constant 0 : i32
    %c0_i32_1 = arith.constant 0 : i32
    %c0_i32_2 = arith.constant 0 : i32
    return %arg0, %c0_i32, %c0_i32_0, %c0_i32_1 : i32, i32, i32, i32
  }
  func.func @transform_6(%arg0: i32) -> (i32, i32, i32) {
    %c0_i32 = arith.constant 0 : i32
    %c0_i32_0 = arith.constant 0 : i32
    %c0_i32_1 = arith.constant 0 : i32
    return %arg0, %c0_i32, %c0_i32_0 : i32, i32, i32
  }
  func.func @transform_7(%arg0: i32) -> (i32, i32, i32) {
    %c0_i32 = arith.constant 0 : i32
    %c0_i32_0 = arith.constant 0 : i32
    %c0_i32_1 = arith.constant 0 : i32
    return %arg0, %c0_i32, %c0_i32_0 : i32, i32, i32
  }
}

</mosaic_0001>

<llo_original>
// kernel: sep_conv.2
$region0: #{sep_conv.2}
  #allocation0 [shape = 'u32[]', space=smem, size = 0x4, offset = 0x4, fixed_abs, tag = 'smem constant byte address 0x4 - core index']
  #allocation1 [shape = 'u32[144,128]{1,0:T(1,128)}', space=vmem, size = 0x12000, scoped, tag = 'internal scratch']
  %s0 = inlined_call_operand.vmem [shape: f32[2,18,18,4], index: 0, kind: input, shape index: {}]
  %s1 = inlined_call_operand.vmem [shape: f32[9,4], index: 1, kind: input, shape index: {}]
  %s2 = inlined_call_operand.vmem [shape: f32[4,4], index: 2, kind: input, shape index: {}]
  %s3 = inlined_call_operand.vmem [shape: f32[2,16,16,4], index: 3, kind: output, shape index: {0}]
  %s4 = inlined_call_operand.vmem [shape: f32[2,1,4], index: 4, kind: output, shape index: {1}]
  %s5 = inlined_call_operand.vmem [shape: f32[2,1,4], index: 5, kind: output, shape index: {2}]
  %6 = xla_tuple %s3, %s4, %s5
  %s7 = sld [smem:[#allocation0]]
  $region61: #{sep_conv.2} parent=0
    _
  %s9 = ssub.s32 1, %s7
  %s10 = scalar_select 0, %s9, %s7
  loop: start=0, step=1, limit=4
  $region2: #{sep_conv.2} parent=0 // loop_pre_header
    _
  $region3: #{sep_conv.2} parent=0 // loop_header
    %s12 = sphi 0, %s16
    %p13 = scmp.ge.s32.totalorder %s12, 4
    %s22 = sphi 0, %s24
    %s25 = sphi 0, %s22
    %s26 = sphi 0, %s25
    %s42 = sphi 0, %s26
    %s46 = sphi 0, %s46
    %s48 = sphi 0, %s46
    %s49 = sphi 0, %s48
    %s63 = sphi 0, %s49
    %s67 = sphi 0, %s67
    %s69 = sphi 0, %s67
    %s70 = sphi 0, %s69
    %s84 = sphi 0, %s70
    %s90 = sphi 0, %s92
    %s93 = sphi 0, %s90
    %s94 = sphi 0, %s93
    %s110 = sphi 0, %s94
    %s116 = sphi 0, %s118
    %s119 = sphi 0, %s116
    %s120 = sphi 0, %s119
    %s136 = sphi 0, %s120
    %s142 = sphi 0, %s144
    %s145 = sphi 0, %s142
    %s146 = sphi 0, %s145
    %s162 = sphi 0, %s146
  $region4: #{sep_conv.2} parent=0 // loop_header_branch
    %15 = sbr.rel (%p13) target = $region8
  $region5: #{sep_conv.2} parent=0 // loop_body
    %s17 = ssub.s32 %s12, 1
    %s18 = ssub.s32 %s12, 2
    %s19 = sadd.s32 %s12, 1
    %s20 = ssub.s32 %s12, %s19
    %p21 = scmp.eq.s32.totalorder %s20, 0
    %s23 = sadd.s32 %s22, 1
    %s24 = scalar_select %p21, %s22, %s23
    %p27 = pneg %p21
    %p28 = scmp.eq.s32.totalorder %s12, 1
    %p29 = por %p27, %p28
    %p30 = scmp.ne.s32.totalorder %s22, %s25
    %p31 = scmp.eq.s32.totalorder %s12, 0
    %p32 = por %p30, %p31
    %p33 = scmp.ne.s32.totalorder %s22, %s25
    %p34 = scmp.eq.s32.totalorder %s17, 1
    %p35 = por %p33, %p34
    %p36 = scmp.ne.s32.totalorder %s25, %s26
    %p37 = scmp.eq.s32.totalorder %s17, 0
    %p38 = por %p36, %p37
    %p39 = scmp.ne.s32.totalorder %s25, %s26
    %p40 = scmp.eq.s32.totalorder %s18, 1
    %p41 = por %p39, %p40
    %p43 = scmp.ne.s32.totalorder %s26, %s42
    %p44 = scmp.eq.s32.totalorder %s18, 0
    %p45 = por %p43, %p44
    %s47 = sadd.s32 %s46, 1
    %p50 = scmp.eq.s32.totalorder %s12, 1
    %p51 = scmp.ne.s32.totalorder %s46, %s48
    %p52 = scmp.eq.s32.totalorder %s12, 0
    %p53 = por %p51, %p52
    %p54 = scmp.ne.s32.totalorder %s46, %s48
    %p55 = scmp.eq.s32.totalorder %s17, 1
    %p56 = por %p54, %p55
    %p57 = scmp.ne.s32.totalorder %s48, %s49
    %p58 = scmp.eq.s32.totalorder %s17, 0
    %p59 = por %p57, %p58
    %p60 = scmp.ne.s32.totalorder %s48, %s49
    %p61 = scmp.eq.s32.totalorder %s18, 1
    %p62 = por %p60, %p61
    %p64 = scmp.ne.s32.totalorder %s49, %s63
    %p65 = scmp.eq.s32.totalorder %s18, 0
    %p66 = por %p64, %p65
    %s68 = sadd.s32 %s67, 1
    %p71 = scmp.eq.s32.totalorder %s12, 1
    %p72 = scmp.ne.s32.totalorder %s67, %s69
    %p73 = scmp.eq.s32.totalorder %s12, 0
    %p74 = por %p72, %p73
    %p75 = scmp.ne.s32.totalorder %s67, %s69
    %p76 = scmp.eq.s32.totalorder %s17, 1
    %p77 = por %p75, %p76
    %p78 = scmp.ne.s32.totalorder %s69, %s70
    %p79 = scmp.eq.s32.totalorder %s17, 0
    %p80 = por %p78, %p79
    %p81 = scmp.ne.s32.totalorder %s69, %s70
    %p82 = scmp.eq.s32.totalorder %s18, 1
    %p83 = por %p81, %p82
    %p85 = scmp.ne.s32.totalorder %s70, %s84
    %p86 = scmp.eq.s32.totalorder %s18, 0
    %p87 = por %p85, %p86
    %s88 = ssub.s32 %s12, %s19
    %p89 = scmp.eq.s32.totalorder %s88, 0
    %s91 = sadd.s32 %s90, 1
    %s92 = scalar_select %p89, %s90, %s91
    %p95 = pneg %p89
    %p96 = scmp.eq.s32.totalorder %s12, 1
    %p97 = por %p95, %p96
    %p98 = scmp.ne.s32.totalorder %s90, %s93
    %p99 = scmp.eq.s32.totalorder %s12, 0
    %p100 = por %p98, %p99
    %p101 = scmp.ne.s32.totalorder %s90, %s93
    %p102 = scmp.eq.s32.totalorder %s17, 1
    %p103 = por %p101, %p102
    %p104 = scmp.ne.s32.totalorder %s93, %s94
    %p105 = scmp.eq.s32.totalorder %s17, 0
    %p106 = por %p104, %p105
    %p107 = scmp.ne.s32.totalorder %s93, %s94
    %p108 = scmp.eq.s32.totalorder %s18, 1
    %p109 = por %p107, %p108
    %p111 = scmp.ne.s32.totalorder %s94, %s110
    %p112 = scmp.eq.s32.totalorder %s18, 0
    %p113 = por %p111, %p112
    %s114 = ssub.s32 %s12, %s19
    %p115 = scmp.eq.s32.totalorder %s114, 0
    %s117 = sadd.s32 %s116, 1
    %s118 = scalar_select %p115, %s116, %s117
    %p121 = pneg %p115
    %p122 = scmp.eq.s32.totalorder %s12, 1
    %p123 = por %p121, %p122
    %p124 = scmp.ne.s32.totalorder %s116, %s119
    %p125 = scmp.eq.s32.totalorder %s12, 0
    %p126 = por %p124, %p125
    %p127 = scmp.ne.s32.totalorder %s116, %s119
    %p128 = scmp.eq.s32.totalorder %s17, 1
    %p129 = por %p127, %p128
    %p130 = scmp.ne.s32.totalorder %s119, %s120
    %p131 = scmp.eq.s32.totalorder %s17, 0
    %p132 = por %p130, %p131
    %p133 = scmp.ne.s32.totalorder %s119, %s120
    %p134 = scmp.eq.s32.totalorder %s18, 1
    %p135 = por %p133, %p134
    %p137 = scmp.ne.s32.totalorder %s120, %s136
    %p138 = scmp.eq.s32.totalorder %s18, 0
    %p139 = por %p137, %p138
    %s140 = ssub.s32 %s12, %s19
    %p141 = scmp.eq.s32.totalorder %s140, 0
    %s143 = sadd.s32 %s142, 1
    %s144 = scalar_select %p141, %s142, %s143
    %p147 = pneg %p141
    %p148 = scmp.eq.s32.totalorder %s12, 1
    %p149 = por %p147, %p148
    %p150 = scmp.ne.s32.totalorder %s142, %s145
    %p151 = scmp.eq.s32.totalorder %s12, 0
    %p152 = por %p150, %p151
    %p153 = scmp.ne.s32.totalorder %s142, %s145
    %p154 = scmp.eq.s32.totalorder %s17, 1
    %p155 = por %p153, %p154
    %p156 = scmp.ne.s32.totalorder %s145, %s146
    %p157 = scmp.eq.s32.totalorder %s17, 0
    %p158 = por %p156, %p157
    %p159 = scmp.ne.s32.totalorder %s145, %s146
    %p160 = scmp.eq.s32.totalorder %s18, 1
    %p161 = por %p159, %p160
    %p163 = scmp.ne.s32.totalorder %s146, %s162
    %p164 = scmp.eq.s32.totalorder %s18, 0
    %p165 = por %p163, %p164
    %p166 = scmp.le.s32.totalorder 1, %s12
    %p167 = scmp.lt.s32.totalorder %s12, 3
    %p168 = pnand %p166, %p167
    %p169 = pneg %p168
    // Predicated region
    $region9: #{sep_conv.2} parent=5 // pred_check
      _
    $region10: #{sep_conv.2} parent=5 // pred_check_branch
      %171 = sbr.rel (%p168) target = $region12
    $region11: #{sep_conv.2} parent=5 // pred_region
      %s172 = ssub.s32 %s12, 1
      // Predicated region
      $region13: #{sep_conv.2} parent=11 // pred_check
        %p173 = pneg %p59
      $region14: #{sep_conv.2} parent=11 // pred_check_branch
        %175 = sbr.rel (%p173) target = $region16
      $region15: #{sep_conv.2} parent=11 // pred_region
        _
      $region16: #{sep_conv.2} parent=11 // pred_fallthru
        _
      // Predicated region
      $region17: #{sep_conv.2} parent=11 // pred_check
        %p176 = pneg %p80
      $region18: #{sep_conv.2} parent=11 // pred_check_branch
        %178 = sbr.rel (%p176) target = $region20
      $region19: #{sep_conv.2} parent=11 // pred_region
        _
      $region20: #{sep_conv.2} parent=11 // pred_fallthru
        _
    $region12: #{sep_conv.2} parent=5 // pred_fallthru
      _
    %p179 = scmp.lt.s32.totalorder %s12, 2
    // Predicated region
    $region21: #{sep_conv.2} parent=5 // pred_check
      %p180 = pneg %p179
    $region22: #{sep_conv.2} parent=5 // pred_check_branch
      %182 = sbr.rel (%p180) target = $region24
    $region23: #{sep_conv.2} parent=5 // pred_region
      // Predicated region
      $region25: #{sep_conv.2} parent=23 // pred_check
        %p183 = pneg %p32
      $region26: #{sep_conv.2} parent=23 // pred_check_branch
        %185 = sbr.rel (%p183) target = $region28
      $region27: #{sep_conv.2} parent=23 // pred_region
        %p186 = scmp.lt.s32.totalorder %s12, 1
        %s187 = scalar_select %p186, %s12, 1
        %s188 = smul.addr %s187, 54
        %s189 = smul.addr %s188, 8
        %s190 = scalar_lea.vmem %s0, %s189
      $region28: #{sep_conv.2} parent=23 // pred_fallthru
        _
    $region24: #{sep_conv.2} parent=5 // pred_fallthru
      _
    %p191 = scmp.le.s32.totalorder 1, %s12
    %p192 = scmp.lt.s32.totalorder %s12, 3
    %p193 = pnand %p191, %p192
    %p194 = pneg %p193
    // Predicated region
    $region29: #{sep_conv.2} parent=5 // pred_check
      _
    $region30: #{sep_conv.2} parent=5 // pred_check_branch
      %196 = sbr.rel (%p193) target = $region32
    $region31: #{sep_conv.2} parent=5 // pred_region
      %s197 = ssub.s32 %s12, 1
      %p198 = scmp.lt.s32.totalorder %s17, 1
      %s199 = scalar_select %p198, %s17, 1
      %s200 = smul.addr %s199, 54
      %s201 = smul.addr %s200, 8
      %s202 = scalar_lea.vmem %s0, %s201
      %p203 = pneg %p38
      %p204 = pneg %p35
      %p205 = pneg %p59
      %p206 = pneg %p56
      %p207 = pneg %p80
      %p208 = pneg %p77
      %p209 = pneg %p106
      %p210 = pneg %p103
      %p211 = scmp.lt.s32.totalorder %s17, 1
      %s212 = scalar_select %p211, %s17, 1
      %s213 = smul.addr %s212, 32
      %s214 = smul.addr %s213, 8
      %s215 = scalar_lea.vmem %s3, %s214
      %p216 = pneg %p132
      %p217 = pneg %p129
      %p218 = scmp.lt.s32.totalorder %s17, 1
      %s219 = scalar_select %p218, %s17, 1
      %s220 = scalar_lea.vmem %s4, %s219
      %p221 = pneg %p158
      %p222 = pneg %p155
      %p223 = scmp.lt.s32.totalorder %s17, 1
      %s224 = scalar_select %p223, %s17, 1
      %s225 = scalar_lea.vmem %s5, %s224
      %p226 = scmp.lt.s32.totalorder %s17, 1
      %s227 = scalar_select %p226, %s17, 1
      %s228 = smul.addr %s227, 54
      %s229 = smul.addr %s228, 8
      %s230 = scalar_lea.vmem %s0, %s229
      %p231 = scmp.lt.s32.totalorder %s17, 1
      %s232 = scalar_select %p231, %s17, 1
      %s233 = smul.addr %s232, 32
      %s234 = smul.addr %s233, 8
      %s235 = scalar_lea.vmem %s3, %s234
      %p236 = scmp.lt.s32.totalorder %s17, 1
      %s237 = scalar_select %p236, %s17, 1
      %s238 = scalar_lea.vmem %s4, %s237
      %p239 = scmp.lt.s32.totalorder %s17, 1
      %s240 = scalar_select %p239, %s17, 1
      %s241 = scalar_lea.vmem %s5, %s240
      %v242 = vld [vmem:[%s1] sm:$0xff]
      %v243 = vld [vmem:[%s1 + $0x8] sm:$0x1]
      %v244 = vld [vmem:[%s230] sm:$0xff]
      %v245 = vld [vmem:[%s230 + $0x8] sm:$0xff]
      %v246 = vld [vmem:[%s230 + $0x10] sm:$0x3]
      %v247 = vld [vmem:[%s230 + $0x18] sm:$0xff]
      %v248 = vld [vmem:[%s230 + $0x20] sm:$0xff]
      %v249 = vld [vmem:[%s230 + $0x28] sm:$0x3]
      %v250 = vld [vmem:[%s230 + $0x30] sm:$0xff]
      %v251 = vld [vmem:[%s230 + $0x38] sm:$0xff]
      %v252 = vld [vmem:[%s230 + $0x40] sm:$0x3]
      %v253 = vld [vmem:[%s230 + $0x48] sm:$0xff]
      %v254 = vld [vmem:[%s230 + $0x50] sm:$0xff]
      %v255 = vld [vmem:[%s230 + $0x58] sm:$0x3]
      %v256 = vld [vmem:[%s230 + $0x60] sm:$0xff]
      %v257 = vld [vmem:[%s230 + $0x68] sm:$0xff]
      %v258 = vld [vmem:[%s230 + $0x70] sm:$0x3]
      %v259 = vld [vmem:[%s230 + $0x78] sm:$0xff]
      %v260 = vld [vmem:[%s230 + $0x80] sm:$0xff]
      %v261 = vld [vmem:[%s230 + $0x88] sm:$0x3]
      %v262 = vld [vmem:[%s230 + $0x90] sm:$0xff]
      %v263 = vld [vmem:[%s230 + $0x98] sm:$0xff]
      %v264 = vld [vmem:[%s230 + $0xa0] sm:$0x3]
      %v265 = vld [vmem:[%s230 + $0xa8] sm:$0xff]
      %v266 = vld [vmem:[%s230 + $0xb0] sm:$0xff]
      %v267 = vld [vmem:[%s230 + $0xb8] sm:$0x3]
      %v268 = vld [vmem:[%s230 + $0xc0] sm:$0xff]
      %v269 = vld [vmem:[%s230 + $0xc8] sm:$0xff]
      %v270 = vld [vmem:[%s230 + $0xd0] sm:$0x3]
      %v271 = vld [vmem:[%s230 + $0xd8] sm:$0xff]
      %v272 = vld [vmem:[%s230 + $0xe0] sm:$0xff]
      %v273 = vld [vmem:[%s230 + $0xe8] sm:$0x3]
      %v274 = vld [vmem:[%s230 + $0xf0] sm:$0xff]
      %v275 = vld [vmem:[%s230 + $0xf8] sm:$0xff]
      %v276 = vld [vmem:[%s230 + $0x100] sm:$0x3]
      %v277 = vld [vmem:[%s230 + $0x108] sm:$0xff]
      %v278 = vld [vmem:[%s230 + $0x110] sm:$0xff]
      %v279 = vld [vmem:[%s230 + $0x118] sm:$0x3]
      %v280 = vld [vmem:[%s230 + $0x120] sm:$0xff]
      %v281 = vld [vmem:[%s230 + $0x128] sm:$0xff]
      %v282 = vld [vmem:[%s230 + $0x130] sm:$0x3]
      %v283 = vld [vmem:[%s230 + $0x138] sm:$0xff]
      %v284 = vld [vmem:[%s230 + $0x140] sm:$0xff]
      %v285 = vld [vmem:[%s230 + $0x148] sm:$0x3]
      %v286 = vld [vmem:[%s230 + $0x150] sm:$0xff]
      %v287 = vld [vmem:[%s230 + $0x158] sm:$0xff]
      %v288 = vld [vmem:[%s230 + $0x160] sm:$0x3]
      %v289 = vld [vmem:[%s230 + $0x168] sm:$0xff]
      %v290 = vld [vmem:[%s230 + $0x170] sm:$0xff]
      %v291 = vld [vmem:[%s230 + $0x178] sm:$0x3]
      %v292 = vld [vmem:[%s230 + $0x180] sm:$0xff]
      %v293 = vld [vmem:[%s230 + $0x188] sm:$0xff]
      %v294 = vld [vmem:[%s230 + $0x190] sm:$0x3]
      %v295 = vld [vmem:[%s230 + $0x198] sm:$0xff]
      %v296 = vld [vmem:[%s230 + $0x1a0] sm:$0xff]
      %v297 = vld [vmem:[%s230 + $0x1a8] sm:$0x3]
      %v298 = vmax.f32 %v244, 0.0
      %v299 = vmax.f32 %v245, 0.0
      %v300 = vmax.f32 %v246, 0.0
      %v301 = vmax.f32 %v247, 0.0
      %v302 = vmax.f32 %v248, 0.0
      %v303 = vmax.f32 %v249, 0.0
      %v304 = vmax.f32 %v250, 0.0
      %v305 = vmax.f32 %v251, 0.0
      %v306 = vmax.f32 %v252, 0.0
      %v307 = vmax.f32 %v253, 0.0
      %v308 = vmax.f32 %v254, 0.0
      %v309 = vmax.f32 %v255, 0.0
      %v310 = vmax.f32 %v256, 0.0
      %v311 = vmax.f32 %v257, 0.0
      %v312 = vmax.f32 %v258, 0.0
      %v313 = vmax.f32 %v259, 0.0
      %v314 = vmax.f32 %v260, 0.0
      %v315 = vmax.f32 %v261, 0.0
      %v316 = vmax.f32 %v262, 0.0
      %v317 = vmax.f32 %v263, 0.0
      %v318 = vmax.f32 %v264, 0.0
      %v319 = vmax.f32 %v265, 0.0
      %v320 = vmax.f32 %v266, 0.0
      %v321 = vmax.f32 %v267, 0.0
      %v322 = vmax.f32 %v268, 0.0
      %v323 = vmax.f32 %v269, 0.0
      %v324 = vmax.f32 %v270, 0.0
      %v325 = vmax.f32 %v271, 0.0
      %v326 = vmax.f32 %v272, 0.0
      %v327 = vmax.f32 %v273, 0.0
      %v328 = vmax.f32 %v274, 0.0
      %v329 = vmax.f32 %v275, 0.0
      %v330 = vmax.f32 %v276, 0.0
      %v331 = vmax.f32 %v277, 0.0
      %v332 = vmax.f32 %v278, 0.0
      %v333 = vmax.f32 %v279, 0.0
      %v334 = vmax.f32 %v280, 0.0
      %v335 = vmax.f32 %v281, 0.0
      %v336 = vmax.f32 %v282, 0.0
      %v337 = vmax.f32 %v283, 0.0
      %v338 = vmax.f32 %v284, 0.0
      %v339 = vmax.f32 %v285, 0.0
      %v340 = vmax.f32 %v286, 0.0
      %v341 = vmax.f32 %v287, 0.0
      %v342 = vmax.f32 %v288, 0.0
      %v343 = vmax.f32 %v289, 0.0
      %v344 = vmax.f32 %v290, 0.0
      %v345 = vmax.f32 %v291, 0.0
      %v346 = vmax.f32 %v292, 0.0
      %v347 = vmax.f32 %v293, 0.0
      %v348 = vmax.f32 %v294, 0.0
      %v349 = vmax.f32 %v295, 0.0
      %v350 = vmax.f32 %v296, 0.0
      %v351 = vmax.f32 %v297, 0.0
      %v352 = vlaneseq
      %v353 = vshrl.u32 %v352, 7
      %v354 = vsub.s32 0, %v353
      %v355 = vrot.slane %v242, %v354
      %v356 = vmul.f32 %v298, %v355
      %v357 = vmul.f32 %v299, %v355
      %v358 = vmul.f32 %v301, %v355
      %v359 = vmul.f32 %v302, %v355
      %v360 = vmul.f32 %v304, %v355
      %v361 = vmul.f32 %v305, %v355
      %v362 = vmul.f32 %v307, %v355
      %v363 = vmul.f32 %v308, %v355
      %v364 = vmul.f32 %v310, %v355
      %v365 = vmul.f32 %v311, %v355
      %v366 = vmul.f32 %v313, %v355
      %v367 = vmul.f32 %v314, %v355
      %v368 = vmul.f32 %v316, %v355
      %v369 = vmul.f32 %v317, %v355
      %v370 = vmul.f32 %v319, %v355
      %v371 = vmul.f32 %v320, %v355
      %v372 = vmul.f32 %v322, %v355
      %v373 = vmul.f32 %v323, %v355
      %v374 = vmul.f32 %v325, %v355
      %v375 = vmul.f32 %v326, %v355
      %v376 = vmul.f32 %v328, %v355
      %v377 = vmul.f32 %v329, %v355
      %v378 = vmul.f32 %v331, %v355
      %v379 = vmul.f32 %v332, %v355
      %v380 = vmul.f32 %v334, %v355
      %v381 = vmul.f32 %v335, %v355
      %v382 = vmul.f32 %v337, %v355
      %v383 = vmul.f32 %v338, %v355
      %v384 = vmul.f32 %v340, %v355
      %v385 = vmul.f32 %v341, %v355
      %v386 = vmul.f32 %v343, %v355
      %v387 = vmul.f32 %v344, %v355
      %v388 = vadd.f32 %v356, 0.0
      %v389 = vadd.f32 %v357, 0.0
      %v390 = vadd.f32 %v358, 0.0
      %v391 = vadd.f32 %v359, 0.0
      %v392 = vadd.f32 %v360, 0.0
      %v393 = vadd.f32 %v361, 0.0
      %v394 = vadd.f32 %v362, 0.0
      %v395 = vadd.f32 %v363, 0.0
      %v396 = vadd.f32 %v364, 0.0
      %v397 = vadd.f32 %v365, 0.0
      %v398 = vadd.f32 %v366, 0.0
      %v399 = vadd.f32 %v367, 0.0
      %v400 = vadd.f32 %v368, 0.0
      %v401 = vadd.f32 %v369, 0.0
      %v402 = vadd.f32 %v370, 0.0
      %v403 = vadd.f32 %v371, 0.0
      %v404 = vadd.f32 %v372, 0.0
      %v405 = vadd.f32 %v373, 0.0
      %v406 = vadd.f32 %v374, 0.0
      %v407 = vadd.f32 %v375, 0.0
      %v408 = vadd.f32 %v376, 0.0
      %v409 = vadd.f32 %v377, 0.0
      %v410 = vadd.f32 %v378, 0.0
      %v411 = vadd.f32 %v379, 0.0
      %v412 = vadd.f32 %v380, 0.0
      %v413 = vadd.f32 %v381, 0.0
      %v414 = vadd.f32 %v382, 0.0
      %v415 = vadd.f32 %v383, 0.0
      %v416 = vadd.f32 %v384, 0.0
      %v417 = vadd.f32 %v385, 0.0
      %v418 = vadd.f32 %v386, 0.0
      %v419 = vadd.f32 %v387, 0.0
      %v420 = vlaneseq
      %v421 = vshrl.u32 %v420, 7
      %v422 = vsub.s32 1, %v421
      %v423 = vrot.slane %v242, %v422
      %v424 = vmul.f32 %v298, %v423
      %v425 = vmul.f32 %v299, %v423
      %v426 = vmul.f32 %v300, %v423
      %v427 = vmul.f32 %v301, %v423
      %v428 = vmul.f32 %v302, %v423
      %v429 = vmul.f32 %v303, %v423
      %v430 = vmul.f32 %v304, %v423
      %v431 = vmul.f32 %v305, %v423
      %v432 = vmul.f32 %v306, %v423
      %v433 = vmul.f32 %v307, %v423
      %v434 = vmul.f32 %v308, %v423
      %v435 = vmul.f32 %v309, %v423
      %v436 = vmul.f32 %v310, %v423
      %v437 = vmul.f32 %v311, %v423
      %v438 = vmul.f32 %v312, %v423
      %v439 = vmul.f32 %v313, %v423
      %v440 = vmul.f32 %v314, %v423
      %v441 = vmul.f32 %v315, %v423
      %v442 = vmul.f32 %v316, %v423
      %v443 = vmul.f32 %v317, %v423
      %v444 = vmul.f32 %v318, %v423
      %v445 = vmul.f32 %v319, %v423
      %v446 = vmul.f32 %v320, %v423
      %v447 = vmul.f32 %v321, %v423
      %v448 = vmul.f32 %v322, %v423
      %v449 = vmul.f32 %v323, %v423
      %v450 = vmul.f32 %v324, %v423
      %v451 = vmul.f32 %v325, %v423
      %v452 = vmul.f32 %v326, %v423
      %v453 = vmul.f32 %v327, %v423
      %v454 = vmul.f32 %v328, %v423
      %v455 = vmul.f32 %v329, %v423
      %v456 = vmul.f32 %v330, %v423
      %v457 = vmul.f32 %v331, %v423
      %v458 = vmul.f32 %v332, %v423
      %v459 = vmul.f32 %v333, %v423
      %v460 = vmul.f32 %v334, %v423
      %v461 = vmul.f32 %v335, %v423
      %v462 = vmul.f32 %v336, %v423
      %v463 = vmul.f32 %v337, %v423
      %v464 = vmul.f32 %v338, %v423
      %v465 = vmul.f32 %v339, %v423
      %v466 = vmul.f32 %v340, %v423
      %v467 = vmul.f32 %v341, %v423
      %v468 = vmul.f32 %v342, %v423
      %v469 = vmul.f32 %v343, %v423
      %v470 = vmul.f32 %v344, %v423
      %v471 = vmul.f32 %v345, %v423
      %vm520 = vcmask 1046528
      %v521 = vrot.slane %v424, 1
      %v522 = vrot.slane %v425, 1
      %v523 = vsel %vm520, %v521, %v522
      %v524 = vrot.slane %v426, 1
      %v525 = vsel %vm520, %v522, %v524
      %v526 = vrot.slane %v427, 1
      %v527 = vrot.slane %v428, 1
      %v528 = vsel %vm520, %v526, %v527
      %v529 = vrot.slane %v429, 1
      %v530 = vsel %vm520, %v527, %v529
      %v531 = vrot.slane %v430, 1
      %v532 = vrot.slane %v431, 1
      %v533 = vsel %vm520, %v531, %v532
      %v534 = vrot.slane %v432, 1
      %v535 = vsel %vm520, %v532, %v534
      %v536 = vrot.slane %v433, 1
      %v537 = vrot.slane %v434, 1
      %v538 = vsel %vm520, %v536, %v537
      %v539 = vrot.slane %v435, 1
      %v540 = vsel %vm520, %v537, %v539
      %v541 = vrot.slane %v436, 1
      %v542 = vrot.slane %v437, 1
      %v543 = vsel %vm520, %v541, %v542
      %v544 = vrot.slane %v438, 1
      %v545 = vsel %vm520, %v542, %v544
      %v546 = vrot.slane %v439, 1
      %v547 = vrot.slane %v440, 1
      %v548 = vsel %vm520, %v546, %v547
      %v549 = vrot.slane %v441, 1
      %v550 = vsel %vm520, %v547, %v549
      %v551 = vrot.slane %v442, 1
      %v552 = vrot.slane %v443, 1
      %v553 = vsel %vm520, %v551, %v552
      %v554 = vrot.slane %v444, 1
      %v555 = vsel %vm520, %v552, %v554
      %v556 = vrot.slane %v445, 1
      %v557 = vrot.slane %v446, 1
      %v558 = vsel %vm520, %v556, %v557
      %v559 = vrot.slane %v447, 1
      %v560 = vsel %vm520, %v557, %v559
      %v561 = vrot.slane %v448, 1
      %v562 = vrot.slane %v449, 1
      %v563 = vsel %vm520, %v561, %v562
      %v564 = vrot.slane %v450, 1
      %v565 = vsel %vm520, %v562, %v564
      %v566 = vrot.slane %v451, 1
      %v567 = vrot.slane %v452, 1
      %v568 = vsel %vm520, %v566, %v567
      %v569 = vrot.slane %v453, 1
      %v570 = vsel %vm520, %v567, %v569
      %v571 = vrot.slane %v454, 1
      %v572 = vrot.slane %v455, 1
      %v573 = vsel %vm520, %v571, %v572
      %v574 = vrot.slane %v456, 1
      %v575 = vsel %vm520, %v572, %v574
      %v576 = vrot.slane %v457, 1
      %v577 = vrot.slane %v458, 1
      %v578 = vsel %vm520, %v576, %v577
      %v579 = vrot.slane %v459, 1
      %v580 = vsel %vm520, %v577, %v579
      %v581 = vrot.slane %v460, 1
      %v582 = vrot.slane %v461, 1
      %v583 = vsel %vm520, %v581, %v582
      %v584 = vrot.slane %v462, 1
      %v585 = vsel %vm520, %v582, %v584
      %v586 = vrot.slane %v463, 1
      %v587 = vrot.slane %v464, 1
      %v588 = vsel %vm520, %v586, %v587
      %v589 = vrot.slane %v465, 1
      %v590 = vsel %vm520, %v587, %v589
      %v591 = vrot.slane %v466, 1
      %v592 = vrot.slane %v467, 1
      %v593 = vsel %vm520, %v591, %v592
      %v594 = vrot.slane %v468, 1
      %v595 = vsel %vm520, %v592, %v594
      %v596 = vrot.slane %v469, 1
      %v597 = vrot.slane %v470, 1
      %v598 = vsel %vm520, %v596, %v597
      %v599 = vrot.slane %v471, 1
      %v600 = vsel %vm520, %v597, %v599
      %v633 = vadd.f32 %v388, %v523
      %v634 = vadd.f32 %v389, %v525
      %v635 = vadd.f32 %v390, %v528
      %v636 = vadd.f32 %v391, %v530
      %v637 = vadd.f32 %v392, %v533
      %v638 = vadd.f32 %v393, %v535
      %v639 = vadd.f32 %v394, %v538
      %v640 = vadd.f32 %v395, %v540
      %v641 = vadd.f32 %v396, %v543
      %v642 = vadd.f32 %v397, %v545
      %v643 = vadd.f32 %v398, %v548
      %v644 = vadd.f32 %v399, %v550
      %v645 = vadd.f32 %v400, %v553
      %v646 = vadd.f32 %v401, %v555
      %v647 = vadd.f32 %v402, %v558
      %v648 = vadd.f32 %v403, %v560
      %v649 = vadd.f32 %v404, %v563
      %v650 = vadd.f32 %v405, %v565
      %v651 = vadd.f32 %v406, %v568
      %v652 = vadd.f32 %v407, %v570
      %v653 = vadd.f32 %v408, %v573
      %v654 = vadd.f32 %v409, %v575
      %v655 = vadd.f32 %v410, %v578
      %v656 = vadd.f32 %v411, %v580
      %v657 = vadd.f32 %v412, %v583
      %v658 = vadd.f32 %v413, %v585
      %v659 = vadd.f32 %v414, %v588
      %v660 = vadd.f32 %v415, %v590
      %v661 = vadd.f32 %v416, %v593
      %v662 = vadd.f32 %v417, %v595
      %v663 = vadd.f32 %v418, %v598
      %v664 = vadd.f32 %v419, %v600
      %v665 = vlaneseq
      %v666 = vshrl.u32 %v665, 7
      %v667 = vsub.s32 2, %v666
      %v668 = vrot.slane %v242, %v667
      %v669 = vmul.f32 %v298, %v668
      %v670 = vmul.f32 %v299, %v668
      %v671 = vmul.f32 %v300, %v668
      %v672 = vmul.f32 %v301, %v668
      %v673 = vmul.f32 %v302, %v668
      %v674 = vmul.f32 %v303, %v668
      %v675 = vmul.f32 %v304, %v668
      %v676 = vmul.f32 %v305, %v668
      %v677 = vmul.f32 %v306, %v668
      %v678 = vmul.f32 %v307, %v668
      %v679 = vmul.f32 %v308, %v668
      %v680 = vmul.f32 %v309, %v668
      %v681 = vmul.f32 %v310, %v668
      %v682 = vmul.f32 %v311, %v668
      %v683 = vmul.f32 %v312, %v668
      %v684 = vmul.f32 %v313, %v668
      %v685 = vmul.f32 %v314, %v668
      %v686 = vmul.f32 %v315, %v668
      %v687 = vmul.f32 %v316, %v668
      %v688 = vmul.f32 %v317, %v668
      %v689 = vmul.f32 %v318, %v668
      %v690 = vmul.f32 %v319, %v668
      %v691 = vmul.f32 %v320, %v668
      %v692 = vmul.f32 %v321, %v668
      %v693 = vmul.f32 %v322, %v668
      %v694 = vmul.f32 %v323, %v668
      %v695 = vmul.f32 %v324, %v668
      %v696 = vmul.f32 %v325, %v668
      %v697 = vmul.f32 %v326, %v668
      %v698 = vmul.f32 %v327, %v668
      %v699 = vmul.f32 %v328, %v668
      %v700 = vmul.f32 %v329, %v668
      %v701 = vmul.f32 %v330, %v668
      %v702 = vmul.f32 %v331, %v668
      %v703 = vmul.f32 %v332, %v668
      %v704 = vmul.f32 %v333, %v668
      %v705 = vmul.f32 %v334, %v668
      %v706 = vmul.f32 %v335, %v668
      %v707 = vmul.f32 %v336, %v668
      %v708 = vmul.f32 %v337, %v668
      %v709 = vmul.f32 %v338, %v668
      %v710 = vmul.f32 %v339, %v668
      %v711 = vmul.f32 %v340, %v668
      %v712 = vmul.f32 %v341, %v668
      %v713 = vmul.f32 %v342, %v668
      %v714 = vmul.f32 %v343, %v668
      %v715 = vmul.f32 %v344, %v668
      %v716 = vmul.f32 %v345, %v668
      %vm765 = vcmask 1045504
      %v766 = vrot.slane %v669, 2
      %v767 = vrot.slane %v670, 2
      %v768 = vsel %vm765, %v766, %v767
      %v769 = vrot.slane %v671, 2
      %v770 = vsel %vm765, %v767, %v769
      %v771 = vrot.slane %v672, 2
      %v772 = vrot.slane %v673, 2
      %v773 = vsel %vm765, %v771, %v772
      %v774 = vrot.slane %v674, 2
      %v775 = vsel %vm765, %v772, %v774
      %v776 = vrot.slane %v675, 2
      %v777 = vrot.slane %v676, 2
      %v778 = vsel %vm765, %v776, %v777
      %v779 = vrot.slane %v677, 2
      %v780 = vsel %vm765, %v777, %v779
      %v781 = vrot.slane %v678, 2
      %v782 = vrot.slane %v679, 2
      %v783 = vsel %vm765, %v781, %v782
      %v784 = vrot.slane %v680, 2
      %v785 = vsel %vm765, %v782, %v784
      %v786 = vrot.slane %v681, 2
      %v787 = vrot.slane %v682, 2
      %v788 = vsel %vm765, %v786, %v787
      %v789 = vrot.slane %v683, 2
      %v790 = vsel %vm765, %v787, %v789
      %v791 = vrot.slane %v684, 2
      %v792 = vrot.slane %v685, 2
      %v793 = vsel %vm765, %v791, %v792
      %v794 = vrot.slane %v686, 2
      %v795 = vsel %vm765, %v792, %v794
      %v796 = vrot.slane %v687, 2
      %v797 = vrot.slane %v688, 2
      %v798 = vsel %vm765, %v796, %v797
      %v799 = vrot.slane %v689, 2
      %v800 = vsel %vm765, %v797, %v799
      %v801 = vrot.slane %v690, 2
      %v802 = vrot.slane %v691, 2
      %v803 = vsel %vm765, %v801, %v802
      %v804 = vrot.slane %v692, 2
      %v805 = vsel %vm765, %v802, %v804
      %v806 = vrot.slane %v693, 2
      %v807 = vrot.slane %v694, 2
      %v808 = vsel %vm765, %v806, %v807
      %v809 = vrot.slane %v695, 2
      %v810 = vsel %vm765, %v807, %v809
      %v811 = vrot.slane %v696, 2
      %v812 = vrot.slane %v697, 2
      %v813 = vsel %vm765, %v811, %v812
      %v814 = vrot.slane %v698, 2
      %v815 = vsel %vm765, %v812, %v814
      %v816 = vrot.slane %v699, 2
      %v817 = vrot.slane %v700, 2
      %v818 = vsel %vm765, %v816, %v817
      %v819 = vrot.slane %v701, 2
      %v820 = vsel %vm765, %v817, %v819
      %v821 = vrot.slane %v702, 2
      %v822 = vrot.slane %v703, 2
      %v823 = vsel %vm765, %v821, %v822
      %v824 = vrot.slane %v704, 2
      %v825 = vsel %vm765, %v822, %v824
      %v826 = vrot.slane %v705, 2
      %v827 = vrot.slane %v706, 2
      %v828 = vsel %vm765, %v826, %v827
      %v829 = vrot.slane %v707, 2
      %v830 = vsel %vm765, %v827, %v829
      %v831 = vrot.slane %v708, 2
      %v832 = vrot.slane %v709, 2
      %v833 = vsel %vm765, %v831, %v832
      %v834 = vrot.slane %v710, 2
      %v835 = vsel %vm765, %v832, %v834
      %v836 = vrot.slane %v711, 2
      %v837 = vrot.slane %v712, 2
      %v838 = vsel %vm765, %v836, %v837
      %v839 = vrot.slane %v713, 2
      %v840 = vsel %vm765, %v837, %v839
      %v841 = vrot.slane %v714, 2
      %v842 = vrot.slane %v715, 2
      %v843 = vsel %vm765, %v841, %v842
      %v844 = vrot.slane %v716, 2
      %v845 = vsel %vm765, %v842, %v844
      %v878 = vadd.f32 %v633, %v768
      %v879 = vadd.f32 %v634, %v770
      %v880 = vadd.f32 %v635, %v773
      %v881 = vadd.f32 %v636, %v775
      %v882 = vadd.f32 %v637, %v778
      %v883 = vadd.f32 %v638, %v780
      %v884 = vadd.f32 %v639, %v783
      %v885 = vadd.f32 %v640, %v785
      %v886 = vadd.f32 %v641, %v788
      %v887 = vadd.f32 %v642, %v790
      %v888 = vadd.f32 %v643, %v793
      %v889 = vadd.f32 %v644, %v795
      %v890 = vadd.f32 %v645, %v798
      %v891 = vadd.f32 %v646, %v800
      %v892 = vadd.f32 %v647, %v803
      %v893 = vadd.f32 %v648, %v805
      %v894 = vadd.f32 %v649, %v808
      %v895 = vadd.f32 %v650, %v810
      %v896 = vadd.f32 %v651, %v813
      %v897 = vadd.f32 %v652, %v815
      %v898 = vadd.f32 %v653, %v818
      %v899 = vadd.f32 %v654, %v820
      %v900 = vadd.f32 %v655, %v823
      %v901 = vadd.f32 %v656, %v825
      %v902 = vadd.f32 %v657, %v828
      %v903 = vadd.f32 %v658, %v830
      %v904 = vadd.f32 %v659, %v833
      %v905 = vadd.f32 %v660, %v835
      %v906 = vadd.f32 %v661, %v838
      %v907 = vadd.f32 %v662, %v840
      %v908 = vadd.f32 %v663, %v843
      %v909 = vadd.f32 %v664, %v845
      %v910 = vlaneseq
      %v911 = vshrl.u32 %v910, 7
      %v912 = vsub.s32 3, %v911
      %v913 = vrot.slane %v242, %v912
      %v914 = vmul.f32 %v301, %v913
      %v915 = vmul.f32 %v302, %v913
      %v916 = vmul.f32 %v304, %v913
      %v917 = vmul.f32 %v305, %v913
      %v918 = vmul.f32 %v307, %v913
      %v919 = vmul.f32 %v308, %v913
      %v920 = vmul.f32 %v310, %v913
      %v921 = vmul.f32 %v311, %v913
      %v922 = vmul.f32 %v313, %v913
      %v923 = vmul.f32 %v314, %v913
      %v924 = vmul.f32 %v316, %v913
      %v925 = vmul.f32 %v317, %v913
      %v926 = vmul.f32 %v319, %v913
      %v927 = vmul.f32 %v320, %v913
      %v928 = vmul.f32 %v322, %v913
      %v929 = vmul.f32 %v323, %v913
      %v930 = vmul.f32 %v325, %v913
      %v931 = vmul.f32 %v326, %v913
      %v932 = vmul.f32 %v328, %v913
      %v933 = vmul.f32 %v329, %v913
      %v934 = vmul.f32 %v331, %v913
      %v935 = vmul.f32 %v332, %v913
      %v936 = vmul.f32 %v334, %v913
      %v937 = vmul.f32 %v335, %v913
      %v938 = vmul.f32 %v337, %v913
      %v939 = vmul.f32 %v338, %v913
      %v940 = vmul.f32 %v340, %v913
      %v941 = vmul.f32 %v341, %v913
      %v942 = vmul.f32 %v343, %v913
      %v943 = vmul.f32 %v344, %v913
      %v944 = vmul.f32 %v346, %v913
      %v945 = vmul.f32 %v347, %v913
      %v946 = vadd.f32 %v878, %v914
      %v947 = vadd.f32 %v879, %v915
      %v948 = vadd.f32 %v880, %v916
      %v949 = vadd.f32 %v881, %v917
      %v950 = vadd.f32 %v882, %v918
      %v951 = vadd.f32 %v883, %v919
      %v952 = vadd.f32 %v884, %v920
      %v953 = vadd.f32 %v885, %v921
      %v954 = vadd.f32 %v886, %v922
      %v955 = vadd.f32 %v887, %v923
      %v956 = vadd.f32 %v888, %v924
      %v957 = vadd.f32 %v889, %v925
      %v958 = vadd.f32 %v890, %v926
      %v959 = vadd.f32 %v891, %v927
      %v960 = vadd.f32 %v892, %v928
      %v961 = vadd.f32 %v893, %v929
      %v962 = vadd.f32 %v894, %v930
      %v963 = vadd.f32 %v895, %v931
      %v964 = vadd.f32 %v896, %v932
      %v965 = vadd.f32 %v897, %v933
      %v966 = vadd.f32 %v898, %v934
      %v967 = vadd.f32 %v899, %v935
      %v968 = vadd.f32 %v900, %v936
      %v969 = vadd.f32 %v901, %v937
      %v970 = vadd.f32 %v902, %v938
      %v971 = vadd.f32 %v903, %v939
      %v972 = vadd.f32 %v904, %v940
      %v973 = vadd.f32 %v905, %v941
      %v974 = vadd.f32 %v906, %v942
      %v975 = vadd.f32 %v907, %v943
      %v976 = vadd.f32 %v908, %v944
      %v977 = vadd.f32 %v909, %v945
      %v978 = vlaneseq
      %v979 = vshrl.u32 %v978, 7
      %v980 = vsub.s32 4, %v979
      %v981 = vrot.slane %v242, %v980
      %v982 = vmul.f32 %v301, %v981
      %v983 = vmul.f32 %v302, %v981
      %v984 = vmul.f32 %v303, %v981
      %v985 = vmul.f32 %v304, %v981
      %v986 = vmul.f32 %v305, %v981
      %v987 = vmul.f32 %v306, %v981
      %v988 = vmul.f32 %v307, %v981
      %v989 = vmul.f32 %v308, %v981
      %v990 = vmul.f32 %v309, %v981
      %v991 = vmul.f32 %v310, %v981
      %v992 = vmul.f32 %v311, %v981
      %v993 = vmul.f32 %v312, %v981
      %v994 = vmul.f32 %v313, %v981
      %v995 = vmul.f32 %v314, %v981
      %v996 = vmul.f32 %v315, %v981
      %v997 = vmul.f32 %v316, %v981
      %v998 = vmul.f32 %v317, %v981
      %v999 = vmul.f32 %v318, %v981
      %v1000 = vmul.f32 %v319, %v981
      %v1001 = vmul.f32 %v320, %v981
      %v1002 = vmul.f32 %v321, %v981
      %v1003 = vmul.f32 %v322, %v981
      %v1004 = vmul.f32 %v323, %v981
      %v1005 = vmul.f32 %v324, %v981
      %v1006 = vmul.f32 %v325, %v981
      %v1007 = vmul.f32 %v326, %v981
      %v1008 = vmul.f32 %v327, %v981
      %v1009 = vmul.f32 %v328, %v981
      %v1010 = vmul.f32 %v329, %v981
      %v1011 = vmul.f32 %v330, %v981
      %v1012 = vmul.f32 %v331, %v981
      %v1013 = vmul.f32 %v332, %v981
      %v1014 = vmul.f32 %v333, %v981
      %v1015 = vmul.f32 %v334, %v981
      %v1016 = vmul.f32 %v335, %v981
      %v1017 = vmul.f32 %v336, %v981
      %v1018 = vmul.f32 %v337, %v981
      %v1019 = vmul.f32 %v338, %v981
      %v1020 = vmul.f32 %v339, %v981
      %v1021 = vmul.f32 %v340, %v981
      %v1022 = vmul.f32 %v341, %v981
      %v1023 = vmul.f32 %v342, %v981
      %v1024 = vmul.f32 %v343, %v981
      %v1025 = vmul.f32 %v344, %v981
      %v1026 = vmul.f32 %v345, %v981
      %v1027 = vmul.f32 %v346, %v981
      %v1028 = vmul.f32 %v347, %v981
      %v1029 = vmul.f32 %v348, %v981
      %v1078 = vrot.slane %v982, 1
      %v1079 = vrot.slane %v983, 1
      %v1080 = vsel %vm520, %v1078, %v1079
      %v1081 = vrot.slane %v984, 1
      %v1082 = vsel %vm520, %v1079, %v1081
      %v1083 = vrot.slane %v985, 1
      %v1084 = vrot.slane %v986, 1
      %v1085 = vsel %vm520, %v1083, %v1084
      %v1086 = vrot.slane %v987, 1
      %v1087 = vsel %vm520, %v1084, %v1086
      %v1088 = vrot.slane %v988, 1
      %v1089 = vrot.slane %v989, 1
      %v1090 = vsel %vm520, %v1088, %v1089
      %v1091 = vrot.slane %v990, 1
      %v1092 = vsel %vm520, %v1089, %v1091
      %v1093 = vrot.slane %v991, 1
      %v1094 = vrot.slane %v992, 1
      %v1095 = vsel %vm520, %v1093, %v1094
      %v1096 = vrot.slane %v993, 1
      %v1097 = vsel %vm520, %v1094, %v1096
      %v1098 = vrot.slane %v994, 1
      %v1099 = vrot.slane %v995, 1
      %v1100 = vsel %vm520, %v1098, %v1099
      %v1101 = vrot.slane %v996, 1
      %v1102 = vsel %vm520, %v1099, %v1101
      %v1103 = vrot.slane %v997, 1
      %v1104 = vrot.slane %v998, 1
      %v1105 = vsel %vm520, %v1103, %v1104
      %v1106 = vrot.slane %v999, 1
      %v1107 = vsel %vm520, %v1104, %v1106
      %v1108 = vrot.slane %v1000, 1
      %v1109 = vrot.slane %v1001, 1
      %v1110 = vsel %vm520, %v1108, %v1109
      %v1111 = vrot.slane %v1002, 1
      %v1112 = vsel %vm520, %v1109, %v1111
      %v1113 = vrot.slane %v1003, 1
      %v1114 = vrot.slane %v1004, 1
      %v1115 = vsel %vm520, %v1113, %v1114
      %v1116 = vrot.slane %v1005, 1
      %v1117 = vsel %vm520, %v1114, %v1116
      %v1118 = vrot.slane %v1006, 1
      %v1119 = vrot.slane %v1007, 1
      %v1120 = vsel %vm520, %v1118, %v1119
      %v1121 = vrot.slane %v1008, 1
      %v1122 = vsel %vm520, %v1119, %v1121
      %v1123 = vrot.slane %v1009, 1
      %v1124 = vrot.slane %v1010, 1
      %v1125 = vsel %vm520, %v1123, %v1124
      %v1126 = vrot.slane %v1011, 1
      %v1127 = vsel %vm520, %v1124, %v1126
      %v1128 = vrot.slane %v1012, 1
      %v1129 = vrot.slane %v1013, 1
      %v1130 = vsel %vm520, %v1128, %v1129
      %v1131 = vrot.slane %v1014, 1
      %v1132 = vsel %vm520, %v1129, %v1131
      %v1133 = vrot.slane %v1015, 1
      %v1134 = vrot.slane %v1016, 1
      %v1135 = vsel %vm520, %v1133, %v1134
      %v1136 = vrot.slane %v1017, 1
      %v1137 = vsel %vm520, %v1134, %v1136
      %v1138 = vrot.slane %v1018, 1
      %v1139 = vrot.slane %v1019, 1
      %v1140 = vsel %vm520, %v1138, %v1139
      %v1141 = vrot.slane %v1020, 1
      %v1142 = vsel %vm520, %v1139, %v1141
      %v1143 = vrot.slane %v1021, 1
      %v1144 = vrot.slane %v1022, 1
      %v1145 = vsel %vm520, %v1143, %v1144
      %v1146 = vrot.slane %v1023, 1
      %v1147 = vsel %vm520, %v1144, %v1146
      %v1148 = vrot.slane %v1024, 1
      %v1149 = vrot.slane %v1025, 1
      %v1150 = vsel %vm520, %v1148, %v1149
      %v1151 = vrot.slane %v1026, 1
      %v1152 = vsel %vm520, %v1149, %v1151
      %v1153 = vrot.slane %v1027, 1
      %v1154 = vrot.slane %v1028, 1
      %v1155 = vsel %vm520, %v1153, %v1154
      %v1156 = vrot.slane %v1029, 1
      %v1157 = vsel %vm520, %v1154, %v1156
      %v1190 = vadd.f32 %v946, %v1080
      %v1191 = vadd.f32 %v947, %v1082
      %v1192 = vadd.f32 %v948, %v1085
      %v1193 = vadd.f32 %v949, %v1087
      %v1194 = vadd.f32 %v950, %v1090
      %v1195 = vadd.f32 %v951, %v1092
      %v1196 = vadd.f32 %v952, %v1095
      %v1197 = vadd.f32 %v953, %v1097
      %v1198 = vadd.f32 %v954, %v1100
      %v1199 = vadd.f32 %v955, %v1102
      %v1200 = vadd.f32 %v956, %v1105
      %v1201 = vadd.f32 %v957, %v1107
      %v1202 = vadd.f32 %v958, %v1110
      %v1203 = vadd.f32 %v959, %v1112
      %v1204 = vadd.f32 %v960, %v1115
      %v1205 = vadd.f32 %v961, %v1117
      %v1206 = vadd.f32 %v962, %v1120
      %v1207 = vadd.f32 %v963, %v1122
      %v1208 = vadd.f32 %v964, %v1125
      %v1209 = vadd.f32 %v965, %v1127
      %v1210 = vadd.f32 %v966, %v1130
      %v1211 = vadd.f32 %v967, %v1132
      %v1212 = vadd.f32 %v968, %v1135
      %v1213 = vadd.f32 %v969, %v1137
      %v1214 = vadd.f32 %v970, %v1140
      %v1215 = vadd.f32 %v971, %v1142
      %v1216 = vadd.f32 %v972, %v1145
      %v1217 = vadd.f32 %v973, %v1147
      %v1218 = vadd.f32 %v974, %v1150
      %v1219 = vadd.f32 %v975, %v1152
      %v1220 = vadd.f32 %v976, %v1155
      %v1221 = vadd.f32 %v977, %v1157
      %v1222 = vlaneseq
      %v1223 = vshrl.u32 %v1222, 7
      %v1224 = vsub.s32 5, %v1223
      %v1225 = vrot.slane %v242, %v1224
      %v1226 = vmul.f32 %v301, %v1225
      %v1227 = vmul.f32 %v302, %v1225
      %v1228 = vmul.f32 %v303, %v1225
      %v1229 = vmul.f32 %v304, %v1225
      %v1230 = vmul.f32 %v305, %v1225
      %v1231 = vmul.f32 %v306, %v1225
      %v1232 = vmul.f32 %v307, %v1225
      %v1233 = vmul.f32 %v308, %v1225
      %v1234 = vmul.f32 %v309, %v1225
      %v1235 = vmul.f32 %v310, %v1225
      %v1236 = vmul.f32 %v311, %v1225
      %v1237 = vmul.f32 %v312, %v1225
      %v1238 = vmul.f32 %v313, %v1225
      %v1239 = vmul.f32 %v314, %v1225
      %v1240 = vmul.f32 %v315, %v1225
      %v1241 = vmul.f32 %v316, %v1225
      %v1242 = vmul.f32 %v317, %v1225
      %v1243 = vmul.f32 %v318, %v1225
      %v1244 = vmul.f32 %v319, %v1225
      %v1245 = vmul.f32 %v320, %v1225
      %v1246 = vmul.f32 %v321, %v1225
      %v1247 = vmul.f32 %v322, %v1225
      %v1248 = vmul.f32 %v323, %v1225
      %v1249 = vmul.f32 %v324, %v1225
      %v1250 = vmul.f32 %v325, %v1225
      %v1251 = vmul.f32 %v326, %v1225
      %v1252 = vmul.f32 %v327, %v1225
      %v1253 = vmul.f32 %v328, %v1225
      %v1254 = vmul.f32 %v329, %v1225
      %v1255 = vmul.f32 %v330, %v1225
      %v1256 = vmul.f32 %v331, %v1225
      %v1257 = vmul.f32 %v332, %v1225
      %v1258 = vmul.f32 %v333, %v1225
      %v1259 = vmul.f32 %v334, %v1225
      %v1260 = vmul.f32 %v335, %v1225
      %v1261 = vmul.f32 %v336, %v1225
      %v1262 = vmul.f32 %v337, %v1225
      %v1263 = vmul.f32 %v338, %v1225
      %v1264 = vmul.f32 %v339, %v1225
      %v1265 = vmul.f32 %v340, %v1225
      %v1266 = vmul.f32 %v341, %v1225
      %v1267 = vmul.f32 %v342, %v1225
      %v1268 = vmul.f32 %v343, %v1225
      %v1269 = vmul.f32 %v344, %v1225
      %v1270 = vmul.f32 %v345, %v1225
      %v1271 = vmul.f32 %v346, %v1225
      %v1272 = vmul.f32 %v347, %v1225
      %v1273 = vmul.f32 %v348, %v1225
      %v1322 = vrot.slane %v1226, 2
      %v1323 = vrot.slane %v1227, 2
      %v1324 = vsel %vm765, %v1322, %v1323
      %v1325 = vrot.slane %v1228, 2
      %v1326 = vsel %vm765, %v1323, %v1325
      %v1327 = vrot.slane %v1229, 2
      %v1328 = vrot.slane %v1230, 2
      %v1329 = vsel %vm765, %v1327, %v1328
      %v1330 = vrot.slane %v1231, 2
      %v1331 = vsel %vm765, %v1328, %v1330
      %v1332 = vrot.slane %v1232, 2
      %v1333 = vrot.slane %v1233, 2
      %v1334 = vsel %vm765, %v1332, %v1333
      %v1335 = vrot.slane %v1234, 2
      %v1336 = vsel %vm765, %v1333, %v1335
      %v1337 = vrot.slane %v1235, 2
      %v1338 = vrot.slane %v1236, 2
      %v1339 = vsel %vm765, %v1337, %v1338
      %v1340 = vrot.slane %v1237, 2
      %v1341 = vsel %vm765, %v1338, %v1340
      %v1342 = vrot.slane %v1238, 2
      %v1343 = vrot.slane %v1239, 2
      %v1344 = vsel %vm765, %v1342, %v1343
      %v1345 = vrot.slane %v1240, 2
      %v1346 = vsel %vm765, %v1343, %v1345
      %v1347 = vrot.slane %v1241, 2
      %v1348 = vrot.slane %v1242, 2
      %v1349 = vsel %vm765, %v1347, %v1348
      %v1350 = vrot.slane %v1243, 2
      %v1351 = vsel %vm765, %v1348, %v1350
      %v1352 = vrot.slane %v1244, 2
      %v1353 = vrot.slane %v1245, 2
      %v1354 = vsel %vm765, %v1352, %v1353
      %v1355 = vrot.slane %v1246, 2
      %v1356 = vsel %vm765, %v1353, %v1355
      %v1357 = vrot.slane %v1247, 2
      %v1358 = vrot.slane %v1248, 2
      %v1359 = vsel %vm765, %v1357, %v1358
      %v1360 = vrot.slane %v1249, 2
      %v1361 = vsel %vm765, %v1358, %v1360
      %v1362 = vrot.slane %v1250, 2
      %v1363 = vrot.slane %v1251, 2
      %v1364 = vsel %vm765, %v1362, %v1363
      %v1365 = vrot.slane %v1252, 2
      %v1366 = vsel %vm765, %v1363, %v1365
      %v1367 = vrot.slane %v1253, 2
      %v1368 = vrot.slane %v1254, 2
      %v1369 = vsel %vm765, %v1367, %v1368
      %v1370 = vrot.slane %v1255, 2
      %v1371 = vsel %vm765, %v1368, %v1370
      %v1372 = vrot.slane %v1256, 2
      %v1373 = vrot.slane %v1257, 2
      %v1374 = vsel %vm765, %v1372, %v1373
      %v1375 = vrot.slane %v1258, 2
      %v1376 = vsel %vm765, %v1373, %v1375
      %v1377 = vrot.slane %v1259, 2
      %v1378 = vrot.slane %v1260, 2
      %v1379 = vsel %vm765, %v1377, %v1378
      %v1380 = vrot.slane %v1261, 2
      %v1381 = vsel %vm765, %v1378, %v1380
      %v1382 = vrot.slane %v1262, 2
      %v1383 = vrot.slane %v1263, 2
      %v1384 = vsel %vm765, %v1382, %v1383
      %v1385 = vrot.slane %v1264, 2
      %v1386 = vsel %vm765, %v1383, %v1385
      %v1387 = vrot.slane %v1265, 2
      %v1388 = vrot.slane %v1266, 2
      %v1389 = vsel %vm765, %v1387, %v1388
      %v1390 = vrot.slane %v1267, 2
      %v1391 = vsel %vm765, %v1388, %v1390
      %v1392 = vrot.slane %v1268, 2
      %v1393 = vrot.slane %v1269, 2
      %v1394 = vsel %vm765, %v1392, %v1393
      %v1395 = vrot.slane %v1270, 2
      %v1396 = vsel %vm765, %v1393, %v1395
      %v1397 = vrot.slane %v1271, 2
      %v1398 = vrot.slane %v1272, 2
      %v1399 = vsel %vm765, %v1397, %v1398
      %v1400 = vrot.slane %v1273, 2
      %v1401 = vsel %vm765, %v1398, %v1400
      %v1434 = vadd.f32 %v1190, %v1324
      %v1435 = vadd.f32 %v1191, %v1326
      %v1436 = vadd.f32 %v1192, %v1329
      %v1437 = vadd.f32 %v1193, %v1331
      %v1438 = vadd.f32 %v1194, %v1334
      %v1439 = vadd.f32 %v1195, %v1336
      %v1440 = vadd.f32 %v1196, %v1339
      %v1441 = vadd.f32 %v1197, %v1341
      %v1442 = vadd.f32 %v1198, %v1344
      %v1443 = vadd.f32 %v1199, %v1346
      %v1444 = vadd.f32 %v1200, %v1349
      %v1445 = vadd.f32 %v1201, %v1351
      %v1446 = vadd.f32 %v1202, %v1354
      %v1447 = vadd.f32 %v1203, %v1356
      %v1448 = vadd.f32 %v1204, %v1359
      %v1449 = vadd.f32 %v1205, %v1361
      %v1450 = vadd.f32 %v1206, %v1364
      %v1451 = vadd.f32 %v1207, %v1366
      %v1452 = vadd.f32 %v1208, %v1369
      %v1453 = vadd.f32 %v1209, %v1371
      %v1454 = vadd.f32 %v1210, %v1374
      %v1455 = vadd.f32 %v1211, %v1376
      %v1456 = vadd.f32 %v1212, %v1379
      %v1457 = vadd.f32 %v1213, %v1381
      %v1458 = vadd.f32 %v1214, %v1384
      %v1459 = vadd.f32 %v1215, %v1386
      %v1460 = vadd.f32 %v1216, %v1389
      %v1461 = vadd.f32 %v1217, %v1391
      %v1462 = vadd.f32 %v1218, %v1394
      %v1463 = vadd.f32 %v1219, %v1396
      %v1464 = vadd.f32 %v1220, %v1399
      %v1465 = vadd.f32 %v1221, %v1401
      %v1466 = vlaneseq
      %v1467 = vshrl.u32 %v1466, 7
      %v1468 = vsub.s32 6, %v1467
      %v1469 = vrot.slane %v242, %v1468
      %v1470 = vmul.f32 %v304, %v1469
      %v1471 = vmul.f32 %v305, %v1469
      %v1472 = vmul.f32 %v307, %v1469
      %v1473 = vmul.f32 %v308, %v1469
      %v1474 = vmul.f32 %v310, %v1469
      %v1475 = vmul.f32 %v311, %v1469
      %v1476 = vmul.f32 %v313, %v1469
      %v1477 = vmul.f32 %v314, %v1469
      %v1478 = vmul.f32 %v316, %v1469
      %v1479 = vmul.f32 %v317, %v1469
      %v1480 = vmul.f32 %v319, %v1469
      %v1481 = vmul.f32 %v320, %v1469
      %v1482 = vmul.f32 %v322, %v1469
      %v1483 = vmul.f32 %v323, %v1469
      %v1484 = vmul.f32 %v325, %v1469
      %v1485 = vmul.f32 %v326, %v1469
      %v1486 = vmul.f32 %v328, %v1469
      %v1487 = vmul.f32 %v329, %v1469
      %v1488 = vmul.f32 %v331, %v1469
      %v1489 = vmul.f32 %v332, %v1469
      %v1490 = vmul.f32 %v334, %v1469
      %v1491 = vmul.f32 %v335, %v1469
      %v1492 = vmul.f32 %v337, %v1469
      %v1493 = vmul.f32 %v338, %v1469
      %v1494 = vmul.f32 %v340, %v1469
      %v1495 = vmul.f32 %v341, %v1469
      %v1496 = vmul.f32 %v343, %v1469
      %v1497 = vmul.f32 %v344, %v1469
      %v1498 = vmul.f32 %v346, %v1469
      %v1499 = vmul.f32 %v347, %v1469
      %v1500 = vmul.f32 %v349, %v1469
      %v1501 = vmul.f32 %v350, %v1469
      %v1502 = vadd.f32 %v1434, %v1470
      %v1503 = vadd.f32 %v1435, %v1471
      %v1504 = vadd.f32 %v1436, %v1472
      %v1505 = vadd.f32 %v1437, %v1473
      %v1506 = vadd.f32 %v1438, %v1474
      %v1507 = vadd.f32 %v1439, %v1475
      %v1508 = vadd.f32 %v1440, %v1476
      %v1509 = vadd.f32 %v1441, %v1477
      %v1510 = vadd.f32 %v1442, %v1478
      %v1511 = vadd.f32 %v1443, %v1479
      %v1512 = vadd.f32 %v1444, %v1480
      %v1513 = vadd.f32 %v1445, %v1481
      %v1514 = vadd.f32 %v1446, %v1482
      %v1515 = vadd.f32 %v1447, %v1483
      %v1516 = vadd.f32 %v1448, %v1484
      %v1517 = vadd.f32 %v1449, %v1485
      %v1518 = vadd.f32 %v1450, %v1486
      %v1519 = vadd.f32 %v1451, %v1487
      %v1520 = vadd.f32 %v1452, %v1488
      %v1521 = vadd.f32 %v1453, %v1489
      %v1522 = vadd.f32 %v1454, %v1490
      %v1523 = vadd.f32 %v1455, %v1491
      %v1524 = vadd.f32 %v1456, %v1492
      %v1525 = vadd.f32 %v1457, %v1493
      %v1526 = vadd.f32 %v1458, %v1494
      %v1527 = vadd.f32 %v1459, %v1495
      %v1528 = vadd.f32 %v1460, %v1496
      %v1529 = vadd.f32 %v1461, %v1497
      %v1530 = vadd.f32 %v1462, %v1498
      %v1531 = vadd.f32 %v1463, %v1499
      %v1532 = vadd.f32 %v1464, %v1500
      %v1533 = vadd.f32 %v1465, %v1501
      %v1534 = vlaneseq
      %v1535 = vshrl.u32 %v1534, 7
      %v1536 = vsub.s32 7, %v1535
      %v1537 = vrot.slane %v242, %v1536
      %v1538 = vmul.f32 %v304, %v1537
      %v1539 = vmul.f32 %v305, %v1537
      %v1540 = vmul.f32 %v306, %v1537
      %v1541 = vmul.f32 %v307, %v1537
      %v1542 = vmul.f32 %v308, %v1537
      %v1543 = vmul.f32 %v309, %v1537
      %v1544 = vmul.f32 %v310, %v1537
      %v1545 = vmul.f32 %v311, %v1537
      %v1546 = vmul.f32 %v312, %v1537
      %v1547 = vmul.f32 %v313, %v1537
      %v1548 = vmul.f32 %v314, %v1537
      %v1549 = vmul.f32 %v315, %v1537
      %v1550 = vmul.f32 %v316, %v1537
      %v1551 = vmul.f32 %v317, %v1537
      %v1552 = vmul.f32 %v318, %v1537
      %v1553 = vmul.f32 %v319, %v1537
      %v1554 = vmul.f32 %v320, %v1537
      %v1555 = vmul.f32 %v321, %v1537
      %v1556 = vmul.f32 %v322, %v1537
      %v1557 = vmul.f32 %v323, %v1537
      %v1558 = vmul.f32 %v324, %v1537
      %v1559 = vmul.f32 %v325, %v1537
      %v1560 = vmul.f32 %v326, %v1537
      %v1561 = vmul.f32 %v327, %v1537
      %v1562 = vmul.f32 %v328, %v1537
      %v1563 = vmul.f32 %v329, %v1537
      %v1564 = vmul.f32 %v330, %v1537
      %v1565 = vmul.f32 %v331, %v1537
      %v1566 = vmul.f32 %v332, %v1537
      %v1567 = vmul.f32 %v333, %v1537
      %v1568 = vmul.f32 %v334, %v1537
      %v1569 = vmul.f32 %v335, %v1537
      %v1570 = vmul.f32 %v336, %v1537
      %v1571 = vmul.f32 %v337, %v1537
      %v1572 = vmul.f32 %v338, %v1537
      %v1573 = vmul.f32 %v339, %v1537
      %v1574 = vmul.f32 %v340, %v1537
      %v1575 = vmul.f32 %v341, %v1537
      %v1576 = vmul.f32 %v342, %v1537
      %v1577 = vmul.f32 %v343, %v1537
      %v1578 = vmul.f32 %v344, %v1537
      %v1579 = vmul.f32 %v345, %v1537
      %v1580 = vmul.f32 %v346, %v1537
      %v1581 = vmul.f32 %v347, %v1537
      %v1582 = vmul.f32 %v348, %v1537
      %v1583 = vmul.f32 %v349, %v1537
      %v1584 = vmul.f32 %v350, %v1537
      %v1585 = vmul.f32 %v351, %v1537
      %v1634 = vrot.slane %v1538, 1
      %v1635 = vrot.slane %v1539, 1
      %v1636 = vsel %vm520, %v1634, %v1635
      %v1637 = vrot.slane %v1540, 1
      %v1638 = vsel %vm520, %v1635, %v1637
      %v1639 = vrot.slane %v1541, 1
      %v1640 = vrot.slane %v1542, 1
      %v1641 = vsel %vm520, %v1639, %v1640
      %v1642 = vrot.slane %v1543, 1
      %v1643 = vsel %vm520, %v1640, %v1642
      %v1644 = vrot.slane %v1544, 1
      %v1645 = vrot.slane %v1545, 1
      %v1646 = vsel %vm520, %v1644, %v1645
      %v1647 = vrot.slane %v1546, 1
      %v1648 = vsel %vm520, %v1645, %v1647
      %v1649 = vrot.slane %v1547, 1
      %v1650 = vrot.slane %v1548, 1
      %v1651 = vsel %vm520, %v1649, %v1650
      %v1652 = vrot.slane %v1549, 1
      %v1653 = vsel %vm520, %v1650, %v1652
      %v1654 = vrot.slane %v1550, 1
      %v1655 = vrot.slane %v1551, 1
      %v1656 = vsel %vm520, %v1654, %v1655
      %v1657 = vrot.slane %v1552, 1
      %v1658 = vsel %vm520, %v1655, %v1657
      %v1659 = vrot.slane %v1553, 1
      %v1660 = vrot.slane %v1554, 1
      %v1661 = vsel %vm520, %v1659, %v1660
      %v1662 = vrot.slane %v1555, 1
      %v1663 = vsel %vm520, %v1660, %v1662
      %v1664 = vrot.slane %v1556, 1
      %v1665 = vrot.slane %v1557, 1
      %v1666 = vsel %vm520, %v1664, %v1665
      %v1667 = vrot.slane %v1558, 1
      %v1668 = vsel %vm520, %v1665, %v1667
      %v1669 = vrot.slane %v1559, 1
      %v1670 = vrot.slane %v1560, 1
      %v1671 = vsel %vm520, %v1669, %v1670
      %v1672 = vrot.slane %v1561, 1
      %v1673 = vsel %vm520, %v1670, %v1672
      %v1674 = vrot.slane %v1562, 1
      %v1675 = vrot.slane %v1563, 1
      %v1676 = vsel %vm520, %v1674, %v1675
      %v1677 = vrot.slane %v1564, 1
      %v1678 = vsel %vm520, %v1675, %v1677
      %v1679 = vrot.slane %v1565, 1
      %v1680 = vrot.slane %v1566, 1
      %v1681 = vsel %vm520, %v1679, %v1680
      %v1682 = vrot.slane %v1567, 1
      %v1683 = vsel %vm520, %v1680, %v1682
      %v1684 = vrot.slane %v1568, 1
      %v1685 = vrot.slane %v1569, 1
      %v1686 = vsel %vm520, %v1684, %v1685
      %v1687 = vrot.slane %v1570, 1
      %v1688 = vsel %vm520, %v1685, %v1687
      %v1689 = vrot.slane %v1571, 1
      %v1690 = vrot.slane %v1572, 1
      %v1691 = vsel %vm520, %v1689, %v1690
      %v1692 = vrot.slane %v1573, 1
      %v1693 = vsel %vm520, %v1690, %v1692
      %v1694 = vrot.slane %v1574, 1
      %v1695 = vrot.slane %v1575, 1
      %v1696 = vsel %vm520, %v1694, %v1695
      %v1697 = vrot.slane %v1576, 1
      %v1698 = vsel %vm520, %v1695, %v1697
      %v1699 = vrot.slane %v1577, 1
      %v1700 = vrot.slane %v1578, 1
      %v1701 = vsel %vm520, %v1699, %v1700
      %v1702 = vrot.slane %v1579, 1
      %v1703 = vsel %vm520, %v1700, %v1702
      %v1704 = vrot.slane %v1580, 1
      %v1705 = vrot.slane %v1581, 1
      %v1706 = vsel %vm520, %v1704, %v1705
      %v1707 = vrot.slane %v1582, 1
      %v1708 = vsel %vm520, %v1705, %v1707
      %v1709 = vrot.slane %v1583, 1
      %v1710 = vrot.slane %v1584, 1
      %v1711 = vsel %vm520, %v1709, %v1710
      %v1712 = vrot.slane %v1585, 1
      %v1713 = vsel %vm520, %v1710, %v1712
      %v1746 = vadd.f32 %v1502, %v1636
      %v1747 = vadd.f32 %v1503, %v1638
      %v1748 = vadd.f32 %v1504, %v1641
      %v1749 = vadd.f32 %v1505, %v1643
      %v1750 = vadd.f32 %v1506, %v1646
      %v1751 = vadd.f32 %v1507, %v1648
      %v1752 = vadd.f32 %v1508, %v1651
      %v1753 = vadd.f32 %v1509, %v1653
      %v1754 = vadd.f32 %v1510, %v1656
      %v1755 = vadd.f32 %v1511, %v1658
      %v1756 = vadd.f32 %v1512, %v1661
      %v1757 = vadd.f32 %v1513, %v1663
      %v1758 = vadd.f32 %v1514, %v1666
      %v1759 = vadd.f32 %v1515, %v1668
      %v1760 = vadd.f32 %v1516, %v1671
      %v1761 = vadd.f32 %v1517, %v1673
      %v1762 = vadd.f32 %v1518, %v1676
      %v1763 = vadd.f32 %v1519, %v1678
      %v1764 = vadd.f32 %v1520, %v1681
      %v1765 = vadd.f32 %v1521, %v1683
      %v1766 = vadd.f32 %v1522, %v1686
      %v1767 = vadd.f32 %v1523, %v1688
      %v1768 = vadd.f32 %v1524, %v1691
      %v1769 = vadd.f32 %v1525, %v1693
      %v1770 = vadd.f32 %v1526, %v1696
      %v1771 = vadd.f32 %v1527, %v1698
      %v1772 = vadd.f32 %v1528, %v1701
      %v1773 = vadd.f32 %v1529, %v1703
      %v1774 = vadd.f32 %v1530, %v1706
      %v1775 = vadd.f32 %v1531, %v1708
      %v1776 = vadd.f32 %v1532, %v1711
      %v1777 = vadd.f32 %v1533, %v1713
      %v1778 = vlaneseq
      %v1779 = vshrl.u32 %v1778, 7
      %v1780 = vsub.s32 0, %v1779
      %v1781 = vrot.slane %v243, %v1780
      %v1782 = vmul.f32 %v304, %v1781
      %v1783 = vmul.f32 %v305, %v1781
      %v1784 = vmul.f32 %v306, %v1781
      %v1785 = vmul.f32 %v307, %v1781
      %v1786 = vmul.f32 %v308, %v1781
      %v1787 = vmul.f32 %v309, %v1781
      %v1788 = vmul.f32 %v310, %v1781
      %v1789 = vmul.f32 %v311, %v1781
      %v1790 = vmul.f32 %v312, %v1781
      %v1791 = vmul.f32 %v313, %v1781
      %v1792 = vmul.f32 %v314, %v1781
      %v1793 = vmul.f32 %v315, %v1781
      %v1794 = vmul.f32 %v316, %v1781
      %v1795 = vmul.f32 %v317, %v1781
      %v1796 = vmul.f32 %v318, %v1781
      %v1797 = vmul.f32 %v319, %v1781
      %v1798 = vmul.f32 %v320, %v1781
      %v1799 = vmul.f32 %v321, %v1781
      %v1800 = vmul.f32 %v322, %v1781
      %v1801 = vmul.f32 %v323, %v1781
      %v1802 = vmul.f32 %v324, %v1781
      %v1803 = vmul.f32 %v325, %v1781
      %v1804 = vmul.f32 %v326, %v1781
      %v1805 = vmul.f32 %v327, %v1781
      %v1806 = vmul.f32 %v328, %v1781
      %v1807 = vmul.f32 %v329, %v1781
      %v1808 = vmul.f32 %v330, %v1781
      %v1809 = vmul.f32 %v331, %v1781
      %v1810 = vmul.f32 %v332, %v1781
      %v1811 = vmul.f32 %v333, %v1781
      %v1812 = vmul.f32 %v334, %v1781
      %v1813 = vmul.f32 %v335, %v1781
      %v1814 = vmul.f32 %v336, %v1781
      %v1815 = vmul.f32 %v337, %v1781
      %v1816 = vmul.f32 %v338, %v1781
      %v1817 = vmul.f32 %v339, %v1781
      %v1818 = vmul.f32 %v340, %v1781
      %v1819 = vmul.f32 %v341, %v1781
      %v1820 = vmul.f32 %v342, %v1781
      %v1821 = vmul.f32 %v343, %v1781
      %v1822 = vmul.f32 %v344, %v1781
      %v1823 = vmul.f32 %v345, %v1781
      %v1824 = vmul.f32 %v346, %v1781
      %v1825 = vmul.f32 %v347, %v1781
      %v1826 = vmul.f32 %v348, %v1781
      %v1827 = vmul.f32 %v349, %v1781
      %v1828 = vmul.f32 %v350, %v1781
      %v1829 = vmul.f32 %v351, %v1781
      %v1878 = vrot.slane %v1782, 2
      %v1879 = vrot.slane %v1783, 2
      %v1880 = vsel %vm765, %v1878, %v1879
      %v1881 = vrot.slane %v1784, 2
      %v1882 = vsel %vm765, %v1879, %v1881
      %v1883 = vrot.slane %v1785, 2
      %v1884 = vrot.slane %v1786, 2
      %v1885 = vsel %vm765, %v1883, %v1884
      %v1886 = vrot.slane %v1787, 2
      %v1887 = vsel %vm765, %v1884, %v1886
      %v1888 = vrot.slane %v1788, 2
      %v1889 = vrot.slane %v1789, 2
      %v1890 = vsel %vm765, %v1888, %v1889
      %v1891 = vrot.slane %v1790, 2
      %v1892 = vsel %vm765, %v1889, %v1891
      %v1893 = vrot.slane %v1791, 2
      %v1894 = vrot.slane %v1792, 2
      %v1895 = vsel %vm765, %v1893, %v1894
      %v1896 = vrot.slane %v1793, 2
      %v1897 = vsel %vm765, %v1894, %v1896
      %v1898 = vrot.slane %v1794, 2
      %v1899 = vrot.slane %v1795, 2
      %v1900 = vsel %vm765, %v1898, %v1899
      %v1901 = vrot.slane %v1796, 2
      %v1902 = vsel %vm765, %v1899, %v1901
      %v1903 = vrot.slane %v1797, 2
      %v1904 = vrot.slane %v1798, 2
      %v1905 = vsel %vm765, %v1903, %v1904
      %v1906 = vrot.slane %v1799, 2
      %v1907 = vsel %vm765, %v1904, %v1906
      %v1908 = vrot.slane %v1800, 2
      %v1909 = vrot.slane %v1801, 2
      %v1910 = vsel %vm765, %v1908, %v1909
      %v1911 = vrot.slane %v1802, 2
      %v1912 = vsel %vm765, %v1909, %v1911
      %v1913 = vrot.slane %v1803, 2
      %v1914 = vrot.slane %v1804, 2
      %v1915 = vsel %vm765, %v1913, %v1914
      %v1916 = vrot.slane %v1805, 2
      %v1917 = vsel %vm765, %v1914, %v1916
      %v1918 = vrot.slane %v1806, 2
      %v1919 = vrot.slane %v1807, 2
      %v1920 = vsel %vm765, %v1918, %v1919
      %v1921 = vrot.slane %v1808, 2
      %v1922 = vsel %vm765, %v1919, %v1921
      %v1923 = vrot.slane %v1809, 2
      %v1924 = vrot.slane %v1810, 2
      %v1925 = vsel %vm765, %v1923, %v1924
      %v1926 = vrot.slane %v1811, 2
      %v1927 = vsel %vm765, %v1924, %v1926
      %v1928 = vrot.slane %v1812, 2
      %v1929 = vrot.slane %v1813, 2
      %v1930 = vsel %vm765, %v1928, %v1929
      %v1931 = vrot.slane %v1814, 2
      %v1932 = vsel %vm765, %v1929, %v1931
      %v1933 = vrot.slane %v1815, 2
      %v1934 = vrot.slane %v1816, 2
      %v1935 = vsel %vm765, %v1933, %v1934
      %v1936 = vrot.slane %v1817, 2
      %v1937 = vsel %vm765, %v1934, %v1936
      %v1938 = vrot.slane %v1818, 2
      %v1939 = vrot.slane %v1819, 2
      %v1940 = vsel %vm765, %v1938, %v1939
      %v1941 = vrot.slane %v1820, 2
      %v1942 = vsel %vm765, %v1939, %v1941
      %v1943 = vrot.slane %v1821, 2
      %v1944 = vrot.slane %v1822, 2
      %v1945 = vsel %vm765, %v1943, %v1944
      %v1946 = vrot.slane %v1823, 2
      %v1947 = vsel %vm765, %v1944, %v1946
      %v1948 = vrot.slane %v1824, 2
      %v1949 = vrot.slane %v1825, 2
      %v1950 = vsel %vm765, %v1948, %v1949
      %v1951 = vrot.slane %v1826, 2
      %v1952 = vsel %vm765, %v1949, %v1951
      %v1953 = vrot.slane %v1827, 2
      %v1954 = vrot.slane %v1828, 2
      %v1955 = vsel %vm765, %v1953, %v1954
      %v1956 = vrot.slane %v1829, 2
      %v1957 = vsel %vm765, %v1954, %v1956
      %v1990 = vadd.f32 %v1746, %v1880
      %v1991 = vadd.f32 %v1747, %v1882
      %v1992 = vadd.f32 %v1748, %v1885
      %v1993 = vadd.f32 %v1749, %v1887
      %v1994 = vadd.f32 %v1750, %v1890
      %v1995 = vadd.f32 %v1751, %v1892
      %v1996 = vadd.f32 %v1752, %v1895
      %v1997 = vadd.f32 %v1753, %v1897
      %v1998 = vadd.f32 %v1754, %v1900
      %v1999 = vadd.f32 %v1755, %v1902
      %v2000 = vadd.f32 %v1756, %v1905
      %v2001 = vadd.f32 %v1757, %v1907
      %v2002 = vadd.f32 %v1758, %v1910
      %v2003 = vadd.f32 %v1759, %v1912
      %v2004 = vadd.f32 %v1760, %v1915
      %v2005 = vadd.f32 %v1761, %v1917
      %v2006 = vadd.f32 %v1762, %v1920
      %v2007 = vadd.f32 %v1763, %v1922
      %v2008 = vadd.f32 %v1764, %v1925
      %v2009 = vadd.f32 %v1765, %v1927
      %v2010 = vadd.f32 %v1766, %v1930
      %v2011 = vadd.f32 %v1767, %v1932
      %v2012 = vadd.f32 %v1768, %v1935
      %v2013 = vadd.f32 %v1769, %v1937
      %v2014 = vadd.f32 %v1770, %v1940
      %v2015 = vadd.f32 %v1771, %v1942
      %v2016 = vadd.f32 %v1772, %v1945
      %v2017 = vadd.f32 %v1773, %v1947
      %v2018 = vadd.f32 %v1774, %v1950
      %v2019 = vadd.f32 %v1775, %v1952
      %v2020 = vadd.f32 %v1776, %v1955
      %v2021 = vadd.f32 %v1777, %v1957
      %v2022 = vld [vmem:[%s2] sm:$0xf]
      %vm2023 = vcmask 31744
      %v2025 = vsel %vm2023, %v1990, 0
      %v2028 = vsel %vm2023, %v1991, 0
      %v2031 = vsel %vm2023, %v1992, 0
      %v2034 = vsel %vm2023, %v1993, 0
      %v2037 = vsel %vm2023, %v1994, 0
      %v2040 = vsel %vm2023, %v1995, 0
      %v2043 = vsel %vm2023, %v1996, 0
      %v2046 = vsel %vm2023, %v1997, 0
      %v2049 = vsel %vm2023, %v1998, 0
      %v2052 = vsel %vm2023, %v1999, 0
      %v2055 = vsel %vm2023, %v2000, 0
      %v2058 = vsel %vm2023, %v2001, 0
      %v2061 = vsel %vm2023, %v2002, 0
      %v2064 = vsel %vm2023, %v2003, 0
      %v2067 = vsel %vm2023, %v2004, 0
      %v2070 = vsel %vm2023, %v2005, 0
      %v2073 = vsel %vm2023, %v2006, 0
      %v2076 = vsel %vm2023, %v2007, 0
      %v2079 = vsel %vm2023, %v2008, 0
      %v2082 = vsel %vm2023, %v2009, 0
      %v2085 = vsel %vm2023, %v2010, 0
      %v2088 = vsel %vm2023, %v2011, 0
      %v2091 = vsel %vm2023, %v2012, 0
      %v2094 = vsel %vm2023, %v2013, 0
      %v2097 = vsel %vm2023, %v2014, 0
      %v2100 = vsel %vm2023, %v2015, 0
      %v2103 = vsel %vm2023, %v2016, 0
      %v2106 = vsel %vm2023, %v2017, 0
      %v2109 = vsel %vm2023, %v2018, 0
      %v2112 = vsel %vm2023, %v2019, 0
      %v2115 = vsel %vm2023, %v2020, 0
      %v2118 = vsel %vm2023, %v2021, 0
      %vm2120 = vcmask 1043456
      %v2122 = vsel %vm2120, %v2022, 0
      %2124 = vmatprep.subr.mxu0 0.0
      %2125 = vmatpush1.msra.mxu0 %v2122
      %2126 = vmatprep.subr.mxu0 0.0
      %2127 = vmatpush1.msra.mxu0 0.0
      %2128 = vmatprep.subr.mxu0 0.0
      %2129 = vmatpush1.msra.mxu0 0.0
      %2130 = vmatprep.subr.mxu0 0.0
      %2131 = vmatpush1.msra.mxu0 0.0
      %2132 = vmatprep.subr.mxu0 0.0
      %2133 = vmatpush1.msra.mxu0 0.0
      %2134 = vmatprep.subr.mxu0 0.0
      %2135 = vmatpush1.msra.mxu0 0.0
      %2136 = vmatprep.subr.mxu0 0.0
      %2137 = vmatpush1.msra.mxu0 0.0
      %2138 = vmatprep.subr.mxu0 0.0
      %2139 = vmatpush1.msra.mxu0 0.0
      %2140 = vmatprep.subr.mxu0 0.0
      %2141 = vmatpush1.msra.mxu0 0.0
      %2142 = vmatprep.subr.mxu0 0.0
      %2143 = vmatpush1.msra.mxu0 0.0
      %2144 = vmatprep.subr.mxu0 0.0
      %2145 = vmatpush1.msra.mxu0 0.0
      %2146 = vmatprep.subr.mxu0 0.0
      %2147 = vmatpush1.msra.mxu0 0.0
      %2148 = vmatprep.subr.mxu0 0.0
      %2149 = vmatpush1.msra.mxu0 0.0
      %2150 = vmatprep.subr.mxu0 0.0
      %2151 = vmatpush1.msra.mxu0 0.0
      %2152 = vmatprep.subr.mxu0 0.0
      %2153 = vmatpush1.msra.mxu0 0.0
      %2154 = vmatprep.subr.mxu0 0.0
      %2155 = vmatpush1.msra.mxu0 0.0
      %2156 = vmatprep.subr.mxu0 0.0
      %2157 = vmatpush1.msra.mxu0 0.0
      %2158 = vmatprep.subr.mxu0 0.0
      %2159 = vmatpush1.msra.mxu0 0.0
      %2160 = vmatprep.subr.mxu0 0.0
      %2161 = vmatpush1.msra.mxu0 0.0
      %2162 = vmatprep.subr.mxu0 0.0
      %2163 = vmatpush1.msra.mxu0 0.0
      %2164 = vmatprep.subr.mxu0 0.0
      %2165 = vmatpush1.msra.mxu0 0.0
      %2166 = vmatprep.subr.mxu0 0.0
      %2167 = vmatpush1.msra.mxu0 0.0
      %2168 = vmatprep.subr.mxu0 0.0
      %2169 = vmatpush1.msra.mxu0 0.0
      %2170 = vmatprep.subr.mxu0 0.0
      %2171 = vmatpush1.msra.mxu0 0.0
      %2172 = vmatprep.subr.mxu0 0.0
      %2173 = vmatpush1.msra.mxu0 0.0
      %2174 = vmatprep.subr.mxu0 0.0
      %2175 = vmatpush1.msra.mxu0 0.0
      %2176 = vmatprep.subr.mxu0 0.0
      %2177 = vmatpush1.msra.mxu0 0.0
      %2178 = vmatprep.subr.mxu0 0.0
      %2179 = vmatpush1.msra.mxu0 0.0
      %2180 = vmatprep.subr.mxu0 0.0
      %2181 = vmatpush1.msra.mxu0 0.0
      %2182 = vmatprep.subr.mxu0 0.0
      %2183 = vmatpush1.msra.mxu0 0.0
      %2184 = vmatprep.subr.mxu0 0.0
      %2185 = vmatpush1.msra.mxu0 0.0
      %2186 = vmatprep.subr.mxu0 0.0
      %2187 = vmatpush1.msra.mxu0 0.0
      %2188 = vmatprep.mubr.f32.mxu0 0.0
      %2189 = vmatmul.mubr.f32.gmra.mrb[0].mxu0 %v2025
      %v2190 = vpop.f32.mrb[0].mxu0
      %v2191 = vadd.f32 0.0, %v2190
      %v2192 = vpop.f32.mrb[0].mxu0
      %2193 = vmatprep.mubr.f32.mxu0 0.0
      %2194 = vmatmul.mubr.f32.gmra.mrb[0].mxu0 %v2028
      %v2195 = vpop.f32.mrb[0].mxu0
      %v2196 = vadd.f32 0.0, %v2195
      %v2197 = vpop.f32.mrb[0].mxu0
      %2198 = vmatprep.mubr.f32.mxu0 0.0
      %2199 = vmatmul.mubr.f32.gmra.mrb[0].mxu0 %v2031
      %v2200 = vpop.f32.mrb[0].mxu0
      %v2201 = vadd.f32 0.0, %v2200
      %v2202 = vpop.f32.mrb[0].mxu0
      %2203 = vmatprep.mubr.f32.mxu0 0.0
      %2204 = vmatmul.mubr.f32.gmra.mrb[0].mxu0 %v2034
      %v2205 = vpop.f32.mrb[0].mxu0
      %v2206 = vadd.f32 0.0, %v2205
      %v2207 = vpop.f32.mrb[0].mxu0
      %2208 = vmatprep.mubr.f32.mxu0 0.0
      %2209 = vmatmul.mubr.f32.gmra.mrb[0].mxu0 %v2037
      %v2210 = vpop.f32.mrb[0].mxu0
      %v2211 = vadd.f32 0.0, %v2210
      %v2212 = vpop.f32.mrb[0].mxu0
      %2213 = vmatprep.mubr.f32.mxu0 0.0
      %2214 = vmatmul.mubr.f32.gmra.mrb[0].mxu0 %v2040
      %v2215 = vpop.f32.mrb[0].mxu0
      %v2216 = vadd.f32 0.0, %v2215
      %v2217 = vpop.f32.mrb[0].mxu0
      %2218 = vmatprep.mubr.f32.mxu0 0.0
      %2219 = vmatmul.mubr.f32.gmra.mrb[0].mxu0 %v2043
      %v2220 = vpop.f32.mrb[0].mxu0
      %v2221 = vadd.f32 0.0, %v2220
      %v2222 = vpop.f32.mrb[0].mxu0
      %2223 = vmatprep.mubr.f32.mxu0 0.0
      %2224 = vmatmul.mubr.f32.gmra.mrb[0].mxu0 %v2046
      %v2225 = vpop.f32.mrb[0].mxu0
      %v2226 = vadd.f32 0.0, %v2225
      %v2227 = vpop.f32.mrb[0].mxu0
      %2228 = vmatprep.mubr.f32.mxu0 0.0
      %2229 = vmatmul.mubr.f32.gmra.mrb[0].mxu0 %v2049
      %v2230 = vpop.f32.mrb[0].mxu0
      %v2231 = vadd.f32 0.0, %v2230
      %v2232 = vpop.f32.mrb[0].mxu0
      %2233 = vmatprep.mubr.f32.mxu0 0.0
      %2234 = vmatmul.mubr.f32.gmra.mrb[0].mxu0 %v2052
      %v2235 = vpop.f32.mrb[0].mxu0
      %v2236 = vadd.f32 0.0, %v2235
      %v2237 = vpop.f32.mrb[0].mxu0
      %2238 = vmatprep.mubr.f32.mxu0 0.0
      %2239 = vmatmul.mubr.f32.gmra.mrb[0].mxu0 %v2055
      %v2240 = vpop.f32.mrb[0].mxu0
      %v2241 = vadd.f32 0.0, %v2240
      %v2242 = vpop.f32.mrb[0].mxu0
      %2243 = vmatprep.mubr.f32.mxu0 0.0
      %2244 = vmatmul.mubr.f32.gmra.mrb[0].mxu0 %v2058
      %v2245 = vpop.f32.mrb[0].mxu0
      %v2246 = vadd.f32 0.0, %v2245
      %v2247 = vpop.f32.mrb[0].mxu0
      %2248 = vmatprep.mubr.f32.mxu0 0.0
      %2249 = vmatmul.mubr.f32.gmra.mrb[0].mxu0 %v2061
      %v2250 = vpop.f32.mrb[0].mxu0
      %v2251 = vadd.f32 0.0, %v2250
      %v2252 = vpop.f32.mrb[0].mxu0
      %2253 = vmatprep.mubr.f32.mxu0 0.0
      %2254 = vmatmul.mubr.f32.gmra.mrb[0].mxu0 %v2064
      %v2255 = vpop.f32.mrb[0].mxu0
      %v2256 = vadd.f32 0.0, %v2255
      %v2257 = vpop.f32.mrb[0].mxu0
      %2258 = vmatprep.mubr.f32.mxu0 0.0
      %2259 = vmatmul.mubr.f32.gmra.mrb[0].mxu0 %v2067
      %v2260 = vpop.f32.mrb[0].mxu0
      %v2261 = vadd.f32 0.0, %v2260
      %v2262 = vpop.f32.mrb[0].mxu0
      %2263 = vmatprep.mubr.f32.mxu0 0.0
      %2264 = vmatmul.mubr.f32.gmra.mrb[0].mxu0 %v2070
      %v2265 = vpop.f32.mrb[0].mxu0
      %v2266 = vadd.f32 0.0, %v2265
      %v2267 = vpop.f32.mrb[0].mxu0
      %2268 = vmatprep.mubr.f32.mxu0 0.0
      %2269 = vmatmul.mubr.f32.gmra.mrb[0].mxu0 %v2073
      %v2270 = vpop.f32.mrb[0].mxu0
      %v2271 = vadd.f32 0.0, %v2270
      %v2272 = vpop.f32.mrb[0].mxu0
      %2273 = vmatprep.mubr.f32.mxu0 0.0
      %2274 = vmatmul.mubr.f32.gmra.mrb[0].mxu0 %v2076
      %v2275 = vpop.f32.mrb[0].mxu0
      %v2276 = vadd.f32 0.0, %v2275
      %v2277 = vpop.f32.mrb[0].mxu0
      %2278 = vmatprep.mubr.f32.mxu0 0.0
      %2279 = vmatmul.mubr.f32.gmra.mrb[0].mxu0 %v2079
      %v2280 = vpop.f32.mrb[0].mxu0
      %v2281 = vadd.f32 0.0, %v2280
      %v2282 = vpop.f32.mrb[0].mxu0
      %2283 = vmatprep.mubr.f32.mxu0 0.0
      %2284 = vmatmul.mubr.f32.gmra.mrb[0].mxu0 %v2082
      %v2285 = vpop.f32.mrb[0].mxu0
      %v2286 = vadd.f32 0.0, %v2285
      %v2287 = vpop.f32.mrb[0].mxu0
      %2288 = vmatprep.mubr.f32.mxu0 0.0
      %2289 = vmatmul.mubr.f32.gmra.mrb[0].mxu0 %v2085
      %v2290 = vpop.f32.mrb[0].mxu0
      %v2291 = vadd.f32 0.0, %v2290
      %v2292 = vpop.f32.mrb[0].mxu0
      %2293 = vmatprep.mubr.f32.mxu0 0.0
      %2294 = vmatmul.mubr.f32.gmra.mrb[0].mxu0 %v2088
      %v2295 = vpop.f32.mrb[0].mxu0
      %v2296 = vadd.f32 0.0, %v2295
      %v2297 = vpop.f32.mrb[0].mxu0
      %2298 = vmatprep.mubr.f32.mxu0 0.0
      %2299 = vmatmul.mubr.f32.gmra.mrb[0].mxu0 %v2091
      %v2300 = vpop.f32.mrb[0].mxu0
      %v2301 = vadd.f32 0.0, %v2300
      %v2302 = vpop.f32.mrb[0].mxu0
      %2303 = vmatprep.mubr.f32.mxu0 0.0
      %2304 = vmatmul.mubr.f32.gmra.mrb[0].mxu0 %v2094
      %v2305 = vpop.f32.mrb[0].mxu0
      %v2306 = vadd.f32 0.0, %v2305
      %v2307 = vpop.f32.mrb[0].mxu0
      %2308 = vmatprep.mubr.f32.mxu0 0.0
      %2309 = vmatmul.mubr.f32.gmra.mrb[0].mxu0 %v2097
      %v2310 = vpop.f32.mrb[0].mxu0
      %v2311 = vadd.f32 0.0, %v2310
      %v2312 = vpop.f32.mrb[0].mxu0
      %2313 = vmatprep.mubr.f32.mxu0 0.0
      %2314 = vmatmul.mubr.f32.gmra.mrb[0].mxu0 %v2100
      %v2315 = vpop.f32.mrb[0].mxu0
      %v2316 = vadd.f32 0.0, %v2315
      %v2317 = vpop.f32.mrb[0].mxu0
      %2318 = vmatprep.mubr.f32.mxu0 0.0
      %2319 = vmatmul.mubr.f32.gmra.mrb[0].mxu0 %v2103
      %v2320 = vpop.f32.mrb[0].mxu0
      %v2321 = vadd.f32 0.0, %v2320
      %v2322 = vpop.f32.mrb[0].mxu0
      %2323 = vmatprep.mubr.f32.mxu0 0.0
      %2324 = vmatmul.mubr.f32.gmra.mrb[0].mxu0 %v2106
      %v2325 = vpop.f32.mrb[0].mxu0
      %v2326 = vadd.f32 0.0, %v2325
      %v2327 = vpop.f32.mrb[0].mxu0
      %2328 = vmatprep.mubr.f32.mxu0 0.0
      %2329 = vmatmul.mubr.f32.gmra.mrb[0].mxu0 %v2109
      %v2330 = vpop.f32.mrb[0].mxu0
      %v2331 = vadd.f32 0.0, %v2330
      %v2332 = vpop.f32.mrb[0].mxu0
      %2333 = vmatprep.mubr.f32.mxu0 0.0
      %2334 = vmatmul.mubr.f32.gmra.mrb[0].mxu0 %v2112
      %v2335 = vpop.f32.mrb[0].mxu0
      %v2336 = vadd.f32 0.0, %v2335
      %v2337 = vpop.f32.mrb[0].mxu0
      %2338 = vmatprep.mubr.f32.mxu0 0.0
      %2339 = vmatmul.mubr.f32.gmra.mrb[0].mxu0 %v2115
      %v2340 = vpop.f32.mrb[0].mxu0
      %v2341 = vadd.f32 0.0, %v2340
      %v2342 = vpop.f32.mrb[0].mxu0
      %2343 = vmatprep.mubr.f32.mxu0 0.0
      %2344 = vmatmul.mubr.f32.gmra.mrb[0].mxu0 %v2118
      %v2345 = vpop.f32.mrb[0].mxu0
      %v2346 = vadd.f32 0.0, %v2345
      %v2347 = vpop.f32.mrb[0].mxu0
      %2348 = vdwg.mxu0
      %2349 = vst.msk [vmem:[%s235] sm:$0xff] %vm2023, %v2191
      %2350 = vst.msk [vmem:[%s235 + $0x8] sm:$0xff] %vm2023, %v2196
      %2351 = vst.msk [vmem:[%s235 + $0x10] sm:$0xff] %vm2023, %v2201
      %2352 = vst.msk [vmem:[%s235 + $0x18] sm:$0xff] %vm2023, %v2206
      %2353 = vst.msk [vmem:[%s235 + $0x20] sm:$0xff] %vm2023, %v2211
      %2354 = vst.msk [vmem:[%s235 + $0x28] sm:$0xff] %vm2023, %v2216
      %2355 = vst.msk [vmem:[%s235 + $0x30] sm:$0xff] %vm2023, %v2221
      %2356 = vst.msk [vmem:[%s235 + $0x38] sm:$0xff] %vm2023, %v2226
      %2357 = vst.msk [vmem:[%s235 + $0x40] sm:$0xff] %vm2023, %v2231
      %2358 = vst.msk [vmem:[%s235 + $0x48] sm:$0xff] %vm2023, %v2236
      %2359 = vst.msk [vmem:[%s235 + $0x50] sm:$0xff] %vm2023, %v2241
      %2360 = vst.msk [vmem:[%s235 + $0x58] sm:$0xff] %vm2023, %v2246
      %2361 = vst.msk [vmem:[%s235 + $0x60] sm:$0xff] %vm2023, %v2251
      %2362 = vst.msk [vmem:[%s235 + $0x68] sm:$0xff] %vm2023, %v2256
      %2363 = vst.msk [vmem:[%s235 + $0x70] sm:$0xff] %vm2023, %v2261
      %2364 = vst.msk [vmem:[%s235 + $0x78] sm:$0xff] %vm2023, %v2266
      %2365 = vst.msk [vmem:[%s235 + $0x80] sm:$0xff] %vm2023, %v2271
      %2366 = vst.msk [vmem:[%s235 + $0x88] sm:$0xff] %vm2023, %v2276
      %2367 = vst.msk [vmem:[%s235 + $0x90] sm:$0xff] %vm2023, %v2281
      %2368 = vst.msk [vmem:[%s235 + $0x98] sm:$0xff] %vm2023, %v2286
      %2369 = vst.msk [vmem:[%s235 + $0xa0] sm:$0xff] %vm2023, %v2291
      %2370 = vst.msk [vmem:[%s235 + $0xa8] sm:$0xff] %vm2023, %v2296
      %2371 = vst.msk [vmem:[%s235 + $0xb0] sm:$0xff] %vm2023, %v2301
      %2372 = vst.msk [vmem:[%s235 + $0xb8] sm:$0xff] %vm2023, %v2306
      %2373 = vst.msk [vmem:[%s235 + $0xc0] sm:$0xff] %vm2023, %v2311
      %2374 = vst.msk [vmem:[%s235 + $0xc8] sm:$0xff] %vm2023, %v2316
      %2375 = vst.msk [vmem:[%s235 + $0xd0] sm:$0xff] %vm2023, %v2321
      %2376 = vst.msk [vmem:[%s235 + $0xd8] sm:$0xff] %vm2023, %v2326
      %2377 = vst.msk [vmem:[%s235 + $0xe0] sm:$0xff] %vm2023, %v2331
      %2378 = vst.msk [vmem:[%s235 + $0xe8] sm:$0xff] %vm2023, %v2336
      %2379 = vst.msk [vmem:[%s235 + $0xf0] sm:$0xff] %vm2023, %v2341
      %2380 = vst.msk [vmem:[%s235 + $0xf8] sm:$0xff] %vm2023, %v2346
      %v2381 = vsel %vm2023, %v2191, 0.0
      %v2382 = vsel %vm2023, %v2196, 0.0
      %v2383 = vadd.f32 %v2381, %v2382
      %v2384 = vsel %vm2023, %v2201, 0.0
      %v2385 = vadd.f32 %v2383, %v2384
      %v2386 = vsel %vm2023, %v2206, 0.0
      %v2387 = vadd.f32 %v2385, %v2386
      %v2388 = vsel %vm2023, %v2211, 0.0
      %v2389 = vadd.f32 %v2387, %v2388
      %v2390 = vsel %vm2023, %v2216, 0.0
      %v2391 = vadd.f32 %v2389, %v2390
      %v2392 = vsel %vm2023, %v2221, 0.0
      %v2393 = vadd.f32 %v2391, %v2392
      %v2394 = vsel %vm2023, %v2226, 0.0
      %v2395 = vadd.f32 %v2393, %v2394
      %v2396 = vsel %vm2023, %v2231, 0.0
      %v2397 = vadd.f32 %v2395, %v2396
      %v2398 = vsel %vm2023, %v2236, 0.0
      %v2399 = vadd.f32 %v2397, %v2398
      %v2400 = vsel %vm2023, %v2241, 0.0
      %v2401 = vadd.f32 %v2399, %v2400
      %v2402 = vsel %vm2023, %v2246, 0.0
      %v2403 = vadd.f32 %v2401, %v2402
      %v2404 = vsel %vm2023, %v2251, 0.0
      %v2405 = vadd.f32 %v2403, %v2404
      %v2406 = vsel %vm2023, %v2256, 0.0
      %v2407 = vadd.f32 %v2405, %v2406
      %v2408 = vsel %vm2023, %v2261, 0.0
      %v2409 = vadd.f32 %v2407, %v2408
      %v2410 = vsel %vm2023, %v2266, 0.0
      %v2411 = vadd.f32 %v2409, %v2410
      %v2412 = vsel %vm2023, %v2271, 0.0
      %v2413 = vadd.f32 %v2411, %v2412
      %v2414 = vsel %vm2023, %v2276, 0.0
      %v2415 = vadd.f32 %v2413, %v2414
      %v2416 = vsel %vm2023, %v2281, 0.0
      %v2417 = vadd.f32 %v2415, %v2416
      %v2418 = vsel %vm2023, %v2286, 0.0
      %v2419 = vadd.f32 %v2417, %v2418
      %v2420 = vsel %vm2023, %v2291, 0.0
      %v2421 = vadd.f32 %v2419, %v2420
      %v2422 = vsel %vm2023, %v2296, 0.0
      %v2423 = vadd.f32 %v2421, %v2422
      %v2424 = vsel %vm2023, %v2301, 0.0
      %v2425 = vadd.f32 %v2423, %v2424
      %v2426 = vsel %vm2023, %v2306, 0.0
      %v2427 = vadd.f32 %v2425, %v2426
      %v2428 = vsel %vm2023, %v2311, 0.0
      %v2429 = vadd.f32 %v2427, %v2428
      %v2430 = vsel %vm2023, %v2316, 0.0
      %v2431 = vadd.f32 %v2429, %v2430
      %v2432 = vsel %vm2023, %v2321, 0.0
      %v2433 = vadd.f32 %v2431, %v2432
      %v2434 = vsel %vm2023, %v2326, 0.0
      %v2435 = vadd.f32 %v2433, %v2434
      %v2436 = vsel %vm2023, %v2331, 0.0
      %v2437 = vadd.f32 %v2435, %v2436
      %v2438 = vsel %vm2023, %v2336, 0.0
      %v2439 = vadd.f32 %v2437, %v2438
      %v2440 = vsel %vm2023, %v2341, 0.0
      %v2441 = vadd.f32 %v2439, %v2440
      %v2442 = vsel %vm2023, %v2346, 0.0
      %v2443 = vadd.f32 %v2441, %v2442
      %v2444 = vrot.slane %v2443, 4
      %v2445 = vadd.f32 %v2443, %v2444
      %v2446 = vrot.slane %v2445, 2
      %v2447 = vadd.f32 %v2445, %v2446
      %v2448 = vrot.slane %v2447, 1
      %v2449 = vadd.f32 %v2447, %v2448
      %vm2450 = vcmask 24576
      %2451 = vst.msk [vmem:[%s238] sm:$0x1] %vm2450, %v2449
      %v2452 = vmul.f32 %v2191, %v2191
      %v2453 = vmul.f32 %v2196, %v2196
      %v2454 = vmul.f32 %v2201, %v2201
      %v2455 = vmul.f32 %v2206, %v2206
      %v2456 = vmul.f32 %v2211, %v2211
      %v2457 = vmul.f32 %v2216, %v2216
      %v2458 = vmul.f32 %v2221, %v2221
      %v2459 = vmul.f32 %v2226, %v2226
      %v2460 = vmul.f32 %v2231, %v2231
      %v2461 = vmul.f32 %v2236, %v2236
      %v2462 = vmul.f32 %v2241, %v2241
      %v2463 = vmul.f32 %v2246, %v2246
      %v2464 = vmul.f32 %v2251, %v2251
      %v2465 = vmul.f32 %v2256, %v2256
      %v2466 = vmul.f32 %v2261, %v2261
      %v2467 = vmul.f32 %v2266, %v2266
      %v2468 = vmul.f32 %v2271, %v2271
      %v2469 = vmul.f32 %v2276, %v2276
      %v2470 = vmul.f32 %v2281, %v2281
      %v2471 = vmul.f32 %v2286, %v2286
      %v2472 = vmul.f32 %v2291, %v2291
      %v2473 = vmul.f32 %v2296, %v2296
      %v2474 = vmul.f32 %v2301, %v2301
      %v2475 = vmul.f32 %v2306, %v2306
      %v2476 = vmul.f32 %v2311, %v2311
      %v2477 = vmul.f32 %v2316, %v2316
      %v2478 = vmul.f32 %v2321, %v2321
      %v2479 = vmul.f32 %v2326, %v2326
      %v2480 = vmul.f32 %v2331, %v2331
      %v2481 = vmul.f32 %v2336, %v2336
      %v2482 = vmul.f32 %v2341, %v2341
      %v2483 = vmul.f32 %v2346, %v2346
      %v2484 = vsel %vm2023, %v2452, 0.0
      %v2485 = vsel %vm2023, %v2453, 0.0
      %v2486 = vadd.f32 %v2484, %v2485
      %v2487 = vsel %vm2023, %v2454, 0.0
      %v2488 = vadd.f32 %v2486, %v2487
      %v2489 = vsel %vm2023, %v2455, 0.0
      %v2490 = vadd.f32 %v2488, %v2489
      %v2491 = vsel %vm2023, %v2456, 0.0
      %v2492 = vadd.f32 %v2490, %v2491
      %v2493 = vsel %vm2023, %v2457, 0.0
      %v2494 = vadd.f32 %v2492, %v2493
      %v2495 = vsel %vm2023, %v2458, 0.0
      %v2496 = vadd.f32 %v2494, %v2495
      %v2497 = vsel %vm2023, %v2459, 0.0
      %v2498 = vadd.f32 %v2496, %v2497
      %v2499 = vsel %vm2023, %v2460, 0.0
      %v2500 = vadd.f32 %v2498, %v2499
      %v2501 = vsel %vm2023, %v2461, 0.0
      %v2502 = vadd.f32 %v2500, %v2501
      %v2503 = vsel %vm2023, %v2462, 0.0
      %v2504 = vadd.f32 %v2502, %v2503
      %v2505 = vsel %vm2023, %v2463, 0.0
      %v2506 = vadd.f32 %v2504, %v2505
      %v2507 = vsel %vm2023, %v2464, 0.0
      %v2508 = vadd.f32 %v2506, %v2507
      %v2509 = vsel %vm2023, %v2465, 0.0
      %v2510 = vadd.f32 %v2508, %v2509
      %v2511 = vsel %vm2023, %v2466, 0.0
      %v2512 = vadd.f32 %v2510, %v2511
      %v2513 = vsel %vm2023, %v2467, 0.0
      %v2514 = vadd.f32 %v2512, %v2513
      %v2515 = vsel %vm2023, %v2468, 0.0
      %v2516 = vadd.f32 %v2514, %v2515
      %v2517 = vsel %vm2023, %v2469, 0.0
      %v2518 = vadd.f32 %v2516, %v2517
      %v2519 = vsel %vm2023, %v2470, 0.0
      %v2520 = vadd.f32 %v2518, %v2519
      %v2521 = vsel %vm2023, %v2471, 0.0
      %v2522 = vadd.f32 %v2520, %v2521
      %v2523 = vsel %vm2023, %v2472, 0.0
      %v2524 = vadd.f32 %v2522, %v2523
      %v2525 = vsel %vm2023, %v2473, 0.0
      %v2526 = vadd.f32 %v2524, %v2525
      %v2527 = vsel %vm2023, %v2474, 0.0
      %v2528 = vadd.f32 %v2526, %v2527
      %v2529 = vsel %vm2023, %v2475, 0.0
      %v2530 = vadd.f32 %v2528, %v2529
      %v2531 = vsel %vm2023, %v2476, 0.0
      %v2532 = vadd.f32 %v2530, %v2531
      %v2533 = vsel %vm2023, %v2477, 0.0
      %v2534 = vadd.f32 %v2532, %v2533
      %v2535 = vsel %vm2023, %v2478, 0.0
      %v2536 = vadd.f32 %v2534, %v2535
      %v2537 = vsel %vm2023, %v2479, 0.0
      %v2538 = vadd.f32 %v2536, %v2537
      %v2539 = vsel %vm2023, %v2480, 0.0
      %v2540 = vadd.f32 %v2538, %v2539
      %v2541 = vsel %vm2023, %v2481, 0.0
      %v2542 = vadd.f32 %v2540, %v2541
      %v2543 = vsel %vm2023, %v2482, 0.0
      %v2544 = vadd.f32 %v2542, %v2543
      %v2545 = vsel %vm2023, %v2483, 0.0
      %v2546 = vadd.f32 %v2544, %v2545
      %v2547 = vrot.slane %v2546, 4
      %v2548 = vadd.f32 %v2546, %v2547
      %v2549 = vrot.slane %v2548, 2
      %v2550 = vadd.f32 %v2548, %v2549
      %v2551 = vrot.slane %v2550, 1
      %v2552 = vadd.f32 %v2550, %v2551
      %2553 = vst.msk [vmem:[%s241] sm:$0x1] %vm2450, %v2552
      %p2554 = scmp.lt.s32.totalorder %s17, 1
      %s2555 = scalar_select %p2554, %s17, 1
      %s2556 = smul.addr %s2555, 32
      %s2557 = smul.addr %s2556, 8
      %s2558 = scalar_lea.vmem %s3, %s2557
      %p2559 = scmp.lt.s32.totalorder %s17, 1
      %s2560 = scalar_select %p2559, %s17, 1
      %s2561 = scalar_lea.vmem %s4, %s2560
      %p2562 = scmp.lt.s32.totalorder %s17, 1
      %s2563 = scalar_select %p2562, %s17, 1
      %s2564 = scalar_lea.vmem %s5, %s2563
      // Predicated region
      $region33: #{sep_conv.2} parent=31 // pred_check
        %p2565 = pneg %p103
      $region34: #{sep_conv.2} parent=31 // pred_check_branch
        %2567 = sbr.rel (%p2565) target = $region36
      $region35: #{sep_conv.2} parent=31 // pred_region
        _
      $region36: #{sep_conv.2} parent=31 // pred_fallthru
        _
      // Predicated region
      $region37: #{sep_conv.2} parent=31 // pred_check
        %p2568 = pneg %p129
      $region38: #{sep_conv.2} parent=31 // pred_check_branch
        %2570 = sbr.rel (%p2568) target = $region40
      $region39: #{sep_conv.2} parent=31 // pred_region
        _
      $region40: #{sep_conv.2} parent=31 // pred_fallthru
        _
      // Predicated region
      $region41: #{sep_conv.2} parent=31 // pred_check
        %p2571 = pneg %p155
      $region42: #{sep_conv.2} parent=31 // pred_check_branch
        %2573 = sbr.rel (%p2571) target = $region44
      $region43: #{sep_conv.2} parent=31 // pred_region
        _
      $region44: #{sep_conv.2} parent=31 // pred_fallthru
        _
    $region32: #{sep_conv.2} parent=5 // pred_fallthru
      _
    %p2574 = scmp.le.s32.totalorder 2, %s12
    // Predicated region
    $region45: #{sep_conv.2} parent=5 // pred_check
      %p2575 = pneg %p2574
    $region46: #{sep_conv.2} parent=5 // pred_check_branch
      %2577 = sbr.rel (%p2575) target = $region48
    $region47: #{sep_conv.2} parent=5 // pred_region
      %s2578 = ssub.s32 %s12, 2
      // Predicated region
      $region49: #{sep_conv.2} parent=47 // pred_check
        %p2579 = pneg %p109
      $region50: #{sep_conv.2} parent=47 // pred_check_branch
        %2581 = sbr.rel (%p2579) target = $region52
      $region51: #{sep_conv.2} parent=47 // pred_region
        %p2582 = scmp.lt.s32.totalorder %s18, 1
        %s2583 = scalar_select %p2582, %s18, 1
        %s2584 = smul.addr %s2583, 32
        %s2585 = smul.addr %s2584, 8
        %s2586 = scalar_lea.vmem %s3, %s2585
      $region52: #{sep_conv.2} parent=47 // pred_fallthru
        _
      // Predicated region
      $region53: #{sep_conv.2} parent=47 // pred_check
        %p2587 = pneg %p135
      $region54: #{sep_conv.2} parent=47 // pred_check_branch
        %2589 = sbr.rel (%p2587) target = $region56
      $region55: #{sep_conv.2} parent=47 // pred_region
        %p2590 = scmp.lt.s32.totalorder %s18, 1
        %s2591 = scalar_select %p2590, %s18, 1
        %s2592 = scalar_lea.vmem %s4, %s2591
      $region56: #{sep_conv.2} parent=47 // pred_fallthru
        _
      // Predicated region
      $region57: #{sep_conv.2} parent=47 // pred_check
        %p2593 = pneg %p161
      $region58: #{sep_conv.2} parent=47 // pred_check_branch
        %2595 = sbr.rel (%p2593) target = $region60
      $region59: #{sep_conv.2} parent=47 // pred_region
        %p2596 = scmp.lt.s32.totalorder %s18, 1
        %s2597 = scalar_select %p2596, %s18, 1
        %s2598 = scalar_lea.vmem %s5, %s2597
      $region60: #{sep_conv.2} parent=47 // pred_fallthru
        _
    $region48: #{sep_conv.2} parent=5 // pred_fallthru
      _
  $region6: #{sep_conv.2} parent=0 // loop_footer
    %s16 = sadd.s32 1, %s12
  $region7: #{sep_conv.2} parent=0 // loop_footer_branch
    %11 = sbr.rel target = $region3
  $region8: #{sep_conv.2} parent=0 // loop_exit
    _

// kernel: sep_conv.3
$region0: #{sep_conv.3}
  #allocation0 [shape = 'u32[]', space=smem, size = 0x4, offset = 0x4, fixed_abs, tag = 'smem constant byte address 0x4 - core index']
  #allocation1 [shape = 'u32[144,128]{1,0:T(1,128)}', space=vmem, size = 0x12000, scoped, tag = 'internal scratch']
  #allocation2 [shape = 'f32[18,25,4]{2,1,0:T(8,128)}', space=vmem, size = 0x48000, scoped, tag = 'scratch operand']
  %s0 = inlined_call_operand.vmem [shape: f32[2,16,16,4], index: 0, kind: input, shape index: {}]
  %s1 = inlined_call_operand.vmem [shape: f32[1,4], index: 1, kind: input, shape index: {}]
  %s2 = inlined_call_operand.vmem [shape: f32[1,4], index: 2, kind: input, shape index: {}]
  %s3 = inlined_call_operand.vmem [shape: f32[9,4], index: 3, kind: input, shape index: {}]
  %s4 = inlined_call_operand.vmem [shape: f32[4,8], index: 4, kind: input, shape index: {}]
  %s5 = inlined_call_operand.vmem [shape: f32[2,16,16,8], index: 5, kind: output, shape index: {0}]
  %s6 = inlined_call_operand.vmem [shape: f32[2,1,8], index: 6, kind: output, shape index: {1}]
  %s7 = inlined_call_operand.vmem [shape: f32[2,1,8], index: 7, kind: output, shape index: {2}]
  %8 = xla_tuple %s5, %s6, %s7
  %s9 = sld [smem:[#allocation0]]
  $region69: #{sep_conv.3} parent=0
    _
  %s11 = ssub.s32 1, %s9
  %s12 = scalar_select 0, %s11, %s9
  loop: start=0, step=1, limit=4
  $region2: #{sep_conv.3} parent=0 // loop_pre_header
    _
  $region3: #{sep_conv.3} parent=0 // loop_header
    %s14 = sphi 0, %s18
    %p15 = scmp.ge.s32.totalorder %s14, 4
    %s24 = sphi 0, %s26
    %s27 = sphi 0, %s24
    %s28 = sphi 0, %s27
    %s44 = sphi 0, %s28
    %s48 = sphi 0, %s48
    %s50 = sphi 0, %s48
    %s51 = sphi 0, %s50
    %s65 = sphi 0, %s51
    %s69 = sphi 0, %s69
    %s71 = sphi 0, %s69
    %s72 = sphi 0, %s71
    %s86 = sphi 0, %s72
    %s90 = sphi 0, %s90
    %s92 = sphi 0, %s90
    %s93 = sphi 0, %s92
    %s107 = sphi 0, %s93
    %s111 = sphi 0, %s111
    %s113 = sphi 0, %s111
    %s114 = sphi 0, %s113
    %s128 = sphi 0, %s114
    %s134 = sphi 0, %s136
    %s137 = sphi 0, %s134
    %s138 = sphi 0, %s137
    %s154 = sphi 0, %s138
    %s160 = sphi 0, %s162
    %s163 = sphi 0, %s160
    %s164 = sphi 0, %s163
    %s180 = sphi 0, %s164
    %s186 = sphi 0, %s188
    %s189 = sphi 0, %s186
    %s190 = sphi 0, %s189
    %s206 = sphi 0, %s190
  $region4: #{sep_conv.3} parent=0 // loop_header_branch
    %17 = sbr.rel (%p15) target = $region8
  $region5: #{sep_conv.3} parent=0 // loop_body
    %s19 = ssub.s32 %s14, 1
    %s20 = ssub.s32 %s14, 2
    %s21 = sadd.s32 %s14, 1
    %s22 = ssub.s32 %s14, %s21
    %p23 = scmp.eq.s32.totalorder %s22, 0
    %s25 = sadd.s32 %s24, 1
    %s26 = scalar_select %p23, %s24, %s25
    %p29 = pneg %p23
    %p30 = scmp.eq.s32.totalorder %s14, 1
    %p31 = por %p29, %p30
    %p32 = scmp.ne.s32.totalorder %s24, %s27
    %p33 = scmp.eq.s32.totalorder %s14, 0
    %p34 = por %p32, %p33
    %p35 = scmp.ne.s32.totalorder %s24, %s27
    %p36 = scmp.eq.s32.totalorder %s19, 1
    %p37 = por %p35, %p36
    %p38 = scmp.ne.s32.totalorder %s27, %s28
    %p39 = scmp.eq.s32.totalorder %s19, 0
    %p40 = por %p38, %p39
    %p41 = scmp.ne.s32.totalorder %s27, %s28
    %p42 = scmp.eq.s32.totalorder %s20, 1
    %p43 = por %p41, %p42
    %p45 = scmp.ne.s32.totalorder %s28, %s44
    %p46 = scmp.eq.s32.totalorder %s20, 0
    %p47 = por %p45, %p46
    %s49 = sadd.s32 %s48, 1
    %p52 = scmp.eq.s32.totalorder %s14, 1
    %p53 = scmp.ne.s32.totalorder %s48, %s50
    %p54 = scmp.eq.s32.totalorder %s14, 0
    %p55 = por %p53, %p54
    %p56 = scmp.ne.s32.totalorder %s48, %s50
    %p57 = scmp.eq.s32.totalorder %s19, 1
    %p58 = por %p56, %p57
    %p59 = scmp.ne.s32.totalorder %s50, %s51
    %p60 = scmp.eq.s32.totalorder %s19, 0
    %p61 = por %p59, %p60
    %p62 = scmp.ne.s32.totalorder %s50, %s51
    %p63 = scmp.eq.s32.totalorder %s20, 1
    %p64 = por %p62, %p63
    %p66 = scmp.ne.s32.totalorder %s51, %s65
    %p67 = scmp.eq.s32.totalorder %s20, 0
    %p68 = por %p66, %p67
    %s70 = sadd.s32 %s69, 1
    %p73 = scmp.eq.s32.totalorder %s14, 1
    %p74 = scmp.ne.s32.totalorder %s69, %s71
    %p75 = scmp.eq.s32.totalorder %s14, 0
    %p76 = por %p74, %p75
    %p77 = scmp.ne.s32.totalorder %s69, %s71
    %p78 = scmp.eq.s32.totalorder %s19, 1
    %p79 = por %p77, %p78
    %p80 = scmp.ne.s32.totalorder %s71, %s72
    %p81 = scmp.eq.s32.totalorder %s19, 0
    %p82 = por %p80, %p81
    %p83 = scmp.ne.s32.totalorder %s71, %s72
    %p84 = scmp.eq.s32.totalorder %s20, 1
    %p85 = por %p83, %p84
    %p87 = scmp.ne.s32.totalorder %s72, %s86
    %p88 = scmp.eq.s32.totalorder %s20, 0
    %p89 = por %p87, %p88
    %s91 = sadd.s32 %s90, 1
    %p94 = scmp.eq.s32.totalorder %s14, 1
    %p95 = scmp.ne.s32.totalorder %s90, %s92
    %p96 = scmp.eq.s32.totalorder %s14, 0
    %p97 = por %p95, %p96
    %p98 = scmp.ne.s32.totalorder %s90, %s92
    %p99 = scmp.eq.s32.totalorder %s19, 1
    %p100 = por %p98, %p99
    %p101 = scmp.ne.s32.totalorder %s92, %s93
    %p102 = scmp.eq.s32.totalorder %s19, 0
    %p103 = por %p101, %p102
    %p104 = scmp.ne.s32.totalorder %s92, %s93
    %p105 = scmp.eq.s32.totalorder %s20, 1
    %p106 = por %p104, %p105
    %p108 = scmp.ne.s32.totalorder %s93, %s107
    %p109 = scmp.eq.s32.totalorder %s20, 0
    %p110 = por %p108, %p109
    %s112 = sadd.s32 %s111, 1
    %p115 = scmp.eq.s32.totalorder %s14, 1
    %p116 = scmp.ne.s32.totalorder %s111, %s113
    %p117 = scmp.eq.s32.totalorder %s14, 0
    %p118 = por %p116, %p117
    %p119 = scmp.ne.s32.totalorder %s111, %s113
    %p120 = scmp.eq.s32.totalorder %s19, 1
    %p121 = por %p119, %p120
    %p122 = scmp.ne.s32.totalorder %s113, %s114
    %p123 = scmp.eq.s32.totalorder %s19, 0
    %p124 = por %p122, %p123
    %p125 = scmp.ne.s32.totalorder %s113, %s114
    %p126 = scmp.eq.s32.totalorder %s20, 1
    %p127 = por %p125, %p126
    %p129 = scmp.ne.s32.totalorder %s114, %s128
    %p130 = scmp.eq.s32.totalorder %s20, 0
    %p131 = por %p129, %p130
    %s132 = ssub.s32 %s14, %s21
    %p133 = scmp.eq.s32.totalorder %s132, 0
    %s135 = sadd.s32 %s134, 1
    %s136 = scalar_select %p133, %s134, %s135
    %p139 = pneg %p133
    %p140 = scmp.eq.s32.totalorder %s14, 1
    %p141 = por %p139, %p140
    %p142 = scmp.ne.s32.totalorder %s134, %s137
    %p143 = scmp.eq.s32.totalorder %s14, 0
    %p144 = por %p142, %p143
    %p145 = scmp.ne.s32.totalorder %s134, %s137
    %p146 = scmp.eq.s32.totalorder %s19, 1
    %p147 = por %p145, %p146
    %p148 = scmp.ne.s32.totalorder %s137, %s138
    %p149 = scmp.eq.s32.totalorder %s19, 0
    %p150 = por %p148, %p149
    %p151 = scmp.ne.s32.totalorder %s137, %s138
    %p152 = scmp.eq.s32.totalorder %s20, 1
    %p153 = por %p151, %p152
    %p155 = scmp.ne.s32.totalorder %s138, %s154
    %p156 = scmp.eq.s32.totalorder %s20, 0
    %p157 = por %p155, %p156
    %s158 = ssub.s32 %s14, %s21
    %p159 = scmp.eq.s32.totalorder %s158, 0
    %s161 = sadd.s32 %s160, 1
    %s162 = scalar_select %p159, %s160, %s161
    %p165 = pneg %p159
    %p166 = scmp.eq.s32.totalorder %s14, 1
    %p167 = por %p165, %p166
    %p168 = scmp.ne.s32.totalorder %s160, %s163
    %p169 = scmp.eq.s32.totalorder %s14, 0
    %p170 = por %p168, %p169
    %p171 = scmp.ne.s32.totalorder %s160, %s163
    %p172 = scmp.eq.s32.totalorder %s19, 1
    %p173 = por %p171, %p172
    %p174 = scmp.ne.s32.totalorder %s163, %s164
    %p175 = scmp.eq.s32.totalorder %s19, 0
    %p176 = por %p174, %p175
    %p177 = scmp.ne.s32.totalorder %s163, %s164
    %p178 = scmp.eq.s32.totalorder %s20, 1
    %p179 = por %p177, %p178
    %p181 = scmp.ne.s32.totalorder %s164, %s180
    %p182 = scmp.eq.s32.totalorder %s20, 0
    %p183 = por %p181, %p182
    %s184 = ssub.s32 %s14, %s21
    %p185 = scmp.eq.s32.totalorder %s184, 0
    %s187 = sadd.s32 %s186, 1
    %s188 = scalar_select %p185, %s186, %s187
    %p191 = pneg %p185
    %p192 = scmp.eq.s32.totalorder %s14, 1
    %p193 = por %p191, %p192
    %p194 = scmp.ne.s32.totalorder %s186, %s189
    %p195 = scmp.eq.s32.totalorder %s14, 0
    %p196 = por %p194, %p195
    %p197 = scmp.ne.s32.totalorder %s186, %s189
    %p198 = scmp.eq.s32.totalorder %s19, 1
    %p199 = por %p197, %p198
    %p200 = scmp.ne.s32.totalorder %s189, %s190
    %p201 = scmp.eq.s32.totalorder %s19, 0
    %p202 = por %p200, %p201
    %p203 = scmp.ne.s32.totalorder %s189, %s190
    %p204 = scmp.eq.s32.totalorder %s20, 1
    %p205 = por %p203, %p204
    %p207 = scmp.ne.s32.totalorder %s190, %s206
    %p208 = scmp.eq.s32.totalorder %s20, 0
    %p209 = por %p207, %p208
    %p210 = scmp.le.s32.totalorder 1, %s14
    %p211 = scmp.lt.s32.totalorder %s14, 3
    %p212 = pnand %p210, %p211
    %p213 = pneg %p212
    // Predicated region
    $region9: #{sep_conv.3} parent=5 // pred_check
      _
    $region10: #{sep_conv.3} parent=5 // pred_check_branch
      %215 = sbr.rel (%p212) target = $region12
    $region11: #{sep_conv.3} parent=5 // pred_region
      %s216 = ssub.s32 %s14, 1
      // Predicated region
      $region13: #{sep_conv.3} parent=11 // pred_check
        %p217 = pneg %p61
      $region14: #{sep_conv.3} parent=11 // pred_check_branch
        %219 = sbr.rel (%p217) target = $region16
      $region15: #{sep_conv.3} parent=11 // pred_region
        _
      $region16: #{sep_conv.3} parent=11 // pred_fallthru
        _
      // Predicated region
      $region17: #{sep_conv.3} parent=11 // pred_check
        %p220 = pneg %p82
      $region18: #{sep_conv.3} parent=11 // pred_check_branch
        %222 = sbr.rel (%p220) target = $region20
      $region19: #{sep_conv.3} parent=11 // pred_region
        _
      $region20: #{sep_conv.3} parent=11 // pred_fallthru
        _
      // Predicated region
      $region21: #{sep_conv.3} parent=11 // pred_check
        %p223 = pneg %p103
      $region22: #{sep_conv.3} parent=11 // pred_check_branch
        %225 = sbr.rel (%p223) target = $region24
      $region23: #{sep_conv.3} parent=11 // pred_region
        _
      $region24: #{sep_conv.3} parent=11 // pred_fallthru
        _
      // Predicated region
      $region25: #{sep_conv.3} parent=11 // pred_check
        %p226 = pneg %p124
      $region26: #{sep_conv.3} parent=11 // pred_check_branch
        %228 = sbr.rel (%p226) target = $region28
      $region27: #{sep_conv.3} parent=11 // pred_region
        _
      $region28: #{sep_conv.3} parent=11 // pred_fallthru
        _
    $region12: #{sep_conv.3} parent=5 // pred_fallthru
      _
    %p229 = scmp.lt.s32.totalorder %s14, 2
    // Predicated region
    $region29: #{sep_conv.3} parent=5 // pred_check
      %p230 = pneg %p229
    $region30: #{sep_conv.3} parent=5 // pred_check_branch
      %232 = sbr.rel (%p230) target = $region32
    $region31: #{sep_conv.3} parent=5 // pred_region
      // Predicated region
      $region33: #{sep_conv.3} parent=31 // pred_check
        %p233 = pneg %p34
      $region34: #{sep_conv.3} parent=31 // pred_check_branch
        %235 = sbr.rel (%p233) target = $region36
      $region35: #{sep_conv.3} parent=31 // pred_region
        %p236 = scmp.lt.s32.totalorder %s14, 1
        %s237 = scalar_select %p236, %s14, 1
        %s238 = smul.addr %s237, 32
        %s239 = smul.addr %s238, 8
        %s240 = scalar_lea.vmem %s0, %s239
      $region36: #{sep_conv.3} parent=31 // pred_fallthru
        _
    $region32: #{sep_conv.3} parent=5 // pred_fallthru
      _
    %p241 = scmp.le.s32.totalorder 1, %s14
    %p242 = scmp.lt.s32.totalorder %s14, 3
    %p243 = pnand %p241, %p242
    %p244 = pneg %p243
    // Predicated region
    $region37: #{sep_conv.3} parent=5 // pred_check
      _
    $region38: #{sep_conv.3} parent=5 // pred_check_branch
      %246 = sbr.rel (%p243) target = $region40
    $region39: #{sep_conv.3} parent=5 // pred_region
      %s247 = ssub.s32 %s14, 1
      %p248 = scmp.lt.s32.totalorder %s19, 1
      %s249 = scalar_select %p248, %s19, 1
      %s250 = smul.addr %s249, 32
      %s251 = smul.addr %s250, 8
      %s252 = scalar_lea.vmem %s0, %s251
      %p253 = pneg %p40
      %p254 = pneg %p37
      %p255 = pneg %p61
      %p256 = pneg %p58
      %p257 = pneg %p82
      %p258 = pneg %p79
      %p259 = pneg %p103
      %p260 = pneg %p100
      %p261 = pneg %p124
      %p262 = pneg %p121
      %p263 = pneg %p150
      %p264 = pneg %p147
      %p265 = scmp.lt.s32.totalorder %s19, 1
      %s266 = scalar_select %p265, %s19, 1
      %s267 = smul.addr %s266, 32
      %s268 = smul.addr %s267, 8
      %s269 = scalar_lea.vmem %s5, %s268
      %p270 = pneg %p176
      %p271 = pneg %p173
      %p272 = scmp.lt.s32.totalorder %s19, 1
      %s273 = scalar_select %p272, %s19, 1
      %s274 = scalar_lea.vmem %s6, %s273
      %p275 = pneg %p202
      %p276 = pneg %p199
      %p277 = scmp.lt.s32.totalorder %s19, 1
      %s278 = scalar_select %p277, %s19, 1
      %s279 = scalar_lea.vmem %s7, %s278
      %p280 = scmp.lt.s32.totalorder %s19, 1
      %s281 = scalar_select %p280, %s19, 1
      %s282 = smul.addr %s281, 32
      %s283 = smul.addr %s282, 8
      %s284 = scalar_lea.vmem %s0, %s283
      %p285 = scmp.lt.s32.totalorder %s19, 1
      %s286 = scalar_select %p285, %s19, 1
      %s287 = smul.addr %s286, 32
      %s288 = smul.addr %s287, 8
      %s289 = scalar_lea.vmem %s5, %s288
      %p290 = scmp.lt.s32.totalorder %s19, 1
      %s291 = scalar_select %p290, %s19, 1
      %s292 = scalar_lea.vmem %s6, %s291
      %p293 = scmp.lt.s32.totalorder %s19, 1
      %s294 = scalar_select %p293, %s19, 1
      %s295 = scalar_lea.vmem %s7, %s294
      %vm296 = vcmask 31744
      %297 = vst.msk [vmem:[#allocation2] sm:$0xff] %vm296, 0.0
      %298 = vst.msk [vmem:[#allocation2 + $0x8] sm:$0xff] %vm296, 0.0
      %299 = vst.msk [vmem:[#allocation2 + $0x10] sm:$0xff] %vm296, 0.0
      %vm300 = vcmask 24576
      %301 = vst.msk [vmem:[#allocation2 + $0x18] sm:$0x1] %vm300, 0.0
      %s302 = scalar_lea.vmem [#allocation2], 544
      %303 = vst.msk [vmem:[%s302] sm:$0xff] %vm296, 0.0
      %304 = vst.msk [vmem:[%s302 + $0x8] sm:$0xff] %vm296, 0.0
      %305 = vst.msk [vmem:[%s302 + $0x10] sm:$0xff] %vm296, 0.0
      %306 = vst.msk [vmem:[%s302 + $0x18] sm:$0x1] %vm300, 0.0
      %s307 = scalar_lea.vmem [#allocation2], 32
      %308 = vst.msk [vmem:[%s307] sm:$0xff] %vm296, 0.0
      %309 = vst.msk [vmem:[%s307 + $0x20] sm:$0xff] %vm296, 0.0
      %310 = vst.msk [vmem:[%s307 + $0x40] sm:$0xff] %vm296, 0.0
      %311 = vst.msk [vmem:[%s307 + $0x60] sm:$0xff] %vm296, 0.0
      %312 = vst.msk [vmem:[%s307 + $0x80] sm:$0xff] %vm296, 0.0
      %313 = vst.msk [vmem:[%s307 + $0xa0] sm:$0xff] %vm296, 0.0
      %314 = vst.msk [vmem:[%s307 + $0xc0] sm:$0xff] %vm296, 0.0
      %315 = vst.msk [vmem:[%s307 + $0xe0] sm:$0xff] %vm296, 0.0
      %316 = vst.msk [vmem:[%s307 + $0x100] sm:$0xff] %vm296, 0.0
      %317 = vst.msk [vmem:[%s307 + $0x120] sm:$0xff] %vm296, 0.0
      %318 = vst.msk [vmem:[%s307 + $0x140] sm:$0xff] %vm296, 0.0
      %319 = vst.msk [vmem:[%s307 + $0x160] sm:$0xff] %vm296, 0.0
      %320 = vst.msk [vmem:[%s307 + $0x180] sm:$0xff] %vm296, 0.0
      %321 = vst.msk [vmem:[%s307 + $0x1a0] sm:$0xff] %vm296, 0.0
      %322 = vst.msk [vmem:[%s307 + $0x1c0] sm:$0xff] %vm296, 0.0
      %323 = vst.msk [vmem:[%s307 + $0x1e0] sm:$0xff] %vm296, 0.0
      %324 = vst.msk [vmem:[%s307 + $0x18] sm:$0x1] %vm300, 0.0
      %325 = vst.msk [vmem:[%s307 + $0x38] sm:$0x1] %vm300, 0.0
      %326 = vst.msk [vmem:[%s307 + $0x58] sm:$0x1] %vm300, 0.0
      %327 = vst.msk [vmem:[%s307 + $0x78] sm:$0x1] %vm300, 0.0
      %328 = vst.msk [vmem:[%s307 + $0x98] sm:$0x1] %vm300, 0.0
      %329 = vst.msk [vmem:[%s307 + $0xb8] sm:$0x1] %vm300, 0.0
      %330 = vst.msk [vmem:[%s307 + $0xd8] sm:$0x1] %vm300, 0.0
      %331 = vst.msk [vmem:[%s307 + $0xf8] sm:$0x1] %vm300, 0.0
      %332 = vst.msk [vmem:[%s307 + $0x118] sm:$0x1] %vm300, 0.0
      %333 = vst.msk [vmem:[%s307 + $0x138] sm:$0x1] %vm300, 0.0
      %334 = vst.msk [vmem:[%s307 + $0x158] sm:$0x1] %vm300, 0.0
      %335 = vst.msk [vmem:[%s307 + $0x178] sm:$0x1] %vm300, 0.0
      %336 = vst.msk [vmem:[%s307 + $0x198] sm:$0x1] %vm300, 0.0
      %337 = vst.msk [vmem:[%s307 + $0x1b8] sm:$0x1] %vm300, 0.0
      %338 = vst.msk [vmem:[%s307 + $0x1d8] sm:$0x1] %vm300, 0.0
      %339 = vst.msk [vmem:[%s307 + $0x1f8] sm:$0x1] %vm300, 0.0
      %v340 = vld [vmem:[%s284] sm:$0xff]
      %v341 = vld [vmem:[%s284 + $0x8] sm:$0xff]
      %v342 = vld [vmem:[%s284 + $0x10] sm:$0xff]
      %v343 = vld [vmem:[%s284 + $0x18] sm:$0xff]
      %v344 = vld [vmem:[%s284 + $0x20] sm:$0xff]
      %v345 = vld [vmem:[%s284 + $0x28] sm:$0xff]
      %v346 = vld [vmem:[%s284 + $0x30] sm:$0xff]
      %v347 = vld [vmem:[%s284 + $0x38] sm:$0xff]
      %v348 = vld [vmem:[%s284 + $0x40] sm:$0xff]
      %v349 = vld [vmem:[%s284 + $0x48] sm:$0xff]
      %v350 = vld [vmem:[%s284 + $0x50] sm:$0xff]
      %v351 = vld [vmem:[%s284 + $0x58] sm:$0xff]
      %v352 = vld [vmem:[%s284 + $0x60] sm:$0xff]
      %v353 = vld [vmem:[%s284 + $0x68] sm:$0xff]
      %v354 = vld [vmem:[%s284 + $0x70] sm:$0xff]
      %v355 = vld [vmem:[%s284 + $0x78] sm:$0xff]
      %v356 = vld [vmem:[%s284 + $0x80] sm:$0xff]
      %v357 = vld [vmem:[%s284 + $0x88] sm:$0xff]
      %v358 = vld [vmem:[%s284 + $0x90] sm:$0xff]
      %v359 = vld [vmem:[%s284 + $0x98] sm:$0xff]
      %v360 = vld [vmem:[%s284 + $0xa0] sm:$0xff]
      %v361 = vld [vmem:[%s284 + $0xa8] sm:$0xff]
      %v362 = vld [vmem:[%s284 + $0xb0] sm:$0xff]
      %v363 = vld [vmem:[%s284 + $0xb8] sm:$0xff]
      %v364 = vld [vmem:[%s284 + $0xc0] sm:$0xff]
      %v365 = vld [vmem:[%s284 + $0xc8] sm:$0xff]
      %v366 = vld [vmem:[%s284 + $0xd0] sm:$0xff]
      %v367 = vld [vmem:[%s284 + $0xd8] sm:$0xff]
      %v368 = vld [vmem:[%s284 + $0xe0] sm:$0xff]
      %v369 = vld [vmem:[%s284 + $0xe8] sm:$0xff]
      %v370 = vld [vmem:[%s284 + $0xf0] sm:$0xff]
      %v371 = vld [vmem:[%s284 + $0xf8] sm:$0xff]
      %v372 = vld [vmem:[%s1] sm:$0x1]
      %v374 = vlaneseq
      %v375 = vshrl.u32 %v374, 7
      %v376 = vsub.s32 0, %v375
      %v377 = vrot.slane %v372, %v376
      %v379 = vmul.f32 %v340, %v377
      %v380 = vmul.f32 %v341, %v377
      %v381 = vmul.f32 %v342, %v377
      %v382 = vmul.f32 %v343, %v377
      %v383 = vmul.f32 %v344, %v377
      %v384 = vmul.f32 %v345, %v377
      %v385 = vmul.f32 %v346, %v377
      %v386 = vmul.f32 %v347, %v377
      %v387 = vmul.f32 %v348, %v377
      %v388 = vmul.f32 %v349, %v377
      %v389 = vmul.f32 %v350, %v377
      %v390 = vmul.f32 %v351, %v377
      %v391 = vmul.f32 %v352, %v377
      %v392 = vmul.f32 %v353, %v377
      %v393 = vmul.f32 %v354, %v377
      %v394 = vmul.f32 %v355, %v377
      %v395 = vmul.f32 %v356, %v377
      %v396 = vmul.f32 %v357, %v377
      %v397 = vmul.f32 %v358, %v377
      %v398 = vmul.f32 %v359, %v377
      %v399 = vmul.f32 %v360, %v377
      %v400 = vmul.f32 %v361, %v377
      %v401 = vmul.f32 %v362, %v377
      %v402 = vmul.f32 %v363, %v377
      %v403 = vmul.f32 %v364, %v377
      %v404 = vmul.f32 %v365, %v377
      %v405 = vmul.f32 %v366, %v377
      %v406 = vmul.f32 %v367, %v377
      %v407 = vmul.f32 %v368, %v377
      %v408 = vmul.f32 %v369, %v377
      %v409 = vmul.f32 %v370, %v377
      %v410 = vmul.f32 %v371, %v377
      %v411 = vld [vmem:[%s2] sm:$0x1]
      %v413 = vlaneseq
      %v414 = vshrl.u32 %v413, 7
      %v415 = vsub.s32 0, %v414
      %v416 = vrot.slane %v411, %v415
      %v418 = vadd.f32 %v379, %v416
      %v419 = vadd.f32 %v380, %v416
      %v420 = vadd.f32 %v381, %v416
      %v421 = vadd.f32 %v382, %v416
      %v422 = vadd.f32 %v383, %v416
      %v423 = vadd.f32 %v384, %v416
      %v424 = vadd.f32 %v385, %v416
      %v425 = vadd.f32 %v386, %v416
      %v426 = vadd.f32 %v387, %v416
      %v427 = vadd.f32 %v388, %v416
      %v428 = vadd.f32 %v389, %v416
      %v429 = vadd.f32 %v390, %v416
      %v430 = vadd.f32 %v391, %v416
      %v431 = vadd.f32 %v392, %v416
      %v432 = vadd.f32 %v393, %v416
      %v433 = vadd.f32 %v394, %v416
      %v434 = vadd.f32 %v395, %v416
      %v435 = vadd.f32 %v396, %v416
      %v436 = vadd.f32 %v397, %v416
      %v437 = vadd.f32 %v398, %v416
      %v438 = vadd.f32 %v399, %v416
      %v439 = vadd.f32 %v400, %v416
      %v440 = vadd.f32 %v401, %v416
      %v441 = vadd.f32 %v402, %v416
      %v442 = vadd.f32 %v403, %v416
      %v443 = vadd.f32 %v404, %v416
      %v444 = vadd.f32 %v405, %v416
      %v445 = vadd.f32 %v406, %v416
      %v446 = vadd.f32 %v407, %v416
      %v447 = vadd.f32 %v408, %v416
      %v448 = vadd.f32 %v409, %v416
      %v449 = vadd.f32 %v410, %v416
      %v450 = vmax.f32 %v418, 0.0
      %v451 = vmax.f32 %v419, 0.0
      %v452 = vmax.f32 %v420, 0.0
      %v453 = vmax.f32 %v421, 0.0
      %v454 = vmax.f32 %v422, 0.0
      %v455 = vmax.f32 %v423, 0.0
      %v456 = vmax.f32 %v424, 0.0
      %v457 = vmax.f32 %v425, 0.0
      %v458 = vmax.f32 %v426, 0.0
      %v459 = vmax.f32 %v427, 0.0
      %v460 = vmax.f32 %v428, 0.0
      %v461 = vmax.f32 %v429, 0.0
      %v462 = vmax.f32 %v430, 0.0
      %v463 = vmax.f32 %v431, 0.0
      %v464 = vmax.f32 %v432, 0.0
      %v465 = vmax.f32 %v433, 0.0
      %v466 = vmax.f32 %v434, 0.0
      %v467 = vmax.f32 %v435, 0.0
      %v468 = vmax.f32 %v436, 0.0
      %v469 = vmax.f32 %v437, 0.0
      %v470 = vmax.f32 %v438, 0.0
      %v471 = vmax.f32 %v439, 0.0
      %v472 = vmax.f32 %v440, 0.0
      %v473 = vmax.f32 %v441, 0.0
      %v474 = vmax.f32 %v442, 0.0
      %v475 = vmax.f32 %v443, 0.0
      %v476 = vmax.f32 %v444, 0.0
      %v477 = vmax.f32 %v445, 0.0
      %v478 = vmax.f32 %v446, 0.0
      %v479 = vmax.f32 %v447, 0.0
      %v480 = vmax.f32 %v448, 0.0
      %v481 = vmax.f32 %v449, 0.0
      %482 = vst.msk [vmem:[%s307 + $0x8] sm:$0xff] %vm296, %v450
      %483 = vst.msk [vmem:[%s307 + $0x10] sm:$0xff] %vm296, %v451
      %484 = vst.msk [vmem:[%s307 + $0x28] sm:$0xff] %vm296, %v452
      %485 = vst.msk [vmem:[%s307 + $0x30] sm:$0xff] %vm296, %v453
      %486 = vst.msk [vmem:[%s307 + $0x48] sm:$0xff] %vm296, %v454
      %487 = vst.msk [vmem:[%s307 + $0x50] sm:$0xff] %vm296, %v455
      %488 = vst.msk [vmem:[%s307 + $0x68] sm:$0xff] %vm296, %v456
      %489 = vst.msk [vmem:[%s307 + $0x70] sm:$0xff] %vm296, %v457
      %490 = vst.msk [vmem:[%s307 + $0x88] sm:$0xff] %vm296, %v458
      %491 = vst.msk [vmem:[%s307 + $0x90] sm:$0xff] %vm296, %v459
      %492 = vst.msk [vmem:[%s307 + $0xa8] sm:$0xff] %vm296, %v460
      %493 = vst.msk [vmem:[%s307 + $0xb0] sm:$0xff] %vm296, %v461
      %494 = vst.msk [vmem:[%s307 + $0xc8] sm:$0xff] %vm296, %v462
      %495 = vst.msk [vmem:[%s307 + $0xd0] sm:$0xff] %vm296, %v463
      %496 = vst.msk [vmem:[%s307 + $0xe8] sm:$0xff] %vm296, %v464
      %497 = vst.msk [vmem:[%s307 + $0xf0] sm:$0xff] %vm296, %v465
      %498 = vst.msk [vmem:[%s307 + $0x108] sm:$0xff] %vm296, %v466
      %499 = vst.msk [vmem:[%s307 + $0x110] sm:$0xff] %vm296, %v467
      %500 = vst.msk [vmem:[%s307 + $0x128] sm:$0xff] %vm296, %v468
      %501 = vst.msk [vmem:[%s307 + $0x130] sm:$0xff] %vm296, %v469
      %502 = vst.msk [vmem:[%s307 + $0x148] sm:$0xff] %vm296, %v470
      %503 = vst.msk [vmem:[%s307 + $0x150] sm:$0xff] %vm296, %v471
      %504 = vst.msk [vmem:[%s307 + $0x168] sm:$0xff] %vm296, %v472
      %505 = vst.msk [vmem:[%s307 + $0x170] sm:$0xff] %vm296, %v473
      %506 = vst.msk [vmem:[%s307 + $0x188] sm:$0xff] %vm296, %v474
      %507 = vst.msk [vmem:[%s307 + $0x190] sm:$0xff] %vm296, %v475
      %508 = vst.msk [vmem:[%s307 + $0x1a8] sm:$0xff] %vm296, %v476
      %509 = vst.msk [vmem:[%s307 + $0x1b0] sm:$0xff] %vm296, %v477
      %510 = vst.msk [vmem:[%s307 + $0x1c8] sm:$0xff] %vm296, %v478
      %511 = vst.msk [vmem:[%s307 + $0x1d0] sm:$0xff] %vm296, %v479
      %512 = vst.msk [vmem:[%s307 + $0x1e8] sm:$0xff] %vm296, %v480
      %513 = vst.msk [vmem:[%s307 + $0x1f0] sm:$0xff] %vm296, %v481
      %v514 = vld [vmem:[%s3] sm:$0xff]
      %v515 = vld [vmem:[%s3 + $0x8] sm:$0x1]
      %v516 = vld [vmem:[#allocation2 + $0x7] sm:$0xff]
      %v517 = vld [vmem:[#allocation2 + $0xf] sm:$0xff]
      %v518 = vld [vmem:[#allocation2 + $0x27] sm:$0xff]
      %v519 = vld [vmem:[#allocation2 + $0x2f] sm:$0xff]
      %v520 = vld [vmem:[#allocation2 + $0x47] sm:$0xff]
      %v521 = vld [vmem:[#allocation2 + $0x4f] sm:$0xff]
      %v522 = vld [vmem:[#allocation2 + $0x67] sm:$0xff]
      %v523 = vld [vmem:[#allocation2 + $0x6f] sm:$0xff]
      %v524 = vld [vmem:[#allocation2 + $0x87] sm:$0xff]
      %v525 = vld [vmem:[#allocation2 + $0x8f] sm:$0xff]
      %v526 = vld [vmem:[#allocation2 + $0xa7] sm:$0xff]
      %v527 = vld [vmem:[#allocation2 + $0xaf] sm:$0xff]
      %v528 = vld [vmem:[#allocation2 + $0xc7] sm:$0xff]
      %v529 = vld [vmem:[#allocation2 + $0xcf] sm:$0xff]
      %v530 = vld [vmem:[#allocation2 + $0xe7] sm:$0xff]
      %v531 = vld [vmem:[#allocation2 + $0xef] sm:$0xff]
      %v532 = vld [vmem:[#allocation2 + $0x107] sm:$0xff]
      %v533 = vld [vmem:[#allocation2 + $0x10f] sm:$0xff]
      %v534 = vld [vmem:[#allocation2 + $0x127] sm:$0xff]
      %v535 = vld [vmem:[#allocation2 + $0x12f] sm:$0xff]
      %v536 = vld [vmem:[#allocation2 + $0x147] sm:$0xff]
      %v537 = vld [vmem:[#allocation2 + $0x14f] sm:$0xff]
      %v538 = vld [vmem:[#allocation2 + $0x167] sm:$0xff]
      %v539 = vld [vmem:[#allocation2 + $0x16f] sm:$0xff]
      %v540 = vld [vmem:[#allocation2 + $0x187] sm:$0xff]
      %v541 = vld [vmem:[#allocation2 + $0x18f] sm:$0xff]
      %v542 = vld [vmem:[#allocation2 + $0x1a7] sm:$0xff]
      %v543 = vld [vmem:[#allocation2 + $0x1af] sm:$0xff]
      %v544 = vld [vmem:[#allocation2 + $0x1c7] sm:$0xff]
      %v545 = vld [vmem:[#allocation2 + $0x1cf] sm:$0xff]
      %v546 = vld [vmem:[#allocation2 + $0x1e7] sm:$0xff]
      %v547 = vld [vmem:[#allocation2 + $0x1ef] sm:$0xff]
      %v548 = vlaneseq
      %v549 = vshrl.u32 %v548, 7
      %v550 = vsub.s32 0, %v549
      %v551 = vrot.slane %v514, %v550
      %v552 = vmul.f32 %v516, %v551
      %v553 = vmul.f32 %v517, %v551
      %v554 = vmul.f32 %v518, %v551
      %v555 = vmul.f32 %v519, %v551
      %v556 = vmul.f32 %v520, %v551
      %v557 = vmul.f32 %v521, %v551
      %v558 = vmul.f32 %v522, %v551
      %v559 = vmul.f32 %v523, %v551
      %v560 = vmul.f32 %v524, %v551
      %v561 = vmul.f32 %v525, %v551
      %v562 = vmul.f32 %v526, %v551
      %v563 = vmul.f32 %v527, %v551
      %v564 = vmul.f32 %v528, %v551
      %v565 = vmul.f32 %v529, %v551
      %v566 = vmul.f32 %v530, %v551
      %v567 = vmul.f32 %v531, %v551
      %v568 = vmul.f32 %v532, %v551
      %v569 = vmul.f32 %v533, %v551
      %v570 = vmul.f32 %v534, %v551
      %v571 = vmul.f32 %v535, %v551
      %v572 = vmul.f32 %v536, %v551
      %v573 = vmul.f32 %v537, %v551
      %v574 = vmul.f32 %v538, %v551
      %v575 = vmul.f32 %v539, %v551
      %v576 = vmul.f32 %v540, %v551
      %v577 = vmul.f32 %v541, %v551
      %v578 = vmul.f32 %v542, %v551
      %v579 = vmul.f32 %v543, %v551
      %v580 = vmul.f32 %v544, %v551
      %v581 = vmul.f32 %v545, %v551
      %v582 = vmul.f32 %v546, %v551
      %v583 = vmul.f32 %v547, %v551
      %v584 = vadd.f32 %v552, 0.0
      %v585 = vadd.f32 %v553, 0.0
      %v586 = vadd.f32 %v554, 0.0
      %v587 = vadd.f32 %v555, 0.0
      %v588 = vadd.f32 %v556, 0.0
      %v589 = vadd.f32 %v557, 0.0
      %v590 = vadd.f32 %v558, 0.0
      %v591 = vadd.f32 %v559, 0.0
      %v592 = vadd.f32 %v560, 0.0
      %v593 = vadd.f32 %v561, 0.0
      %v594 = vadd.f32 %v562, 0.0
      %v595 = vadd.f32 %v563, 0.0
      %v596 = vadd.f32 %v564, 0.0
      %v597 = vadd.f32 %v565, 0.0
      %v598 = vadd.f32 %v566, 0.0
      %v599 = vadd.f32 %v567, 0.0
      %v600 = vadd.f32 %v568, 0.0
      %v601 = vadd.f32 %v569, 0.0
      %v602 = vadd.f32 %v570, 0.0
      %v603 = vadd.f32 %v571, 0.0
      %v604 = vadd.f32 %v572, 0.0
      %v605 = vadd.f32 %v573, 0.0
      %v606 = vadd.f32 %v574, 0.0
      %v607 = vadd.f32 %v575, 0.0
      %v608 = vadd.f32 %v576, 0.0
      %v609 = vadd.f32 %v577, 0.0
      %v610 = vadd.f32 %v578, 0.0
      %v611 = vadd.f32 %v579, 0.0
      %v612 = vadd.f32 %v580, 0.0
      %v613 = vadd.f32 %v581, 0.0
      %v614 = vadd.f32 %v582, 0.0
      %v615 = vadd.f32 %v583, 0.0
      %v616 = vld [vmem:[#allocation2 + $0x8] sm:$0xff]
      %v617 = vld [vmem:[#allocation2 + $0x10] sm:$0xff]
      %v618 = vld [vmem:[#allocation2 + $0x28] sm:$0xff]
      %v619 = vld [vmem:[#allocation2 + $0x30] sm:$0xff]
      %v620 = vld [vmem:[#allocation2 + $0x48] sm:$0xff]
      %v621 = vld [vmem:[#allocation2 + $0x50] sm:$0xff]
      %v622 = vld [vmem:[#allocation2 + $0x68] sm:$0xff]
      %v623 = vld [vmem:[#allocation2 + $0x70] sm:$0xff]
      %v624 = vld [vmem:[#allocation2 + $0x88] sm:$0xff]
      %v625 = vld [vmem:[#allocation2 + $0x90] sm:$0xff]
      %v626 = vld [vmem:[#allocation2 + $0xa8] sm:$0xff]
      %v627 = vld [vmem:[#allocation2 + $0xb0] sm:$0xff]
      %v628 = vld [vmem:[#allocation2 + $0xc8] sm:$0xff]
      %v629 = vld [vmem:[#allocation2 + $0xd0] sm:$0xff]
      %v630 = vld [vmem:[#allocation2 + $0xe8] sm:$0xff]
      %v631 = vld [vmem:[#allocation2 + $0xf0] sm:$0xff]
      %v632 = vld [vmem:[#allocation2 + $0x108] sm:$0xff]
      %v633 = vld [vmem:[#allocation2 + $0x110] sm:$0xff]
      %v634 = vld [vmem:[#allocation2 + $0x128] sm:$0xff]
      %v635 = vld [vmem:[#allocation2 + $0x130] sm:$0xff]
      %v636 = vld [vmem:[#allocation2 + $0x148] sm:$0xff]
      %v637 = vld [vmem:[#allocation2 + $0x150] sm:$0xff]
      %v638 = vld [vmem:[#allocation2 + $0x168] sm:$0xff]
      %v639 = vld [vmem:[#allocation2 + $0x170] sm:$0xff]
      %v640 = vld [vmem:[#allocation2 + $0x188] sm:$0xff]
      %v641 = vld [vmem:[#allocation2 + $0x190] sm:$0xff]
      %v642 = vld [vmem:[#allocation2 + $0x1a8] sm:$0xff]
      %v643 = vld [vmem:[#allocation2 + $0x1b0] sm:$0xff]
      %v644 = vld [vmem:[#allocation2 + $0x1c8] sm:$0xff]
      %v645 = vld [vmem:[#allocation2 + $0x1d0] sm:$0xff]
      %v646 = vld [vmem:[#allocation2 + $0x1e8] sm:$0xff]
      %v647 = vld [vmem:[#allocation2 + $0x1f0] sm:$0xff]
      %v648 = vlaneseq
      %v649 = vshrl.u32 %v648, 7
      %v650 = vsub.s32 1, %v649
      %v651 = vrot.slane %v514, %v650
      %v652 = vmul.f32 %v616, %v651
      %v653 = vmul.f32 %v617, %v651
      %v654 = vmul.f32 %v618, %v651
      %v655 = vmul.f32 %v619, %v651
      %v656 = vmul.f32 %v620, %v651
      %v657 = vmul.f32 %v621, %v651
      %v658 = vmul.f32 %v622, %v651
      %v659 = vmul.f32 %v623, %v651
      %v660 = vmul.f32 %v624, %v651
      %v661 = vmul.f32 %v625, %v651
      %v662 = vmul.f32 %v626, %v651
      %v663 = vmul.f32 %v627, %v651
      %v664 = vmul.f32 %v628, %v651
      %v665 = vmul.f32 %v629, %v651
      %v666 = vmul.f32 %v630, %v651
      %v667 = vmul.f32 %v631, %v651
      %v668 = vmul.f32 %v632, %v651
      %v669 = vmul.f32 %v633, %v651
      %v670 = vmul.f32 %v634, %v651
      %v671 = vmul.f32 %v635, %v651
      %v672 = vmul.f32 %v636, %v651
      %v673 = vmul.f32 %v637, %v651
      %v674 = vmul.f32 %v638, %v651
      %v675 = vmul.f32 %v639, %v651
      %v676 = vmul.f32 %v640, %v651
      %v677 = vmul.f32 %v641, %v651
      %v678 = vmul.f32 %v642, %v651
      %v679 = vmul.f32 %v643, %v651
      %v680 = vmul.f32 %v644, %v651
      %v681 = vmul.f32 %v645, %v651
      %v682 = vmul.f32 %v646, %v651
      %v683 = vmul.f32 %v647, %v651
      %v684 = vadd.f32 %v584, %v652
      %v685 = vadd.f32 %v585, %v653
      %v686 = vadd.f32 %v586, %v654
      %v687 = vadd.f32 %v587, %v655
      %v688 = vadd.f32 %v588, %v656
      %v689 = vadd.f32 %v589, %v657
      %v690 = vadd.f32 %v590, %v658
      %v691 = vadd.f32 %v591, %v659
      %v692 = vadd.f32 %v592, %v660
      %v693 = vadd.f32 %v593, %v661
      %v694 = vadd.f32 %v594, %v662
      %v695 = vadd.f32 %v595, %v663
      %v696 = vadd.f32 %v596, %v664
      %v697 = vadd.f32 %v597, %v665
      %v698 = vadd.f32 %v598, %v666
      %v699 = vadd.f32 %v599, %v667
      %v700 = vadd.f32 %v600, %v668
      %v701 = vadd.f32 %v601, %v669
      %v702 = vadd.f32 %v602, %v670
      %v703 = vadd.f32 %v603, %v671
      %v704 = vadd.f32 %v604, %v672
      %v705 = vadd.f32 %v605, %v673
      %v706 = vadd.f32 %v606, %v674
      %v707 = vadd.f32 %v607, %v675
      %v708 = vadd.f32 %v608, %v676
      %v709 = vadd.f32 %v609, %v677
      %v710 = vadd.f32 %v610, %v678
      %v711 = vadd.f32 %v611, %v679
      %v712 = vadd.f32 %v612, %v680
      %v713 = vadd.f32 %v613, %v681
      %v714 = vadd.f32 %v614, %v682
      %v715 = vadd.f32 %v615, %v683
      %v716 = vld [vmem:[#allocation2 + $0x9] sm:$0xff]
      %v717 = vld [vmem:[#allocation2 + $0x11] sm:$0xff]
      %v718 = vld [vmem:[#allocation2 + $0x29] sm:$0xff]
      %v719 = vld [vmem:[#allocation2 + $0x31] sm:$0xff]
      %v720 = vld [vmem:[#allocation2 + $0x49] sm:$0xff]
      %v721 = vld [vmem:[#allocation2 + $0x51] sm:$0xff]
      %v722 = vld [vmem:[#allocation2 + $0x69] sm:$0xff]
      %v723 = vld [vmem:[#allocation2 + $0x71] sm:$0xff]
      %v724 = vld [vmem:[#allocation2 + $0x89] sm:$0xff]
      %v725 = vld [vmem:[#allocation2 + $0x91] sm:$0xff]
      %v726 = vld [vmem:[#allocation2 + $0xa9] sm:$0xff]
      %v727 = vld [vmem:[#allocation2 + $0xb1] sm:$0xff]
      %v728 = vld [vmem:[#allocation2 + $0xc9] sm:$0xff]
      %v729 = vld [vmem:[#allocation2 + $0xd1] sm:$0xff]
      %v730 = vld [vmem:[#allocation2 + $0xe9] sm:$0xff]
      %v731 = vld [vmem:[#allocation2 + $0xf1] sm:$0xff]
      %v732 = vld [vmem:[#allocation2 + $0x109] sm:$0xff]
      %v733 = vld [vmem:[#allocation2 + $0x111] sm:$0xff]
      %v734 = vld [vmem:[#allocation2 + $0x129] sm:$0xff]
      %v735 = vld [vmem:[#allocation2 + $0x131] sm:$0xff]
      %v736 = vld [vmem:[#allocation2 + $0x149] sm:$0xff]
      %v737 = vld [vmem:[#allocation2 + $0x151] sm:$0xff]
      %v738 = vld [vmem:[#allocation2 + $0x169] sm:$0xff]
      %v739 = vld [vmem:[#allocation2 + $0x171] sm:$0xff]
      %v740 = vld [vmem:[#allocation2 + $0x189] sm:$0xff]
      %v741 = vld [vmem:[#allocation2 + $0x191] sm:$0xff]
      %v742 = vld [vmem:[#allocation2 + $0x1a9] sm:$0xff]
      %v743 = vld [vmem:[#allocation2 + $0x1b1] sm:$0xff]
      %v744 = vld [vmem:[#allocation2 + $0x1c9] sm:$0xff]
      %v745 = vld [vmem:[#allocation2 + $0x1d1] sm:$0xff]
      %v746 = vld [vmem:[#allocation2 + $0x1e9] sm:$0xff]
      %v747 = vld [vmem:[#allocation2 + $0x1f1] sm:$0xff]
      %v748 = vlaneseq
      %v749 = vshrl.u32 %v748, 7
      %v750 = vsub.s32 2, %v749
      %v751 = vrot.slane %v514, %v750
      %v752 = vmul.f32 %v716, %v751
      %v753 = vmul.f32 %v717, %v751
      %v754 = vmul.f32 %v718, %v751
      %v755 = vmul.f32 %v719, %v751
      %v756 = vmul.f32 %v720, %v751
      %v757 = vmul.f32 %v721, %v751
      %v758 = vmul.f32 %v722, %v751
      %v759 = vmul.f32 %v723, %v751
      %v760 = vmul.f32 %v724, %v751
      %v761 = vmul.f32 %v725, %v751
      %v762 = vmul.f32 %v726, %v751
      %v763 = vmul.f32 %v727, %v751
      %v764 = vmul.f32 %v728, %v751
      %v765 = vmul.f32 %v729, %v751
      %v766 = vmul.f32 %v730, %v751
      %v767 = vmul.f32 %v731, %v751
      %v768 = vmul.f32 %v732, %v751
      %v769 = vmul.f32 %v733, %v751
      %v770 = vmul.f32 %v734, %v751
      %v771 = vmul.f32 %v735, %v751
      %v772 = vmul.f32 %v736, %v751
      %v773 = vmul.f32 %v737, %v751
      %v774 = vmul.f32 %v738, %v751
      %v775 = vmul.f32 %v739, %v751
      %v776 = vmul.f32 %v740, %v751
      %v777 = vmul.f32 %v741, %v751
      %v778 = vmul.f32 %v742, %v751
      %v779 = vmul.f32 %v743, %v751
      %v780 = vmul.f32 %v744, %v751
      %v781 = vmul.f32 %v745, %v751
      %v782 = vmul.f32 %v746, %v751
      %v783 = vmul.f32 %v747, %v751
      %v784 = vadd.f32 %v684, %v752
      %v785 = vadd.f32 %v685, %v753
      %v786 = vadd.f32 %v686, %v754
      %v787 = vadd.f32 %v687, %v755
      %v788 = vadd.f32 %v688, %v756
      %v789 = vadd.f32 %v689, %v757
      %v790 = vadd.f32 %v690, %v758
      %v791 = vadd.f32 %v691, %v759
      %v792 = vadd.f32 %v692, %v760
      %v793 = vadd.f32 %v693, %v761
      %v794 = vadd.f32 %v694, %v762
      %v795 = vadd.f32 %v695, %v763
      %v796 = vadd.f32 %v696, %v764
      %v797 = vadd.f32 %v697, %v765
      %v798 = vadd.f32 %v698, %v766
      %v799 = vadd.f32 %v699, %v767
      %v800 = vadd.f32 %v700, %v768
      %v801 = vadd.f32 %v701, %v769
      %v802 = vadd.f32 %v702, %v770
      %v803 = vadd.f32 %v703, %v771
      %v804 = vadd.f32 %v704, %v772
      %v805 = vadd.f32 %v705, %v773
      %v806 = vadd.f32 %v706, %v774
      %v807 = vadd.f32 %v707, %v775
      %v808 = vadd.f32 %v708, %v776
      %v809 = vadd.f32 %v709, %v777
      %v810 = vadd.f32 %v710, %v778
      %v811 = vadd.f32 %v711, %v779
      %v812 = vadd.f32 %v712, %v780
      %v813 = vadd.f32 %v713, %v781
      %v814 = vadd.f32 %v714, %v782
      %v815 = vadd.f32 %v715, %v783
      %v816 = vld [vmem:[%s307 + $0x7] sm:$0xff]
      %v817 = vld [vmem:[%s307 + $0xf] sm:$0xff]
      %v818 = vld [vmem:[%s307 + $0x27] sm:$0xff]
      %v819 = vld [vmem:[%s307 + $0x2f] sm:$0xff]
      %v820 = vld [vmem:[%s307 + $0x47] sm:$0xff]
      %v821 = vld [vmem:[%s307 + $0x4f] sm:$0xff]
      %v822 = vld [vmem:[%s307 + $0x67] sm:$0xff]
      %v823 = vld [vmem:[%s307 + $0x6f] sm:$0xff]
      %v824 = vld [vmem:[%s307 + $0x87] sm:$0xff]
      %v825 = vld [vmem:[%s307 + $0x8f] sm:$0xff]
      %v826 = vld [vmem:[%s307 + $0xa7] sm:$0xff]
      %v827 = vld [vmem:[%s307 + $0xaf] sm:$0xff]
      %v828 = vld [vmem:[%s307 + $0xc7] sm:$0xff]
      %v829 = vld [vmem:[%s307 + $0xcf] sm:$0xff]
      %v830 = vld [vmem:[%s307 + $0xe7] sm:$0xff]
      %v831 = vld [vmem:[%s307 + $0xef] sm:$0xff]
      %v832 = vld [vmem:[%s307 + $0x107] sm:$0xff]
      %v833 = vld [vmem:[%s307 + $0x10f] sm:$0xff]
      %v834 = vld [vmem:[%s307 + $0x127] sm:$0xff]
      %v835 = vld [vmem:[%s307 + $0x12f] sm:$0xff]
      %v836 = vld [vmem:[%s307 + $0x147] sm:$0xff]
      %v837 = vld [vmem:[%s307 + $0x14f] sm:$0xff]
      %v838 = vld [vmem:[%s307 + $0x167] sm:$0xff]
      %v839 = vld [vmem:[%s307 + $0x16f] sm:$0xff]
      %v840 = vld [vmem:[%s307 + $0x187] sm:$0xff]
      %v841 = vld [vmem:[%s307 + $0x18f] sm:$0xff]
      %v842 = vld [vmem:[%s307 + $0x1a7] sm:$0xff]
      %v843 = vld [vmem:[%s307 + $0x1af] sm:$0xff]
      %v844 = vld [vmem:[%s307 + $0x1c7] sm:$0xff]
      %v845 = vld [vmem:[%s307 + $0x1cf] sm:$0xff]
      %v846 = vld [vmem:[%s307 + $0x1e7] sm:$0xff]
      %v847 = vld [vmem:[%s307 + $0x1ef] sm:$0xff]
      %v848 = vlaneseq
      %v849 = vshrl.u32 %v848, 7
      %v850 = vsub.s32 3, %v849
      %v851 = vrot.slane %v514, %v850
      %v852 = vmul.f32 %v816, %v851
      %v853 = vmul.f32 %v817, %v851
      %v854 = vmul.f32 %v818, %v851
      %v855 = vmul.f32 %v819, %v851
      %v856 = vmul.f32 %v820, %v851
      %v857 = vmul.f32 %v821, %v851
      %v858 = vmul.f32 %v822, %v851
      %v859 = vmul.f32 %v823, %v851
      %v860 = vmul.f32 %v824, %v851
      %v861 = vmul.f32 %v825, %v851
      %v862 = vmul.f32 %v826, %v851
      %v863 = vmul.f32 %v827, %v851
      %v864 = vmul.f32 %v828, %v851
      %v865 = vmul.f32 %v829, %v851
      %v866 = vmul.f32 %v830, %v851
      %v867 = vmul.f32 %v831, %v851
      %v868 = vmul.f32 %v832, %v851
      %v869 = vmul.f32 %v833, %v851
      %v870 = vmul.f32 %v834, %v851
      %v871 = vmul.f32 %v835, %v851
      %v872 = vmul.f32 %v836, %v851
      %v873 = vmul.f32 %v837, %v851
      %v874 = vmul.f32 %v838, %v851
      %v875 = vmul.f32 %v839, %v851
      %v876 = vmul.f32 %v840, %v851
      %v877 = vmul.f32 %v841, %v851
      %v878 = vmul.f32 %v842, %v851
      %v879 = vmul.f32 %v843, %v851
      %v880 = vmul.f32 %v844, %v851
      %v881 = vmul.f32 %v845, %v851
      %v882 = vmul.f32 %v846, %v851
      %v883 = vmul.f32 %v847, %v851
      %v884 = vadd.f32 %v784, %v852
      %v885 = vadd.f32 %v785, %v853
      %v886 = vadd.f32 %v786, %v854
      %v887 = vadd.f32 %v787, %v855
      %v888 = vadd.f32 %v788, %v856
      %v889 = vadd.f32 %v789, %v857
      %v890 = vadd.f32 %v790, %v858
      %v891 = vadd.f32 %v791, %v859
      %v892 = vadd.f32 %v792, %v860
      %v893 = vadd.f32 %v793, %v861
      %v894 = vadd.f32 %v794, %v862
      %v895 = vadd.f32 %v795, %v863
      %v896 = vadd.f32 %v796, %v864
      %v897 = vadd.f32 %v797, %v865
      %v898 = vadd.f32 %v798, %v866
      %v899 = vadd.f32 %v799, %v867
      %v900 = vadd.f32 %v800, %v868
      %v901 = vadd.f32 %v801, %v869
      %v902 = vadd.f32 %v802, %v870
      %v903 = vadd.f32 %v803, %v871
      %v904 = vadd.f32 %v804, %v872
      %v905 = vadd.f32 %v805, %v873
      %v906 = vadd.f32 %v806, %v874
      %v907 = vadd.f32 %v807, %v875
      %v908 = vadd.f32 %v808, %v876
      %v909 = vadd.f32 %v809, %v877
      %v910 = vadd.f32 %v810, %v878
      %v911 = vadd.f32 %v811, %v879
      %v912 = vadd.f32 %v812, %v880
      %v913 = vadd.f32 %v813, %v881
      %v914 = vadd.f32 %v814, %v882
      %v915 = vadd.f32 %v815, %v883
      %v916 = vld [vmem:[%s307 + $0x8] sm:$0xff]
      %v917 = vld [vmem:[%s307 + $0x10] sm:$0xff]
      %v918 = vld [vmem:[%s307 + $0x28] sm:$0xff]
      %v919 = vld [vmem:[%s307 + $0x30] sm:$0xff]
      %v920 = vld [vmem:[%s307 + $0x48] sm:$0xff]
      %v921 = vld [vmem:[%s307 + $0x50] sm:$0xff]
      %v922 = vld [vmem:[%s307 + $0x68] sm:$0xff]
      %v923 = vld [vmem:[%s307 + $0x70] sm:$0xff]
      %v924 = vld [vmem:[%s307 + $0x88] sm:$0xff]
      %v925 = vld [vmem:[%s307 + $0x90] sm:$0xff]
      %v926 = vld [vmem:[%s307 + $0xa8] sm:$0xff]
      %v927 = vld [vmem:[%s307 + $0xb0] sm:$0xff]
      %v928 = vld [vmem:[%s307 + $0xc8] sm:$0xff]
      %v929 = vld [vmem:[%s307 + $0xd0] sm:$0xff]
      %v930 = vld [vmem:[%s307 + $0xe8] sm:$0xff]
      %v931 = vld [vmem:[%s307 + $0xf0] sm:$0xff]
      %v932 = vld [vmem:[%s307 + $0x108] sm:$0xff]
      %v933 = vld [vmem:[%s307 + $0x110] sm:$0xff]
      %v934 = vld [vmem:[%s307 + $0x128] sm:$0xff]
      %v935 = vld [vmem:[%s307 + $0x130] sm:$0xff]
      %v936 = vld [vmem:[%s307 + $0x148] sm:$0xff]
      %v937 = vld [vmem:[%s307 + $0x150] sm:$0xff]
      %v938 = vld [vmem:[%s307 + $0x168] sm:$0xff]
      %v939 = vld [vmem:[%s307 + $0x170] sm:$0xff]
      %v940 = vld [vmem:[%s307 + $0x188] sm:$0xff]
      %v941 = vld [vmem:[%s307 + $0x190] sm:$0xff]
      %v942 = vld [vmem:[%s307 + $0x1a8] sm:$0xff]
      %v943 = vld [vmem:[%s307 + $0x1b0] sm:$0xff]
      %v944 = vld [vmem:[%s307 + $0x1c8] sm:$0xff]
      %v945 = vld [vmem:[%s307 + $0x1d0] sm:$0xff]
      %v946 = vld [vmem:[%s307 + $0x1e8] sm:$0xff]
      %v947 = vld [vmem:[%s307 + $0x1f0] sm:$0xff]
      %v948 = vlaneseq
      %v949 = vshrl.u32 %v948, 7
      %v950 = vsub.s32 4, %v949
      %v951 = vrot.slane %v514, %v950
      %v952 = vmul.f32 %v916, %v951
      %v953 = vmul.f32 %v917, %v951
      %v954 = vmul.f32 %v918, %v951
      %v955 = vmul.f32 %v919, %v951
      %v956 = vmul.f32 %v920, %v951
      %v957 = vmul.f32 %v921, %v951
      %v958 = vmul.f32 %v922, %v951
      %v959 = vmul.f32 %v923, %v951
      %v960 = vmul.f32 %v924, %v951
      %v961 = vmul.f32 %v925, %v951
      %v962 = vmul.f32 %v926, %v951
      %v963 = vmul.f32 %v927, %v951
      %v964 = vmul.f32 %v928, %v951
      %v965 = vmul.f32 %v929, %v951
      %v966 = vmul.f32 %v930, %v951
      %v967 = vmul.f32 %v931, %v951
      %v968 = vmul.f32 %v932, %v951
      %v969 = vmul.f32 %v933, %v951
      %v970 = vmul.f32 %v934, %v951
      %v971 = vmul.f32 %v935, %v951
      %v972 = vmul.f32 %v936, %v951
      %v973 = vmul.f32 %v937, %v951
      %v974 = vmul.f32 %v938, %v951
      %v975 = vmul.f32 %v939, %v951
      %v976 = vmul.f32 %v940, %v951
      %v977 = vmul.f32 %v941, %v951
      %v978 = vmul.f32 %v942, %v951
      %v979 = vmul.f32 %v943, %v951
      %v980 = vmul.f32 %v944, %v951
      %v981 = vmul.f32 %v945, %v951
      %v982 = vmul.f32 %v946, %v951
      %v983 = vmul.f32 %v947, %v951
      %v984 = vadd.f32 %v884, %v952
      %v985 = vadd.f32 %v885, %v953
      %v986 = vadd.f32 %v886, %v954
      %v987 = vadd.f32 %v887, %v955
      %v988 = vadd.f32 %v888, %v956
      %v989 = vadd.f32 %v889, %v957
      %v990 = vadd.f32 %v890, %v958
      %v991 = vadd.f32 %v891, %v959
      %v992 = vadd.f32 %v892, %v960
      %v993 = vadd.f32 %v893, %v961
      %v994 = vadd.f32 %v894, %v962
      %v995 = vadd.f32 %v895, %v963
      %v996 = vadd.f32 %v896, %v964
      %v997 = vadd.f32 %v897, %v965
      %v998 = vadd.f32 %v898, %v966
      %v999 = vadd.f32 %v899, %v967
      %v1000 = vadd.f32 %v900, %v968
      %v1001 = vadd.f32 %v901, %v969
      %v1002 = vadd.f32 %v902, %v970
      %v1003 = vadd.f32 %v903, %v971
      %v1004 = vadd.f32 %v904, %v972
      %v1005 = vadd.f32 %v905, %v973
      %v1006 = vadd.f32 %v906, %v974
      %v1007 = vadd.f32 %v907, %v975
      %v1008 = vadd.f32 %v908, %v976
      %v1009 = vadd.f32 %v909, %v977
      %v1010 = vadd.f32 %v910, %v978
      %v1011 = vadd.f32 %v911, %v979
      %v1012 = vadd.f32 %v912, %v980
      %v1013 = vadd.f32 %v913, %v981
      %v1014 = vadd.f32 %v914, %v982
      %v1015 = vadd.f32 %v915, %v983
      %v1016 = vld [vmem:[%s307 + $0x9] sm:$0xff]
      %v1017 = vld [vmem:[%s307 + $0x11] sm:$0xff]
      %v1018 = vld [vmem:[%s307 + $0x29] sm:$0xff]
      %v1019 = vld [vmem:[%s307 + $0x31] sm:$0xff]
      %v1020 = vld [vmem:[%s307 + $0x49] sm:$0xff]
      %v1021 = vld [vmem:[%s307 + $0x51] sm:$0xff]
      %v1022 = vld [vmem:[%s307 + $0x69] sm:$0xff]
      %v1023 = vld [vmem:[%s307 + $0x71] sm:$0xff]
      %v1024 = vld [vmem:[%s307 + $0x89] sm:$0xff]
      %v1025 = vld [vmem:[%s307 + $0x91] sm:$0xff]
      %v1026 = vld [vmem:[%s307 + $0xa9] sm:$0xff]
      %v1027 = vld [vmem:[%s307 + $0xb1] sm:$0xff]
      %v1028 = vld [vmem:[%s307 + $0xc9] sm:$0xff]
      %v1029 = vld [vmem:[%s307 + $0xd1] sm:$0xff]
      %v1030 = vld [vmem:[%s307 + $0xe9] sm:$0xff]
      %v1031 = vld [vmem:[%s307 + $0xf1] sm:$0xff]
      %v1032 = vld [vmem:[%s307 + $0x109] sm:$0xff]
      %v1033 = vld [vmem:[%s307 + $0x111] sm:$0xff]
      %v1034 = vld [vmem:[%s307 + $0x129] sm:$0xff]
      %v1035 = vld [vmem:[%s307 + $0x131] sm:$0xff]
      %v1036 = vld [vmem:[%s307 + $0x149] sm:$0xff]
      %v1037 = vld [vmem:[%s307 + $0x151] sm:$0xff]
      %v1038 = vld [vmem:[%s307 + $0x169] sm:$0xff]
      %v1039 = vld [vmem:[%s307 + $0x171] sm:$0xff]
      %v1040 = vld [vmem:[%s307 + $0x189] sm:$0xff]
      %v1041 = vld [vmem:[%s307 + $0x191] sm:$0xff]
      %v1042 = vld [vmem:[%s307 + $0x1a9] sm:$0xff]
      %v1043 = vld [vmem:[%s307 + $0x1b1] sm:$0xff]
      %v1044 = vld [vmem:[%s307 + $0x1c9] sm:$0xff]
      %v1045 = vld [vmem:[%s307 + $0x1d1] sm:$0xff]
      %v1046 = vld [vmem:[%s307 + $0x1e9] sm:$0xff]
      %v1047 = vld [vmem:[%s307 + $0x1f1] sm:$0xff]
      %v1048 = vlaneseq
      %v1049 = vshrl.u32 %v1048, 7
      %v1050 = vsub.s32 5, %v1049
      %v1051 = vrot.slane %v514, %v1050
      %v1052 = vmul.f32 %v1016, %v1051
      %v1053 = vmul.f32 %v1017, %v1051
      %v1054 = vmul.f32 %v1018, %v1051
      %v1055 = vmul.f32 %v1019, %v1051
      %v1056 = vmul.f32 %v1020, %v1051
      %v1057 = vmul.f32 %v1021, %v1051
      %v1058 = vmul.f32 %v1022, %v1051
      %v1059 = vmul.f32 %v1023, %v1051
      %v1060 = vmul.f32 %v1024, %v1051
      %v1061 = vmul.f32 %v1025, %v1051
      %v1062 = vmul.f32 %v1026, %v1051
      %v1063 = vmul.f32 %v1027, %v1051
      %v1064 = vmul.f32 %v1028, %v1051
      %v1065 = vmul.f32 %v1029, %v1051
      %v1066 = vmul.f32 %v1030, %v1051
      %v1067 = vmul.f32 %v1031, %v1051
      %v1068 = vmul.f32 %v1032, %v1051
      %v1069 = vmul.f32 %v1033, %v1051
      %v1070 = vmul.f32 %v1034, %v1051
      %v1071 = vmul.f32 %v1035, %v1051
      %v1072 = vmul.f32 %v1036, %v1051
      %v1073 = vmul.f32 %v1037, %v1051
      %v1074 = vmul.f32 %v1038, %v1051
      %v1075 = vmul.f32 %v1039, %v1051
      %v1076 = vmul.f32 %v1040, %v1051
      %v1077 = vmul.f32 %v1041, %v1051
      %v1078 = vmul.f32 %v1042, %v1051
      %v1079 = vmul.f32 %v1043, %v1051
      %v1080 = vmul.f32 %v1044, %v1051
      %v1081 = vmul.f32 %v1045, %v1051
      %v1082 = vmul.f32 %v1046, %v1051
      %v1083 = vmul.f32 %v1047, %v1051
      %v1084 = vadd.f32 %v984, %v1052
      %v1085 = vadd.f32 %v985, %v1053
      %v1086 = vadd.f32 %v986, %v1054
      %v1087 = vadd.f32 %v987, %v1055
      %v1088 = vadd.f32 %v988, %v1056
      %v1089 = vadd.f32 %v989, %v1057
      %v1090 = vadd.f32 %v990, %v1058
      %v1091 = vadd.f32 %v991, %v1059
      %v1092 = vadd.f32 %v992, %v1060
      %v1093 = vadd.f32 %v993, %v1061
      %v1094 = vadd.f32 %v994, %v1062
      %v1095 = vadd.f32 %v995, %v1063
      %v1096 = vadd.f32 %v996, %v1064
      %v1097 = vadd.f32 %v997, %v1065
      %v1098 = vadd.f32 %v998, %v1066
      %v1099 = vadd.f32 %v999, %v1067
      %v1100 = vadd.f32 %v1000, %v1068
      %v1101 = vadd.f32 %v1001, %v1069
      %v1102 = vadd.f32 %v1002, %v1070
      %v1103 = vadd.f32 %v1003, %v1071
      %v1104 = vadd.f32 %v1004, %v1072
      %v1105 = vadd.f32 %v1005, %v1073
      %v1106 = vadd.f32 %v1006, %v1074
      %v1107 = vadd.f32 %v1007, %v1075
      %v1108 = vadd.f32 %v1008, %v1076
      %v1109 = vadd.f32 %v1009, %v1077
      %v1110 = vadd.f32 %v1010, %v1078
      %v1111 = vadd.f32 %v1011, %v1079
      %v1112 = vadd.f32 %v1012, %v1080
      %v1113 = vadd.f32 %v1013, %v1081
      %v1114 = vadd.f32 %v1014, %v1082
      %v1115 = vadd.f32 %v1015, %v1083
      %s1116 = scalar_lea.vmem [#allocation2], 64
      %v1117 = vld [vmem:[%s1116 + $0x7] sm:$0xff]
      %v1118 = vld [vmem:[%s1116 + $0xf] sm:$0xff]
      %v1119 = vld [vmem:[%s1116 + $0x27] sm:$0xff]
      %v1120 = vld [vmem:[%s1116 + $0x2f] sm:$0xff]
      %v1121 = vld [vmem:[%s1116 + $0x47] sm:$0xff]
      %v1122 = vld [vmem:[%s1116 + $0x4f] sm:$0xff]
      %v1123 = vld [vmem:[%s1116 + $0x67] sm:$0xff]
      %v1124 = vld [vmem:[%s1116 + $0x6f] sm:$0xff]
      %v1125 = vld [vmem:[%s1116 + $0x87] sm:$0xff]
      %v1126 = vld [vmem:[%s1116 + $0x8f] sm:$0xff]
      %v1127 = vld [vmem:[%s1116 + $0xa7] sm:$0xff]
      %v1128 = vld [vmem:[%s1116 + $0xaf] sm:$0xff]
      %v1129 = vld [vmem:[%s1116 + $0xc7] sm:$0xff]
      %v1130 = vld [vmem:[%s1116 + $0xcf] sm:$0xff]
      %v1131 = vld [vmem:[%s1116 + $0xe7] sm:$0xff]
      %v1132 = vld [vmem:[%s1116 + $0xef] sm:$0xff]
      %v1133 = vld [vmem:[%s1116 + $0x107] sm:$0xff]
      %v1134 = vld [vmem:[%s1116 + $0x10f] sm:$0xff]
      %v1135 = vld [vmem:[%s1116 + $0x127] sm:$0xff]
      %v1136 = vld [vmem:[%s1116 + $0x12f] sm:$0xff]
      %v1137 = vld [vmem:[%s1116 + $0x147] sm:$0xff]
      %v1138 = vld [vmem:[%s1116 + $0x14f] sm:$0xff]
      %v1139 = vld [vmem:[%s1116 + $0x167] sm:$0xff]
      %v1140 = vld [vmem:[%s1116 + $0x16f] sm:$0xff]
      %v1141 = vld [vmem:[%s1116 + $0x187] sm:$0xff]
      %v1142 = vld [vmem:[%s1116 + $0x18f] sm:$0xff]
      %v1143 = vld [vmem:[%s1116 + $0x1a7] sm:$0xff]
      %v1144 = vld [vmem:[%s1116 + $0x1af] sm:$0xff]
      %v1145 = vld [vmem:[%s1116 + $0x1c7] sm:$0xff]
      %v1146 = vld [vmem:[%s1116 + $0x1cf] sm:$0xff]
      %v1147 = vld [vmem:[%s1116 + $0x1e7] sm:$0xff]
      %v1148 = vld [vmem:[%s1116 + $0x1ef] sm:$0xff]
      %v1149 = vlaneseq
      %v1150 = vshrl.u32 %v1149, 7
      %v1151 = vsub.s32 6, %v1150
      %v1152 = vrot.slane %v514, %v1151
      %v1153 = vmul.f32 %v1117, %v1152
      %v1154 = vmul.f32 %v1118, %v1152
      %v1155 = vmul.f32 %v1119, %v1152
      %v1156 = vmul.f32 %v1120, %v1152
      %v1157 = vmul.f32 %v1121, %v1152
      %v1158 = vmul.f32 %v1122, %v1152
      %v1159 = vmul.f32 %v1123, %v1152
      %v1160 = vmul.f32 %v1124, %v1152
      %v1161 = vmul.f32 %v1125, %v1152
      %v1162 = vmul.f32 %v1126, %v1152
      %v1163 = vmul.f32 %v1127, %v1152
      %v1164 = vmul.f32 %v1128, %v1152
      %v1165 = vmul.f32 %v1129, %v1152
      %v1166 = vmul.f32 %v1130, %v1152
      %v1167 = vmul.f32 %v1131, %v1152
      %v1168 = vmul.f32 %v1132, %v1152
      %v1169 = vmul.f32 %v1133, %v1152
      %v1170 = vmul.f32 %v1134, %v1152
      %v1171 = vmul.f32 %v1135, %v1152
      %v1172 = vmul.f32 %v1136, %v1152
      %v1173 = vmul.f32 %v1137, %v1152
      %v1174 = vmul.f32 %v1138, %v1152
      %v1175 = vmul.f32 %v1139, %v1152
      %v1176 = vmul.f32 %v1140, %v1152
      %v1177 = vmul.f32 %v1141, %v1152
      %v1178 = vmul.f32 %v1142, %v1152
      %v1179 = vmul.f32 %v1143, %v1152
      %v1180 = vmul.f32 %v1144, %v1152
      %v1181 = vmul.f32 %v1145, %v1152
      %v1182 = vmul.f32 %v1146, %v1152
      %v1183 = vmul.f32 %v1147, %v1152
      %v1184 = vmul.f32 %v1148, %v1152
      %v1185 = vadd.f32 %v1084, %v1153
      %v1186 = vadd.f32 %v1085, %v1154
      %v1187 = vadd.f32 %v1086, %v1155
      %v1188 = vadd.f32 %v1087, %v1156
      %v1189 = vadd.f32 %v1088, %v1157
      %v1190 = vadd.f32 %v1089, %v1158
      %v1191 = vadd.f32 %v1090, %v1159
      %v1192 = vadd.f32 %v1091, %v1160
      %v1193 = vadd.f32 %v1092, %v1161
      %v1194 = vadd.f32 %v1093, %v1162
      %v1195 = vadd.f32 %v1094, %v1163
      %v1196 = vadd.f32 %v1095, %v1164
      %v1197 = vadd.f32 %v1096, %v1165
      %v1198 = vadd.f32 %v1097, %v1166
      %v1199 = vadd.f32 %v1098, %v1167
      %v1200 = vadd.f32 %v1099, %v1168
      %v1201 = vadd.f32 %v1100, %v1169
      %v1202 = vadd.f32 %v1101, %v1170
      %v1203 = vadd.f32 %v1102, %v1171
      %v1204 = vadd.f32 %v1103, %v1172
      %v1205 = vadd.f32 %v1104, %v1173
      %v1206 = vadd.f32 %v1105, %v1174
      %v1207 = vadd.f32 %v1106, %v1175
      %v1208 = vadd.f32 %v1107, %v1176
      %v1209 = vadd.f32 %v1108, %v1177
      %v1210 = vadd.f32 %v1109, %v1178
      %v1211 = vadd.f32 %v1110, %v1179
      %v1212 = vadd.f32 %v1111, %v1180
      %v1213 = vadd.f32 %v1112, %v1181
      %v1214 = vadd.f32 %v1113, %v1182
      %v1215 = vadd.f32 %v1114, %v1183
      %v1216 = vadd.f32 %v1115, %v1184
      %v1217 = vld [vmem:[%s1116 + $0x8] sm:$0xff]
      %v1218 = vld [vmem:[%s1116 + $0x10] sm:$0xff]
      %v1219 = vld [vmem:[%s1116 + $0x28] sm:$0xff]
      %v1220 = vld [vmem:[%s1116 + $0x30] sm:$0xff]
      %v1221 = vld [vmem:[%s1116 + $0x48] sm:$0xff]
      %v1222 = vld [vmem:[%s1116 + $0x50] sm:$0xff]
      %v1223 = vld [vmem:[%s1116 + $0x68] sm:$0xff]
      %v1224 = vld [vmem:[%s1116 + $0x70] sm:$0xff]
      %v1225 = vld [vmem:[%s1116 + $0x88] sm:$0xff]
      %v1226 = vld [vmem:[%s1116 + $0x90] sm:$0xff]
      %v1227 = vld [vmem:[%s1116 + $0xa8] sm:$0xff]
      %v1228 = vld [vmem:[%s1116 + $0xb0] sm:$0xff]
      %v1229 = vld [vmem:[%s1116 + $0xc8] sm:$0xff]
      %v1230 = vld [vmem:[%s1116 + $0xd0] sm:$0xff]
      %v1231 = vld [vmem:[%s1116 + $0xe8] sm:$0xff]
      %v1232 = vld [vmem:[%s1116 + $0xf0] sm:$0xff]
      %v1233 = vld [vmem:[%s1116 + $0x108] sm:$0xff]
      %v1234 = vld [vmem:[%s1116 + $0x110] sm:$0xff]
      %v1235 = vld [vmem:[%s1116 + $0x128] sm:$0xff]
      %v1236 = vld [vmem:[%s1116 + $0x130] sm:$0xff]
      %v1237 = vld [vmem:[%s1116 + $0x148] sm:$0xff]
      %v1238 = vld [vmem:[%s1116 + $0x150] sm:$0xff]
      %v1239 = vld [vmem:[%s1116 + $0x168] sm:$0xff]
      %v1240 = vld [vmem:[%s1116 + $0x170] sm:$0xff]
      %v1241 = vld [vmem:[%s1116 + $0x188] sm:$0xff]
      %v1242 = vld [vmem:[%s1116 + $0x190] sm:$0xff]
      %v1243 = vld [vmem:[%s1116 + $0x1a8] sm:$0xff]
      %v1244 = vld [vmem:[%s1116 + $0x1b0] sm:$0xff]
      %v1245 = vld [vmem:[%s1116 + $0x1c8] sm:$0xff]
      %v1246 = vld [vmem:[%s1116 + $0x1d0] sm:$0xff]
      %v1247 = vld [vmem:[%s1116 + $0x1e8] sm:$0xff]
      %v1248 = vld [vmem:[%s1116 + $0x1f0] sm:$0xff]
      %v1249 = vlaneseq
      %v1250 = vshrl.u32 %v1249, 7
      %v1251 = vsub.s32 7, %v1250
      %v1252 = vrot.slane %v514, %v1251
      %v1253 = vmul.f32 %v1217, %v1252
      %v1254 = vmul.f32 %v1218, %v1252
      %v1255 = vmul.f32 %v1219, %v1252
      %v1256 = vmul.f32 %v1220, %v1252
      %v1257 = vmul.f32 %v1221, %v1252
      %v1258 = vmul.f32 %v1222, %v1252
      %v1259 = vmul.f32 %v1223, %v1252
      %v1260 = vmul.f32 %v1224, %v1252
      %v1261 = vmul.f32 %v1225, %v1252
      %v1262 = vmul.f32 %v1226, %v1252
      %v1263 = vmul.f32 %v1227, %v1252
      %v1264 = vmul.f32 %v1228, %v1252
      %v1265 = vmul.f32 %v1229, %v1252
      %v1266 = vmul.f32 %v1230, %v1252
      %v1267 = vmul.f32 %v1231, %v1252
      %v1268 = vmul.f32 %v1232, %v1252
      %v1269 = vmul.f32 %v1233, %v1252
      %v1270 = vmul.f32 %v1234, %v1252
      %v1271 = vmul.f32 %v1235, %v1252
      %v1272 = vmul.f32 %v1236, %v1252
      %v1273 = vmul.f32 %v1237, %v1252
      %v1274 = vmul.f32 %v1238, %v1252
      %v1275 = vmul.f32 %v1239, %v1252
      %v1276 = vmul.f32 %v1240, %v1252
      %v1277 = vmul.f32 %v1241, %v1252
      %v1278 = vmul.f32 %v1242, %v1252
      %v1279 = vmul.f32 %v1243, %v1252
      %v1280 = vmul.f32 %v1244, %v1252
      %v1281 = vmul.f32 %v1245, %v1252
      %v1282 = vmul.f32 %v1246, %v1252
      %v1283 = vmul.f32 %v1247, %v1252
      %v1284 = vmul.f32 %v1248, %v1252
      %v1285 = vadd.f32 %v1185, %v1253
      %v1286 = vadd.f32 %v1186, %v1254
      %v1287 = vadd.f32 %v1187, %v1255
      %v1288 = vadd.f32 %v1188, %v1256
      %v1289 = vadd.f32 %v1189, %v1257
      %v1290 = vadd.f32 %v1190, %v1258
      %v1291 = vadd.f32 %v1191, %v1259
      %v1292 = vadd.f32 %v1192, %v1260
      %v1293 = vadd.f32 %v1193, %v1261
      %v1294 = vadd.f32 %v1194, %v1262
      %v1295 = vadd.f32 %v1195, %v1263
      %v1296 = vadd.f32 %v1196, %v1264
      %v1297 = vadd.f32 %v1197, %v1265
      %v1298 = vadd.f32 %v1198, %v1266
      %v1299 = vadd.f32 %v1199, %v1267
      %v1300 = vadd.f32 %v1200, %v1268
      %v1301 = vadd.f32 %v1201, %v1269
      %v1302 = vadd.f32 %v1202, %v1270
      %v1303 = vadd.f32 %v1203, %v1271
      %v1304 = vadd.f32 %v1204, %v1272
      %v1305 = vadd.f32 %v1205, %v1273
      %v1306 = vadd.f32 %v1206, %v1274
      %v1307 = vadd.f32 %v1207, %v1275
      %v1308 = vadd.f32 %v1208, %v1276
      %v1309 = vadd.f32 %v1209, %v1277
      %v1310 = vadd.f32 %v1210, %v1278
      %v1311 = vadd.f32 %v1211, %v1279
      %v1312 = vadd.f32 %v1212, %v1280
      %v1313 = vadd.f32 %v1213, %v1281
      %v1314 = vadd.f32 %v1214, %v1282
      %v1315 = vadd.f32 %v1215, %v1283
      %v1316 = vadd.f32 %v1216, %v1284
      %v1317 = vld [vmem:[%s1116 + $0x9] sm:$0xff]
      %v1318 = vld [vmem:[%s1116 + $0x11] sm:$0xff]
      %v1319 = vld [vmem:[%s1116 + $0x29] sm:$0xff]
      %v1320 = vld [vmem:[%s1116 + $0x31] sm:$0xff]
      %v1321 = vld [vmem:[%s1116 + $0x49] sm:$0xff]
      %v1322 = vld [vmem:[%s1116 + $0x51] sm:$0xff]
      %v1323 = vld [vmem:[%s1116 + $0x69] sm:$0xff]
      %v1324 = vld [vmem:[%s1116 + $0x71] sm:$0xff]
      %v1325 = vld [vmem:[%s1116 + $0x89] sm:$0xff]
      %v1326 = vld [vmem:[%s1116 + $0x91] sm:$0xff]
      %v1327 = vld [vmem:[%s1116 + $0xa9] sm:$0xff]
      %v1328 = vld [vmem:[%s1116 + $0xb1] sm:$0xff]
      %v1329 = vld [vmem:[%s1116 + $0xc9] sm:$0xff]
      %v1330 = vld [vmem:[%s1116 + $0xd1] sm:$0xff]
      %v1331 = vld [vmem:[%s1116 + $0xe9] sm:$0xff]
      %v1332 = vld [vmem:[%s1116 + $0xf1] sm:$0xff]
      %v1333 = vld [vmem:[%s1116 + $0x109] sm:$0xff]
      %v1334 = vld [vmem:[%s1116 + $0x111] sm:$0xff]
      %v1335 = vld [vmem:[%s1116 + $0x129] sm:$0xff]
      %v1336 = vld [vmem:[%s1116 + $0x131] sm:$0xff]
      %v1337 = vld [vmem:[%s1116 + $0x149] sm:$0xff]
      %v1338 = vld [vmem:[%s1116 + $0x151] sm:$0xff]
      %v1339 = vld [vmem:[%s1116 + $0x169] sm:$0xff]
      %v1340 = vld [vmem:[%s1116 + $0x171] sm:$0xff]
      %v1341 = vld [vmem:[%s1116 + $0x189] sm:$0xff]
      %v1342 = vld [vmem:[%s1116 + $0x191] sm:$0xff]
      %v1343 = vld [vmem:[%s1116 + $0x1a9] sm:$0xff]
      %v1344 = vld [vmem:[%s1116 + $0x1b1] sm:$0xff]
      %v1345 = vld [vmem:[%s1116 + $0x1c9] sm:$0xff]
      %v1346 = vld [vmem:[%s1116 + $0x1d1] sm:$0xff]
      %v1347 = vld [vmem:[%s1116 + $0x1e9] sm:$0xff]
      %v1348 = vld [vmem:[%s1116 + $0x1f1] sm:$0xff]
      %v1349 = vlaneseq
      %v1350 = vshrl.u32 %v1349, 7
      %v1351 = vsub.s32 0, %v1350
      %v1352 = vrot.slane %v515, %v1351
      %v1353 = vmul.f32 %v1317, %v1352
      %v1354 = vmul.f32 %v1318, %v1352
      %v1355 = vmul.f32 %v1319, %v1352
      %v1356 = vmul.f32 %v1320, %v1352
      %v1357 = vmul.f32 %v1321, %v1352
      %v1358 = vmul.f32 %v1322, %v1352
      %v1359 = vmul.f32 %v1323, %v1352
      %v1360 = vmul.f32 %v1324, %v1352
      %v1361 = vmul.f32 %v1325, %v1352
      %v1362 = vmul.f32 %v1326, %v1352
      %v1363 = vmul.f32 %v1327, %v1352
      %v1364 = vmul.f32 %v1328, %v1352
      %v1365 = vmul.f32 %v1329, %v1352
      %v1366 = vmul.f32 %v1330, %v1352
      %v1367 = vmul.f32 %v1331, %v1352
      %v1368 = vmul.f32 %v1332, %v1352
      %v1369 = vmul.f32 %v1333, %v1352
      %v1370 = vmul.f32 %v1334, %v1352
      %v1371 = vmul.f32 %v1335, %v1352
      %v1372 = vmul.f32 %v1336, %v1352
      %v1373 = vmul.f32 %v1337, %v1352
      %v1374 = vmul.f32 %v1338, %v1352
      %v1375 = vmul.f32 %v1339, %v1352
      %v1376 = vmul.f32 %v1340, %v1352
      %v1377 = vmul.f32 %v1341, %v1352
      %v1378 = vmul.f32 %v1342, %v1352
      %v1379 = vmul.f32 %v1343, %v1352
      %v1380 = vmul.f32 %v1344, %v1352
      %v1381 = vmul.f32 %v1345, %v1352
      %v1382 = vmul.f32 %v1346, %v1352
      %v1383 = vmul.f32 %v1347, %v1352
      %v1384 = vmul.f32 %v1348, %v1352
      %v1385 = vadd.f32 %v1285, %v1353
      %v1386 = vadd.f32 %v1286, %v1354
      %v1387 = vadd.f32 %v1287, %v1355
      %v1388 = vadd.f32 %v1288, %v1356
      %v1389 = vadd.f32 %v1289, %v1357
      %v1390 = vadd.f32 %v1290, %v1358
      %v1391 = vadd.f32 %v1291, %v1359
      %v1392 = vadd.f32 %v1292, %v1360
      %v1393 = vadd.f32 %v1293, %v1361
      %v1394 = vadd.f32 %v1294, %v1362
      %v1395 = vadd.f32 %v1295, %v1363
      %v1396 = vadd.f32 %v1296, %v1364
      %v1397 = vadd.f32 %v1297, %v1365
      %v1398 = vadd.f32 %v1298, %v1366
      %v1399 = vadd.f32 %v1299, %v1367
      %v1400 = vadd.f32 %v1300, %v1368
      %v1401 = vadd.f32 %v1301, %v1369
      %v1402 = vadd.f32 %v1302, %v1370
      %v1403 = vadd.f32 %v1303, %v1371
      %v1404 = vadd.f32 %v1304, %v1372
      %v1405 = vadd.f32 %v1305, %v1373
      %v1406 = vadd.f32 %v1306, %v1374
      %v1407 = vadd.f32 %v1307, %v1375
      %v1408 = vadd.f32 %v1308, %v1376
      %v1409 = vadd.f32 %v1309, %v1377
      %v1410 = vadd.f32 %v1310, %v1378
      %v1411 = vadd.f32 %v1311, %v1379
      %v1412 = vadd.f32 %v1312, %v1380
      %v1413 = vadd.f32 %v1313, %v1381
      %v1414 = vadd.f32 %v1314, %v1382
      %v1415 = vadd.f32 %v1315, %v1383
      %v1416 = vadd.f32 %v1316, %v1384
      %v1417 = vld [vmem:[%s4] sm:$0xf]
      %v1419 = vsel %vm296, %v1385, 0
      %v1422 = vsel %vm296, %v1386, 0
      %v1425 = vsel %vm296, %v1387, 0
      %v1428 = vsel %vm296, %v1388, 0
      %v1431 = vsel %vm296, %v1389, 0
      %v1434 = vsel %vm296, %v1390, 0
      %v1437 = vsel %vm296, %v1391, 0
      %v1440 = vsel %vm296, %v1392, 0
      %v1443 = vsel %vm296, %v1393, 0
      %v1446 = vsel %vm296, %v1394, 0
      %v1449 = vsel %vm296, %v1395, 0
      %v1452 = vsel %vm296, %v1396, 0
      %v1455 = vsel %vm296, %v1397, 0
      %v1458 = vsel %vm296, %v1398, 0
      %v1461 = vsel %vm296, %v1399, 0
      %v1464 = vsel %vm296, %v1400, 0
      %v1467 = vsel %vm296, %v1401, 0
      %v1470 = vsel %vm296, %v1402, 0
      %v1473 = vsel %vm296, %v1403, 0
      %v1476 = vsel %vm296, %v1404, 0
      %v1479 = vsel %vm296, %v1405, 0
      %v1482 = vsel %vm296, %v1406, 0
      %v1485 = vsel %vm296, %v1407, 0
      %v1488 = vsel %vm296, %v1408, 0
      %v1491 = vsel %vm296, %v1409, 0
      %v1494 = vsel %vm296, %v1410, 0
      %v1497 = vsel %vm296, %v1411, 0
      %v1500 = vsel %vm296, %v1412, 0
      %v1503 = vsel %vm296, %v1413, 0
      %v1506 = vsel %vm296, %v1414, 0
      %v1509 = vsel %vm296, %v1415, 0
      %v1512 = vsel %vm296, %v1416, 0
      %vm1514 = vcmask 1043456
      %v1516 = vsel %vm1514, %v1417, 0
      %1518 = vmatprep.subr.mxu0 0.0
      %1519 = vmatpush1.msra.mxu0 %v1516
      %1520 = vmatprep.subr.mxu0 0.0
      %1521 = vmatpush1.msra.mxu0 0.0
      %1522 = vmatprep.subr.mxu0 0.0
      %1523 = vmatpush1.msra.mxu0 0.0
      %1524 = vmatprep.subr.mxu0 0.0
      %1525 = vmatpush1.msra.mxu0 0.0
      %1526 = vmatprep.subr.mxu0 0.0
      %1527 = vmatpush1.msra.mxu0 0.0
      %1528 = vmatprep.subr.mxu0 0.0
      %1529 = vmatpush1.msra.mxu0 0.0
      %1530 = vmatprep.subr.mxu0 0.0
      %1531 = vmatpush1.msra.mxu0 0.0
      %1532 = vmatprep.subr.mxu0 0.0
      %1533 = vmatpush1.msra.mxu0 0.0
      %1534 = vmatprep.subr.mxu0 0.0
      %1535 = vmatpush1.msra.mxu0 0.0
      %1536 = vmatprep.subr.mxu0 0.0
      %1537 = vmatpush1.msra.mxu0 0.0
      %1538 = vmatprep.subr.mxu0 0.0
      %1539 = vmatpush1.msra.mxu0 0.0
      %1540 = vmatprep.subr.mxu0 0.0
      %1541 = vmatpush1.msra.mxu0 0.0
      %1542 = vmatprep.subr.mxu0 0.0
      %1543 = vmatpush1.msra.mxu0 0.0
      %1544 = vmatprep.subr.mxu0 0.0
      %1545 = vmatpush1.msra.mxu0 0.0
      %1546 = vmatprep.subr.mxu0 0.0
      %1547 = vmatpush1.msra.mxu0 0.0
      %1548 = vmatprep.subr.mxu0 0.0
      %1549 = vmatpush1.msra.mxu0 0.0
      %1550 = vmatprep.subr.mxu0 0.0
      %1551 = vmatpush1.msra.mxu0 0.0
      %1552 = vmatprep.subr.mxu0 0.0
      %1553 = vmatpush1.msra.mxu0 0.0
      %1554 = vmatprep.subr.mxu0 0.0
      %1555 = vmatpush1.msra.mxu0 0.0
      %1556 = vmatprep.subr.mxu0 0.0
      %1557 = vmatpush1.msra.mxu0 0.0
      %1558 = vmatprep.subr.mxu0 0.0
      %1559 = vmatpush1.msra.mxu0 0.0
      %1560 = vmatprep.subr.mxu0 0.0
      %1561 = vmatpush1.msra.mxu0 0.0
      %1562 = vmatprep.subr.mxu0 0.0
      %1563 = vmatpush1.msra.mxu0 0.0
      %1564 = vmatprep.subr.mxu0 0.0
      %1565 = vmatpush1.msra.mxu0 0.0
      %1566 = vmatprep.subr.mxu0 0.0
      %1567 = vmatpush1.msra.mxu0 0.0
      %1568 = vmatprep.subr.mxu0 0.0
      %1569 = vmatpush1.msra.mxu0 0.0
      %1570 = vmatprep.subr.mxu0 0.0
      %1571 = vmatpush1.msra.mxu0 0.0
      %1572 = vmatprep.subr.mxu0 0.0
      %1573 = vmatpush1.msra.mxu0 0.0
      %1574 = vmatprep.subr.mxu0 0.0
      %1575 = vmatpush1.msra.mxu0 0.0
      %1576 = vmatprep.subr.mxu0 0.0
      %1577 = vmatpush1.msra.mxu0 0.0
      %1578 = vmatprep.subr.mxu0 0.0
      %1579 = vmatpush1.msra.mxu0 0.0
      %1580 = vmatprep.subr.mxu0 0.0
      %1581 = vmatpush1.msra.mxu0 0.0
      %1582 = vmatprep.mubr.f32.mxu0 0.0
      %1583 = vmatmul.mubr.f32.gmra.mrb[0].mxu0 %v1419
      %v1584 = vpop.f32.mrb[0].mxu0
      %v1585 = vadd.f32 0.0, %v1584
      %v1586 = vpop.f32.mrb[0].mxu0
      %1587 = vmatprep.mubr.f32.mxu0 0.0
      %1588 = vmatmul.mubr.f32.gmra.mrb[0].mxu0 %v1422
      %v1589 = vpop.f32.mrb[0].mxu0
      %v1590 = vadd.f32 0.0, %v1589
      %v1591 = vpop.f32.mrb[0].mxu0
      %1592 = vmatprep.mubr.f32.mxu0 0.0
      %1593 = vmatmul.mubr.f32.gmra.mrb[0].mxu0 %v1425
      %v1594 = vpop.f32.mrb[0].mxu0
      %v1595 = vadd.f32 0.0, %v1594
      %v1596 = vpop.f32.mrb[0].mxu0
      %1597 = vmatprep.mubr.f32.mxu0 0.0
      %1598 = vmatmul.mubr.f32.gmra.mrb[0].mxu0 %v1428
      %v1599 = vpop.f32.mrb[0].mxu0
      %v1600 = vadd.f32 0.0, %v1599
      %v1601 = vpop.f32.mrb[0].mxu0
      %1602 = vmatprep.mubr.f32.mxu0 0.0
      %1603 = vmatmul.mubr.f32.gmra.mrb[0].mxu0 %v1431
      %v1604 = vpop.f32.mrb[0].mxu0
      %v1605 = vadd.f32 0.0, %v1604
      %v1606 = vpop.f32.mrb[0].mxu0
      %1607 = vmatprep.mubr.f32.mxu0 0.0
      %1608 = vmatmul.mubr.f32.gmra.mrb[0].mxu0 %v1434
      %v1609 = vpop.f32.mrb[0].mxu0
      %v1610 = vadd.f32 0.0, %v1609
      %v1611 = vpop.f32.mrb[0].mxu0
      %1612 = vmatprep.mubr.f32.mxu0 0.0
      %1613 = vmatmul.mubr.f32.gmra.mrb[0].mxu0 %v1437
      %v1614 = vpop.f32.mrb[0].mxu0
      %v1615 = vadd.f32 0.0, %v1614
      %v1616 = vpop.f32.mrb[0].mxu0
      %1617 = vmatprep.mubr.f32.mxu0 0.0
      %1618 = vmatmul.mubr.f32.gmra.mrb[0].mxu0 %v1440
      %v1619 = vpop.f32.mrb[0].mxu0
      %v1620 = vadd.f32 0.0, %v1619
      %v1621 = vpop.f32.mrb[0].mxu0
      %1622 = vmatprep.mubr.f32.mxu0 0.0
      %1623 = vmatmul.mubr.f32.gmra.mrb[0].mxu0 %v1443
      %v1624 = vpop.f32.mrb[0].mxu0
      %v1625 = vadd.f32 0.0, %v1624
      %v1626 = vpop.f32.mrb[0].mxu0
      %1627 = vmatprep.mubr.f32.mxu0 0.0
      %1628 = vmatmul.mubr.f32.gmra.mrb[0].mxu0 %v1446
      %v1629 = vpop.f32.mrb[0].mxu0
      %v1630 = vadd.f32 0.0, %v1629
      %v1631 = vpop.f32.mrb[0].mxu0
      %1632 = vmatprep.mubr.f32.mxu0 0.0
      %1633 = vmatmul.mubr.f32.gmra.mrb[0].mxu0 %v1449
      %v1634 = vpop.f32.mrb[0].mxu0
      %v1635 = vadd.f32 0.0, %v1634
      %v1636 = vpop.f32.mrb[0].mxu0
      %1637 = vmatprep.mubr.f32.mxu0 0.0
      %1638 = vmatmul.mubr.f32.gmra.mrb[0].mxu0 %v1452
      %v1639 = vpop.f32.mrb[0].mxu0
      %v1640 = vadd.f32 0.0, %v1639
      %v1641 = vpop.f32.mrb[0].mxu0
      %1642 = vmatprep.mubr.f32.mxu0 0.0
      %1643 = vmatmul.mubr.f32.gmra.mrb[0].mxu0 %v1455
      %v1644 = vpop.f32.mrb[0].mxu0
      %v1645 = vadd.f32 0.0, %v1644
      %v1646 = vpop.f32.mrb[0].mxu0
      %1647 = vmatprep.mubr.f32.mxu0 0.0
      %1648 = vmatmul.mubr.f32.gmra.mrb[0].mxu0 %v1458
      %v1649 = vpop.f32.mrb[0].mxu0
      %v1650 = vadd.f32 0.0, %v1649
      %v1651 = vpop.f32.mrb[0].mxu0
      %1652 = vmatprep.mubr.f32.mxu0 0.0
      %1653 = vmatmul.mubr.f32.gmra.mrb[0].mxu0 %v1461
      %v1654 = vpop.f32.mrb[0].mxu0
      %v1655 = vadd.f32 0.0, %v1654
      %v1656 = vpop.f32.mrb[0].mxu0
      %1657 = vmatprep.mubr.f32.mxu0 0.0
      %1658 = vmatmul.mubr.f32.gmra.mrb[0].mxu0 %v1464
      %v1659 = vpop.f32.mrb[0].mxu0
      %v1660 = vadd.f32 0.0, %v1659
      %v1661 = vpop.f32.mrb[0].mxu0
      %1662 = vmatprep.mubr.f32.mxu0 0.0
      %1663 = vmatmul.mubr.f32.gmra.mrb[0].mxu0 %v1467
      %v1664 = vpop.f32.mrb[0].mxu0
      %v1665 = vadd.f32 0.0, %v1664
      %v1666 = vpop.f32.mrb[0].mxu0
      %1667 = vmatprep.mubr.f32.mxu0 0.0
      %1668 = vmatmul.mubr.f32.gmra.mrb[0].mxu0 %v1470
      %v1669 = vpop.f32.mrb[0].mxu0
      %v1670 = vadd.f32 0.0, %v1669
      %v1671 = vpop.f32.mrb[0].mxu0
      %1672 = vmatprep.mubr.f32.mxu0 0.0
      %1673 = vmatmul.mubr.f32.gmra.mrb[0].mxu0 %v1473
      %v1674 = vpop.f32.mrb[0].mxu0
      %v1675 = vadd.f32 0.0, %v1674
      %v1676 = vpop.f32.mrb[0].mxu0
      %1677 = vmatprep.mubr.f32.mxu0 0.0
      %1678 = vmatmul.mubr.f32.gmra.mrb[0].mxu0 %v1476
      %v1679 = vpop.f32.mrb[0].mxu0
      %v1680 = vadd.f32 0.0, %v1679
      %v1681 = vpop.f32.mrb[0].mxu0
      %1682 = vmatprep.mubr.f32.mxu0 0.0
      %1683 = vmatmul.mubr.f32.gmra.mrb[0].mxu0 %v1479
      %v1684 = vpop.f32.mrb[0].mxu0
      %v1685 = vadd.f32 0.0, %v1684
      %v1686 = vpop.f32.mrb[0].mxu0
      %1687 = vmatprep.mubr.f32.mxu0 0.0
      %1688 = vmatmul.mubr.f32.gmra.mrb[0].mxu0 %v1482
      %v1689 = vpop.f32.mrb[0].mxu0
      %v1690 = vadd.f32 0.0, %v1689
      %v1691 = vpop.f32.mrb[0].mxu0
      %1692 = vmatprep.mubr.f32.mxu0 0.0
      %1693 = vmatmul.mubr.f32.gmra.mrb[0].mxu0 %v1485
      %v1694 = vpop.f32.mrb[0].mxu0
      %v1695 = vadd.f32 0.0, %v1694
      %v1696 = vpop.f32.mrb[0].mxu0
      %1697 = vmatprep.mubr.f32.mxu0 0.0
      %1698 = vmatmul.mubr.f32.gmra.mrb[0].mxu0 %v1488
      %v1699 = vpop.f32.mrb[0].mxu0
      %v1700 = vadd.f32 0.0, %v1699
      %v1701 = vpop.f32.mrb[0].mxu0
      %1702 = vmatprep.mubr.f32.mxu0 0.0
      %1703 = vmatmul.mubr.f32.gmra.mrb[0].mxu0 %v1491
      %v1704 = vpop.f32.mrb[0].mxu0
      %v1705 = vadd.f32 0.0, %v1704
      %v1706 = vpop.f32.mrb[0].mxu0
      %1707 = vmatprep.mubr.f32.mxu0 0.0
      %1708 = vmatmul.mubr.f32.gmra.mrb[0].mxu0 %v1494
      %v1709 = vpop.f32.mrb[0].mxu0
      %v1710 = vadd.f32 0.0, %v1709
      %v1711 = vpop.f32.mrb[0].mxu0
      %1712 = vmatprep.mubr.f32.mxu0 0.0
      %1713 = vmatmul.mubr.f32.gmra.mrb[0].mxu0 %v1497
      %v1714 = vpop.f32.mrb[0].mxu0
      %v1715 = vadd.f32 0.0, %v1714
      %v1716 = vpop.f32.mrb[0].mxu0
      %1717 = vmatprep.mubr.f32.mxu0 0.0
      %1718 = vmatmul.mubr.f32.gmra.mrb[0].mxu0 %v1500
      %v1719 = vpop.f32.mrb[0].mxu0
      %v1720 = vadd.f32 0.0, %v1719
      %v1721 = vpop.f32.mrb[0].mxu0
      %1722 = vmatprep.mubr.f32.mxu0 0.0
      %1723 = vmatmul.mubr.f32.gmra.mrb[0].mxu0 %v1503
      %v1724 = vpop.f32.mrb[0].mxu0
      %v1725 = vadd.f32 0.0, %v1724
      %v1726 = vpop.f32.mrb[0].mxu0
      %1727 = vmatprep.mubr.f32.mxu0 0.0
      %1728 = vmatmul.mubr.f32.gmra.mrb[0].mxu0 %v1506
      %v1729 = vpop.f32.mrb[0].mxu0
      %v1730 = vadd.f32 0.0, %v1729
      %v1731 = vpop.f32.mrb[0].mxu0
      %1732 = vmatprep.mubr.f32.mxu0 0.0
      %1733 = vmatmul.mubr.f32.gmra.mrb[0].mxu0 %v1509
      %v1734 = vpop.f32.mrb[0].mxu0
      %v1735 = vadd.f32 0.0, %v1734
      %v1736 = vpop.f32.mrb[0].mxu0
      %1737 = vmatprep.mubr.f32.mxu0 0.0
      %1738 = vmatmul.mubr.f32.gmra.mrb[0].mxu0 %v1512
      %v1739 = vpop.f32.mrb[0].mxu0
      %v1740 = vadd.f32 0.0, %v1739
      %v1741 = vpop.f32.mrb[0].mxu0
      %1742 = vdwg.mxu0
      %vm1743 = vcmask 64512
      %1744 = vst.msk [vmem:[%s289] sm:$0xff] %vm1743, %v1585
      %1745 = vst.msk [vmem:[%s289 + $0x8] sm:$0xff] %vm1743, %v1590
      %1746 = vst.msk [vmem:[%s289 + $0x10] sm:$0xff] %vm1743, %v1595
      %1747 = vst.msk [vmem:[%s289 + $0x18] sm:$0xff] %vm1743, %v1600
      %1748 = vst.msk [vmem:[%s289 + $0x20] sm:$0xff] %vm1743, %v1605
      %1749 = vst.msk [vmem:[%s289 + $0x28] sm:$0xff] %vm1743, %v1610
      %1750 = vst.msk [vmem:[%s289 + $0x30] sm:$0xff] %vm1743, %v1615
      %1751 = vst.msk [vmem:[%s289 + $0x38] sm:$0xff] %vm1743, %v1620
      %1752 = vst.msk [vmem:[%s289 + $0x40] sm:$0xff] %vm1743, %v1625
      %1753 = vst.msk [vmem:[%s289 + $0x48] sm:$0xff] %vm1743, %v1630
      %1754 = vst.msk [vmem:[%s289 + $0x50] sm:$0xff] %vm1743, %v1635
      %1755 = vst.msk [vmem:[%s289 + $0x58] sm:$0xff] %vm1743, %v1640
      %1756 = vst.msk [vmem:[%s289 + $0x60] sm:$0xff] %vm1743, %v1645
      %1757 = vst.msk [vmem:[%s289 + $0x68] sm:$0xff] %vm1743, %v1650
      %1758 = vst.msk [vmem:[%s289 + $0x70] sm:$0xff] %vm1743, %v1655
      %1759 = vst.msk [vmem:[%s289 + $0x78] sm:$0xff] %vm1743, %v1660
      %1760 = vst.msk [vmem:[%s289 + $0x80] sm:$0xff] %vm1743, %v1665
      %1761 = vst.msk [vmem:[%s289 + $0x88] sm:$0xff] %vm1743, %v1670
      %1762 = vst.msk [vmem:[%s289 + $0x90] sm:$0xff] %vm1743, %v1675
      %1763 = vst.msk [vmem:[%s289 + $0x98] sm:$0xff] %vm1743, %v1680
      %1764 = vst.msk [vmem:[%s289 + $0xa0] sm:$0xff] %vm1743, %v1685
      %1765 = vst.msk [vmem:[%s289 + $0xa8] sm:$0xff] %vm1743, %v1690
      %1766 = vst.msk [vmem:[%s289 + $0xb0] sm:$0xff] %vm1743, %v1695
      %1767 = vst.msk [vmem:[%s289 + $0xb8] sm:$0xff] %vm1743, %v1700
      %1768 = vst.msk [vmem:[%s289 + $0xc0] sm:$0xff] %vm1743, %v1705
      %1769 = vst.msk [vmem:[%s289 + $0xc8] sm:$0xff] %vm1743, %v1710
      %1770 = vst.msk [vmem:[%s289 + $0xd0] sm:$0xff] %vm1743, %v1715
      %1771 = vst.msk [vmem:[%s289 + $0xd8] sm:$0xff] %vm1743, %v1720
      %1772 = vst.msk [vmem:[%s289 + $0xe0] sm:$0xff] %vm1743, %v1725
      %1773 = vst.msk [vmem:[%s289 + $0xe8] sm:$0xff] %vm1743, %v1730
      %1774 = vst.msk [vmem:[%s289 + $0xf0] sm:$0xff] %vm1743, %v1735
      %1775 = vst.msk [vmem:[%s289 + $0xf8] sm:$0xff] %vm1743, %v1740
      %v1776 = vsel %vm1743, %v1585, 0.0
      %v1777 = vsel %vm1743, %v1590, 0.0
      %v1778 = vadd.f32 %v1776, %v1777
      %v1779 = vsel %vm1743, %v1595, 0.0
      %v1780 = vadd.f32 %v1778, %v1779
      %v1781 = vsel %vm1743, %v1600, 0.0
      %v1782 = vadd.f32 %v1780, %v1781
      %v1783 = vsel %vm1743, %v1605, 0.0
      %v1784 = vadd.f32 %v1782, %v1783
      %v1785 = vsel %vm1743, %v1610, 0.0
      %v1786 = vadd.f32 %v1784, %v1785
      %v1787 = vsel %vm1743, %v1615, 0.0
      %v1788 = vadd.f32 %v1786, %v1787
      %v1789 = vsel %vm1743, %v1620, 0.0
      %v1790 = vadd.f32 %v1788, %v1789
      %v1791 = vsel %vm1743, %v1625, 0.0
      %v1792 = vadd.f32 %v1790, %v1791
      %v1793 = vsel %vm1743, %v1630, 0.0
      %v1794 = vadd.f32 %v1792, %v1793
      %v1795 = vsel %vm1743, %v1635, 0.0
      %v1796 = vadd.f32 %v1794, %v1795
      %v1797 = vsel %vm1743, %v1640, 0.0
      %v1798 = vadd.f32 %v1796, %v1797
      %v1799 = vsel %vm1743, %v1645, 0.0
      %v1800 = vadd.f32 %v1798, %v1799
      %v1801 = vsel %vm1743, %v1650, 0.0
      %v1802 = vadd.f32 %v1800, %v1801
      %v1803 = vsel %vm1743, %v1655, 0.0
      %v1804 = vadd.f32 %v1802, %v1803
      %v1805 = vsel %vm1743, %v1660, 0.0
      %v1806 = vadd.f32 %v1804, %v1805
      %v1807 = vsel %vm1743, %v1665, 0.0
      %v1808 = vadd.f32 %v1806, %v1807
      %v1809 = vsel %vm1743, %v1670, 0.0
      %v1810 = vadd.f32 %v1808, %v1809
      %v1811 = vsel %vm1743, %v1675, 0.0
      %v1812 = vadd.f32 %v1810, %v1811
      %v1813 = vsel %vm1743, %v1680, 0.0
      %v1814 = vadd.f32 %v1812, %v1813
      %v1815 = vsel %vm1743, %v1685, 0.0
      %v1816 = vadd.f32 %v1814, %v1815
      %v1817 = vsel %vm1743, %v1690, 0.0
      %v1818 = vadd.f32 %v1816, %v1817
      %v1819 = vsel %vm1743, %v1695, 0.0
      %v1820 = vadd.f32 %v1818, %v1819
      %v1821 = vsel %vm1743, %v1700, 0.0
      %v1822 = vadd.f32 %v1820, %v1821
      %v1823 = vsel %vm1743, %v1705, 0.0
      %v1824 = vadd.f32 %v1822, %v1823
      %v1825 = vsel %vm1743, %v1710, 0.0
      %v1826 = vadd.f32 %v1824, %v1825
      %v1827 = vsel %vm1743, %v1715, 0.0
      %v1828 = vadd.f32 %v1826, %v1827
      %v1829 = vsel %vm1743, %v1720, 0.0
      %v1830 = vadd.f32 %v1828, %v1829
      %v1831 = vsel %vm1743, %v1725, 0.0
      %v1832 = vadd.f32 %v1830, %v1831
      %v1833 = vsel %vm1743, %v1730, 0.0
      %v1834 = vadd.f32 %v1832, %v1833
      %v1835 = vsel %vm1743, %v1735, 0.0
      %v1836 = vadd.f32 %v1834, %v1835
      %v1837 = vsel %vm1743, %v1740, 0.0
      %v1838 = vadd.f32 %v1836, %v1837
      %v1839 = vrot.slane %v1838, 4
      %v1840 = vadd.f32 %v1838, %v1839
      %v1841 = vrot.slane %v1840, 2
      %v1842 = vadd.f32 %v1840, %v1841
      %v1843 = vrot.slane %v1842, 1
      %v1844 = vadd.f32 %v1842, %v1843
      %vm1845 = vcmask 57344
      %1846 = vst.msk [vmem:[%s292] sm:$0x1] %vm1845, %v1844
      %v1847 = vmul.f32 %v1585, %v1585
      %v1848 = vmul.f32 %v1590, %v1590
      %v1849 = vmul.f32 %v1595, %v1595
      %v1850 = vmul.f32 %v1600, %v1600
      %v1851 = vmul.f32 %v1605, %v1605
      %v1852 = vmul.f32 %v1610, %v1610
      %v1853 = vmul.f32 %v1615, %v1615
      %v1854 = vmul.f32 %v1620, %v1620
      %v1855 = vmul.f32 %v1625, %v1625
      %v1856 = vmul.f32 %v1630, %v1630
      %v1857 = vmul.f32 %v1635, %v1635
      %v1858 = vmul.f32 %v1640, %v1640
      %v1859 = vmul.f32 %v1645, %v1645
      %v1860 = vmul.f32 %v1650, %v1650
      %v1861 = vmul.f32 %v1655, %v1655
      %v1862 = vmul.f32 %v1660, %v1660
      %v1863 = vmul.f32 %v1665, %v1665
      %v1864 = vmul.f32 %v1670, %v1670
      %v1865 = vmul.f32 %v1675, %v1675
      %v1866 = vmul.f32 %v1680, %v1680
      %v1867 = vmul.f32 %v1685, %v1685
      %v1868 = vmul.f32 %v1690, %v1690
      %v1869 = vmul.f32 %v1695, %v1695
      %v1870 = vmul.f32 %v1700, %v1700
      %v1871 = vmul.f32 %v1705, %v1705
      %v1872 = vmul.f32 %v1710, %v1710
      %v1873 = vmul.f32 %v1715, %v1715
      %v1874 = vmul.f32 %v1720, %v1720
      %v1875 = vmul.f32 %v1725, %v1725
      %v1876 = vmul.f32 %v1730, %v1730
      %v1877 = vmul.f32 %v1735, %v1735
      %v1878 = vmul.f32 %v1740, %v1740
      %v1879 = vsel %vm1743, %v1847, 0.0
      %v1880 = vsel %vm1743, %v1848, 0.0
      %v1881 = vadd.f32 %v1879, %v1880
      %v1882 = vsel %vm1743, %v1849, 0.0
      %v1883 = vadd.f32 %v1881, %v1882
      %v1884 = vsel %vm1743, %v1850, 0.0
      %v1885 = vadd.f32 %v1883, %v1884
      %v1886 = vsel %vm1743, %v1851, 0.0
      %v1887 = vadd.f32 %v1885, %v1886
      %v1888 = vsel %vm1743, %v1852, 0.0
      %v1889 = vadd.f32 %v1887, %v1888
      %v1890 = vsel %vm1743, %v1853, 0.0
      %v1891 = vadd.f32 %v1889, %v1890
      %v1892 = vsel %vm1743, %v1854, 0.0
      %v1893 = vadd.f32 %v1891, %v1892
      %v1894 = vsel %vm1743, %v1855, 0.0
      %v1895 = vadd.f32 %v1893, %v1894
      %v1896 = vsel %vm1743, %v1856, 0.0
      %v1897 = vadd.f32 %v1895, %v1896
      %v1898 = vsel %vm1743, %v1857, 0.0
      %v1899 = vadd.f32 %v1897, %v1898
      %v1900 = vsel %vm1743, %v1858, 0.0
      %v1901 = vadd.f32 %v1899, %v1900
      %v1902 = vsel %vm1743, %v1859, 0.0
      %v1903 = vadd.f32 %v1901, %v1902
      %v1904 = vsel %vm1743, %v1860, 0.0
      %v1905 = vadd.f32 %v1903, %v1904
      %v1906 = vsel %vm1743, %v1861, 0.0
      %v1907 = vadd.f32 %v1905, %v1906
      %v1908 = vsel %vm1743, %v1862, 0.0
      %v1909 = vadd.f32 %v1907, %v1908
      %v1910 = vsel %vm1743, %v1863, 0.0
      %v1911 = vadd.f32 %v1909, %v1910
      %v1912 = vsel %vm1743, %v1864, 0.0
      %v1913 = vadd.f32 %v1911, %v1912
      %v1914 = vsel %vm1743, %v1865, 0.0
      %v1915 = vadd.f32 %v1913, %v1914
      %v1916 = vsel %vm1743, %v1866, 0.0
      %v1917 = vadd.f32 %v1915, %v1916
      %v1918 = vsel %vm1743, %v1867, 0.0
      %v1919 = vadd.f32 %v1917, %v1918
      %v1920 = vsel %vm1743, %v1868, 0.0
      %v1921 = vadd.f32 %v1919, %v1920
      %v1922 = vsel %vm1743, %v1869, 0.0
      %v1923 = vadd.f32 %v1921, %v1922
      %v1924 = vsel %vm1743, %v1870, 0.0
      %v1925 = vadd.f32 %v1923, %v1924
      %v1926 = vsel %vm1743, %v1871, 0.0
      %v1927 = vadd.f32 %v1925, %v1926
      %v1928 = vsel %vm1743, %v1872, 0.0
      %v1929 = vadd.f32 %v1927, %v1928
      %v1930 = vsel %vm1743, %v1873, 0.0
      %v1931 = vadd.f32 %v1929, %v1930
      %v1932 = vsel %vm1743, %v1874, 0.0
      %v1933 = vadd.f32 %v1931, %v1932
      %v1934 = vsel %vm1743, %v1875, 0.0
      %v1935 = vadd.f32 %v1933, %v1934
      %v1936 = vsel %vm1743, %v1876, 0.0
      %v1937 = vadd.f32 %v1935, %v1936
      %v1938 = vsel %vm1743, %v1877, 0.0
      %v1939 = vadd.f32 %v1937, %v1938
      %v1940 = vsel %vm1743, %v1878, 0.0
      %v1941 = vadd.f32 %v1939, %v1940
      %v1942 = vrot.slane %v1941, 4
      %v1943 = vadd.f32 %v1941, %v1942
      %v1944 = vrot.slane %v1943, 2
      %v1945 = vadd.f32 %v1943, %v1944
      %v1946 = vrot.slane %v1945, 1
      %v1947 = vadd.f32 %v1945, %v1946
      %1948 = vst.msk [vmem:[%s295] sm:$0x1] %vm1845, %v1947
      %p1949 = scmp.lt.s32.totalorder %s19, 1
      %s1950 = scalar_select %p1949, %s19, 1
      %s1951 = smul.addr %s1950, 32
      %s1952 = smul.addr %s1951, 8
      %s1953 = scalar_lea.vmem %s5, %s1952
      %p1954 = scmp.lt.s32.totalorder %s19, 1
      %s1955 = scalar_select %p1954, %s19, 1
      %s1956 = scalar_lea.vmem %s6, %s1955
      %p1957 = scmp.lt.s32.totalorder %s19, 1
      %s1958 = scalar_select %p1957, %s19, 1
      %s1959 = scalar_lea.vmem %s7, %s1958
      // Predicated region
      $region41: #{sep_conv.3} parent=39 // pred_check
        %p1960 = pneg %p147
      $region42: #{sep_conv.3} parent=39 // pred_check_branch
        %1962 = sbr.rel (%p1960) target = $region44
      $region43: #{sep_conv.3} parent=39 // pred_region
        _
      $region44: #{sep_conv.3} parent=39 // pred_fallthru
        _
      // Predicated region
      $region45: #{sep_conv.3} parent=39 // pred_check
        %p1963 = pneg %p173
      $region46: #{sep_conv.3} parent=39 // pred_check_branch
        %1965 = sbr.rel (%p1963) target = $region48
      $region47: #{sep_conv.3} parent=39 // pred_region
        _
      $region48: #{sep_conv.3} parent=39 // pred_fallthru
        _
      // Predicated region
      $region49: #{sep_conv.3} parent=39 // pred_check
        %p1966 = pneg %p199
      $region50: #{sep_conv.3} parent=39 // pred_check_branch
        %1968 = sbr.rel (%p1966) target = $region52
      $region51: #{sep_conv.3} parent=39 // pred_region
        _
      $region52: #{sep_conv.3} parent=39 // pred_fallthru
        _
    $region40: #{sep_conv.3} parent=5 // pred_fallthru
      _
    %p1969 = scmp.le.s32.totalorder 2, %s14
    // Predicated region
    $region53: #{sep_conv.3} parent=5 // pred_check
      %p1970 = pneg %p1969
    $region54: #{sep_conv.3} parent=5 // pred_check_branch
      %1972 = sbr.rel (%p1970) target = $region56
    $region55: #{sep_conv.3} parent=5 // pred_region
      %s1973 = ssub.s32 %s14, 2
      // Predicated region
      $region57: #{sep_conv.3} parent=55 // pred_check
        %p1974 = pneg %p153
      $region58: #{sep_conv.3} parent=55 // pred_check_branch
        %1976 = sbr.rel (%p1974) target = $region60
      $region59: #{sep_conv.3} parent=55 // pred_region
        %p1977 = scmp.lt.s32.totalorder %s20, 1
        %s1978 = scalar_select %p1977, %s20, 1
        %s1979 = smul.addr %s1978, 32
        %s1980 = smul.addr %s1979, 8
        %s1981 = scalar_lea.vmem %s5, %s1980
      $region60: #{sep_conv.3} parent=55 // pred_fallthru
        _
      // Predicated region
      $region61: #{sep_conv.3} parent=55 // pred_check
        %p1982 = pneg %p179
      $region62: #{sep_conv.3} parent=55 // pred_check_branch
        %1984 = sbr.rel (%p1982) target = $region64
      $region63: #{sep_conv.3} parent=55 // pred_region
        %p1985 = scmp.lt.s32.totalorder %s20, 1
        %s1986 = scalar_select %p1985, %s20, 1
        %s1987 = scalar_lea.vmem %s6, %s1986
      $region64: #{sep_conv.3} parent=55 // pred_fallthru
        _
      // Predicated region
      $region65: #{sep_conv.3} parent=55 // pred_check
        %p1988 = pneg %p205
      $region66: #{sep_conv.3} parent=55 // pred_check_branch
        %1990 = sbr.rel (%p1988) target = $region68
      $region67: #{sep_conv.3} parent=55 // pred_region
        %p1991 = scmp.lt.s32.totalorder %s20, 1
        %s1992 = scalar_select %p1991, %s20, 1
        %s1993 = scalar_lea.vmem %s7, %s1992
      $region68: #{sep_conv.3} parent=55 // pred_fallthru
        _
    $region56: #{sep_conv.3} parent=5 // pred_fallthru
      _
  $region6: #{sep_conv.3} parent=0 // loop_footer
    %s18 = sadd.s32 1, %s14
  $region7: #{sep_conv.3} parent=0 // loop_footer_branch
    %13 = sbr.rel target = $region3
  $region8: #{sep_conv.3} parent=0 // loop_exit
    _

</llo_original>
